<compile_context>
chip_gen: v7x
topology: tpu7x:2x2x1
jax: 0.10.0
libtpu: 0.0.40
codegen_flags: <defaults>
</compile_context>

<pallas_src>
import math

import jax
import jax.numpy as jnp
from jax.experimental import pallas as pl
from jax.experimental.pallas import tpu as pltpu  # noqa: F401  (TPU backend)

# ------------------------- problem sizes (small) -------------------------
H_DIM = 32                 # h_dim
NUM_NODE_TYPES = 2
NUM_EDGE_TYPES = 3         # num_rels (num_bases = -1 -> num_bases = num_rels)
NUM_PRED_NODE_MAPS = 16    # out dim of fc_for_loss3
N_NODES = 96
N_EDGES = 192
MATRIX_SIZE = 8            # ground-truth node-map is (8, 8); 8*8 <= N_NODES

_INV_LOG2 = 1.0 / math.log(2.0)


# ------------------------------ fused kernel ------------------------------
def _fused_forward_kernel(
    nodes_ref, ntype_ref, src_ref, dst_ref, etype_ref, norm_ref, scost_ref,
    gt_ref, rsel_ref, csel_ref,
    fcw_ref, fcb_ref, wnode_ref, wrel_ref, wheads_ref, bheads_ref,
    scal_ref, p3_ref, cost2_ref,
):
    f32 = jnp.float32
    n = nodes_ref.shape[0]
    e = src_ref.shape[0]
    h = fcw_ref.shape[1]
    num_node_types = wnode_ref.shape[1] // h
    num_edge_types = wrel_ref.shape[1] // h
    mm = gt_ref.shape[0]

    # ---- fc: h0 = nodes @ fc_w + fc_b.  K=2 contraction -> two VPU FMAs
    # (avoids a ~1.5%-utilized MXU pass; mainly a v5e win, harmless elsewhere).
    x = nodes_ref[...]                                   # (n, 2)
    w_fc = fcw_ref[...]                                  # (2, h)
    h0 = x[:, 0:1] * w_fc[0:1, :] + x[:, 1:2] * w_fc[1:2, :] + fcb_ref[...]

    # ---- node-type conditioned matmul: ONE wide MXU matmul + per-type select.
    y_node = jnp.dot(h0, wnode_ref[...], preferred_element_type=f32)     # (n, Tn*h)
    ntype = ntype_ref[...]                                               # (n, 1) i32
    h_abc = jnp.zeros((n, h), f32)
    for t in range(num_node_types):
        h_abc = h_abc + jnp.where(ntype == t, y_node[:, t * h:(t + 1) * h], 0.0)

    # ---- one-hot gather / scatter matrices (replace jnp.take / segment_sum).
    src = src_ref[...]                                                   # (e, 1) i32
    onehot_src = (src == jax.lax.broadcasted_iota(jnp.int32, (e, n), 1)).astype(f32)    # (e, n)
    dst = dst_ref[...]                                                   # (1, e) i32
    onehot_dst_t = (jax.lax.broadcasted_iota(jnp.int32, (n, e), 0) == dst).astype(f32)  # (n, e)

    # ---- relation-typed message: MXU gather, one wide matmul, select, scale.
    h_src = jnp.dot(onehot_src, h_abc, preferred_element_type=f32)       # (e, h)
    y_rel = jnp.dot(h_src, wrel_ref[...], preferred_element_type=f32)    # (e, Te*h)
    etype = etype_ref[...]                                               # (e, 1) i32
    msg = jnp.zeros((e, h), f32)
    for t in range(num_edge_types):
        msg = msg + jnp.where(etype == t, y_rel[:, t * h:(t + 1) * h], 0.0)
    msg = msg * norm_ref[...]                                            # (e, 1) bcast

    # ---- scatter-add per destination node (MXU) + ReLU (RGCN apply, bias None).
    h_node = jnp.maximum(
        jnp.dot(onehot_dst_t, msg, preferred_element_type=f32), 0.0)     # (n, h)

    # ---- merged output heads: [fc2 | fc3 | fc_for_loss3] in a single matmul.
    y_heads = (jnp.dot(h_node, wheads_ref[...], preferred_element_type=f32)
               + bheads_ref[...])                                        # (n, 2+P)
    pred_prob = jnp.clip(jax.nn.sigmoid(y_heads[:, 0:1]), 1e-7, 1e10)    # (n, 1)
    # fc3(mean_nodes(h)) == mean(h @ w3 + b3) because fc3 is affine.
    pred_obj = jnp.sum(y_heads[:, 1:2], keepdims=True) * (1.0 / n)       # (1, 1)
    p3_ref[...] = jax.nn.sigmoid(y_heads[:, 2:])                         # (n, P)

    # ---- matching losses on the first m*m predictions (flat (mm,1) view).
    # row/col sums of the (m, m) matrix are done as tiny selector matmuls so
    # no in-kernel reshape of the column vector is needed.
    p_flat = pred_prob[0:mm, :]                                          # (mm, 1)
    gt = gt_ref[...]                                                     # (mm, 1)
    ce = -jnp.sum(gt * jnp.log(p_flat), keepdims=True) * _INV_LOG2       # (1, 1)
    row_sums = jnp.dot(rsel_ref[...], p_flat, preferred_element_type=f32)  # (m, 1)
    col_sums = jnp.dot(csel_ref[...], p_flat, preferred_element_type=f32)  # (m, 1)
    sumone = (jnp.sum((row_sums - 1.0) ** 2, keepdims=True)
              + jnp.sum((col_sums - 1.0) ** 2, keepdims=True))           # (1, 1)
    # sum(x*(rowsum-x)) + sum(x*(colsum-x)) == sum(rowsum^2)+sum(colsum^2)-2*sum(x^2)
    sum_p2 = jnp.sum(p_flat * p_flat, keepdims=True)
    reg = (jnp.sum(row_sums * row_sums, keepdims=True)
           + jnp.sum(col_sums * col_sums, keepdims=True)
           - 2.0 * sum_p2)                                               # (1, 1)

    # ---- OutputLayer: per-dst sum of src pred_prob, then (s-1)^2 * special_cost.
    pred_src = jnp.dot(onehot_src, pred_prob, preferred_element_type=f32)   # (e, 1)
    s = jnp.dot(onehot_dst_t, pred_src, preferred_element_type=f32)         # (n, 1)
    cost2_ref[...] = ((s - 1.0) ** 2) * scost_ref[...]

    # ---- pack the four loss scalars into one lane-packed (1, 4) output.
    lane = jax.lax.broadcasted_iota(jnp.int32, (1, 4), 1)
    scal_ref[...] = (pred_obj * (lane == 0).astype(f32)
                     + sumone * (lane == 1).astype(f32)
                     + reg * (lane == 2).astype(f32)
                     + ce * (lane == 3).astype(f32))


# ------------------------------ model ------------------------------------
def init_params(key):
    ks = jax.random.split(key, 8)

    def xavier(k, shape):
        fan_in, fan_out = shape[-2], shape[-1]
        gain = jnp.sqrt(2.0)                       # calculate_gain('relu')
        bound = gain * jnp.sqrt(6.0 / (fan_in + fan_out))
        return jax.random.uniform(k, shape, jnp.float32, -bound, bound)

    return {
        "fc_w": xavier(ks[0], (2, H_DIM)),
        "fc_b": jnp.zeros((H_DIM,), jnp.float32),
        "w_node_type": xavier(ks[1], (NUM_NODE_TYPES, H_DIM, H_DIM)),
        "w_rel": xavier(ks[2], (NUM_EDGE_TYPES, H_DIM, H_DIM)),
        "fc2_w": xavier(ks[3], (H_DIM, 1)),
        "fc2_b": jnp.zeros((1,), jnp.float32),
        "fc3_w": xavier(ks[4], (H_DIM, 1)),
        "fc3_b": jnp.zeros((1,), jnp.float32),
        "fc3l_w": xavier(ks[5], (H_DIM, NUM_PRED_NODE_MAPS)),
        "fc3l_b": jnp.zeros((NUM_PRED_NODE_MAPS,), jnp.float32),
    }


@jax.jit
def model_forward(params, graph, gt_node_map):
    nodes = graph["neigh_type_count"].astype(jnp.float32)   # (N, 2)
    n = nodes.shape[0]
    e = graph["src"].shape[0]
    h = params["fc_w"].shape[1]
    p = params["fc3l_w"].shape[1]
    m = gt_node_map.shape[0]
    mm = m * m

    # per-row metadata as (rows, 1) / (1, rows) columns (lane / sublane friendly)
    ntype = graph["node_type"].reshape(n, 1).astype(jnp.int32)
    src = graph["src"].reshape(e, 1).astype(jnp.int32)
    dst = graph["dst"].reshape(1, e).astype(jnp.int32)
    etype = graph["edge_type"].reshape(e, 1).astype(jnp.int32)
    norm = graph["edge_norm"].reshape(e, 1).astype(jnp.float32)
    scost = graph["special_cost"].reshape(n, 1).astype(jnp.float32)
    gt_flat = gt_node_map.reshape(mm, 1).astype(jnp.float32)

    # constant row/col selector matrices for the (m, m) matching losses
    k_idx = jnp.arange(mm)
    rsel = (k_idx[None, :] // m == jnp.arange(m)[:, None]).astype(jnp.float32)  # (m, mm)
    csel = (k_idx[None, :] % m == jnp.arange(m)[:, None]).astype(jnp.float32)   # (m, mm)

    # concatenated weight banks (wide, lane-dense matmuls inside the kernel)
    w_node_cat = jnp.transpose(params["w_node_type"], (1, 0, 2)).reshape(h, -1)  # (h, Tn*h)
    w_rel_cat = jnp.transpose(params["w_rel"], (1, 0, 2)).reshape(h, -1)         # (h, Te*h)
    w_heads = jnp.concatenate(
        [params["fc2_w"], params["fc3_w"], params["fc3l_w"]], axis=1)            # (h, 2+P)
    b_heads = jnp.concatenate(
        [params["fc2_b"], params["fc3_b"], params["fc3l_b"]]).reshape(1, -1)     # (1, 2+P)

    out_shapes = (
        jax.ShapeDtypeStruct((1, 4), jnp.float32),    # [pred_obj, sumone, reg, ce]
        jax.ShapeDtypeStruct((n, p), jnp.float32),    # prob_for_loss3
        jax.ShapeDtypeStruct((n, 1), jnp.float32),    # loss_for_sumOneCost2
    )
    scalars, prob_for_loss3, cost2 = pl.pallas_call(
        _fused_forward_kernel,
        out_shape=out_shapes,
    )(nodes, ntype, src, dst, etype, norm, scost, gt_flat, rsel, csel,
      params["fc_w"], params["fc_b"].reshape(1, h),
      w_node_cat, w_rel_cat, w_heads, b_heads)

    pred_obj = scalars[0, 0]
    sumone = scalars[0, 1:2]
    reg = scalars[0, 2:3]
    ce = scalars[0, 3:4]

    res = [pred_obj, sumone, reg, ce]
    aux = (prob_for_loss3, cost2[:, 0])
    return res, aux


# ------------------------------ main --------------------------------------
if __name__ == "__main__":
    key = jax.random.PRNGKey(0)
    kp, k1, k2, k3, k4, k5, k6, k7 = jax.random.split(key, 8)

    params = init_params(kp)

    graph = {
        "neigh_type_count": jax.random.uniform(
            k1, (N_NODES, 2), jnp.float32, 0.0, 3.0),
        "node_type": jax.random.randint(k2, (N_NODES,), 0, NUM_NODE_TYPES),
        "src": jax.random.randint(k3, (N_EDGES,), 0, N_NODES),
        "dst": jax.random.randint(k4, (N_EDGES,), 0, N_NODES),
        "edge_type": jax.random.randint(k5, (N_EDGES,), 0, NUM_EDGE_TYPES),
        "edge_norm": jax.random.uniform(
            k6, (N_EDGES,), jnp.float32, 0.1, 1.0),
        "special_cost": jax.random.uniform(
            k7, (N_NODES,), jnp.float32, 0.5, 1.5),
    }

    # ground-truth node map: a permutation matrix (deterministic)
    perm = jnp.roll(jnp.arange(MATRIX_SIZE), 3)
    gt_node_map = jnp.zeros((MATRIX_SIZE, MATRIX_SIZE), jnp.float32)
    gt_node_map = gt_node_map.at[jnp.arange(MATRIX_SIZE), perm].set(1.0)

    res, aux = model_forward(params, graph, gt_node_map)
    jax.block_until_ready(res)
    jax.block_until_ready(aux)

    pred_obj, sumone, reg, ce = res
    assert pred_obj.shape == ()
    assert sumone.shape == (1,) and reg.shape == (1,) and ce.shape == (1,)
    assert aux[0].shape == (N_NODES, NUM_PRED_NODE_MAPS)
    assert aux[1].shape == (N_NODES,)
    print("KERNEL_OK")
</pallas_src>

<mosaic_0001>
module attributes {stable_mosaic.version = 11 : i64} {
  func.func @_fused_forward_kernel(%arg0: memref<96x2xf32, #tpu.memory_space<vmem>>, %arg1: memref<96x1xi32, #tpu.memory_space<vmem>>, %arg2: memref<192x1xi32, #tpu.memory_space<vmem>>, %arg3: memref<1x192xi32, #tpu.memory_space<vmem>>, %arg4: memref<192x1xi32, #tpu.memory_space<vmem>>, %arg5: memref<192x1xf32, #tpu.memory_space<vmem>>, %arg6: memref<96x1xf32, #tpu.memory_space<vmem>>, %arg7: memref<64x1xf32, #tpu.memory_space<vmem>>, %arg8: memref<8x64xf32, #tpu.memory_space<vmem>>, %arg9: memref<8x64xf32, #tpu.memory_space<vmem>>, %arg10: memref<2x32xf32, #tpu.memory_space<vmem>>, %arg11: memref<1x32xf32, #tpu.memory_space<vmem>>, %arg12: memref<32x64xf32, #tpu.memory_space<vmem>>, %arg13: memref<32x96xf32, #tpu.memory_space<vmem>>, %arg14: memref<32x18xf32, #tpu.memory_space<vmem>>, %arg15: memref<1x18xf32, #tpu.memory_space<vmem>>, %arg16: memref<1x4xf32, #tpu.memory_space<vmem>>, %arg17: memref<96x16xf32, #tpu.memory_space<vmem>>, %arg18: memref<96x1xf32, #tpu.memory_space<vmem>>) attributes {dimension_semantics = [], scalar_prefetch = 0 : i64, scratch_operands = 0 : i64, tpu.core_type = #tpu.core_type<tc>} {
    %c0 = arith.constant 0 : index
    %c0_0 = arith.constant 0 : index
    %0 = vector.load %arg0[%c0, %c0_0] : memref<96x2xf32, #tpu.memory_space<vmem>>, vector<96x2xf32>
    %c0_1 = arith.constant 0 : index
    %c0_2 = arith.constant 0 : index
    %1 = vector.load %arg10[%c0_1, %c0_2] : memref<2x32xf32, #tpu.memory_space<vmem>>, vector<2x32xf32>
    %2 = vector.extract_strided_slice %0 {offsets = [0, 0], sizes = [96, 1], strides = [1, 1]} : vector<96x2xf32> to vector<96x1xf32>
    %3 = vector.extract_strided_slice %1 {offsets = [0, 0], sizes = [1, 32], strides = [1, 1]} : vector<2x32xf32> to vector<1x32xf32>
    %4 = vector.broadcast %2 : vector<96x1xf32> to vector<96x32xf32>
    %5 = vector.broadcast %3 : vector<1x32xf32> to vector<96x32xf32>
    %6 = arith.mulf %4, %5 : vector<96x32xf32>
    %7 = vector.extract_strided_slice %0 {offsets = [0, 1], sizes = [96, 1], strides = [1, 1]} : vector<96x2xf32> to vector<96x1xf32>
    %8 = vector.extract_strided_slice %1 {offsets = [1, 0], sizes = [1, 32], strides = [1, 1]} : vector<2x32xf32> to vector<1x32xf32>
    %9 = vector.broadcast %7 : vector<96x1xf32> to vector<96x32xf32>
    %10 = vector.broadcast %8 : vector<1x32xf32> to vector<96x32xf32>
    %11 = arith.mulf %9, %10 : vector<96x32xf32>
    %12 = arith.addf %6, %11 : vector<96x32xf32>
    %c0_3 = arith.constant 0 : index
    %c0_4 = arith.constant 0 : index
    %13 = vector.load %arg11[%c0_3, %c0_4] : memref<1x32xf32, #tpu.memory_space<vmem>>, vector<1x32xf32>
    %14 = vector.broadcast %13 : vector<1x32xf32> to vector<96x32xf32>
    %15 = arith.addf %12, %14 : vector<96x32xf32>
    %c0_5 = arith.constant 0 : index
    %c0_6 = arith.constant 0 : index
    %16 = vector.load %arg12[%c0_5, %c0_6] : memref<32x64xf32, #tpu.memory_space<vmem>>, vector<32x64xf32>
    %cst = arith.constant dense<0.000000e+00> : vector<96x64xf32>
    %17 = tpu.matmul %15, %16, %cst {dimension_numbers = #tpu.dot_dimension_numbers<[1], [0], [0], [1], [0, 0, 1, 1], [], []>} : vector<96x32xf32>, vector<32x64xf32>, vector<96x64xf32> -> vector<96x64xf32>
    %c0_7 = arith.constant 0 : index
    %c0_8 = arith.constant 0 : index
    %18 = vector.load %arg1[%c0_7, %c0_8] : memref<96x1xi32, #tpu.memory_space<vmem>>, vector<96x1xi32>
    %cst_9 = arith.constant 0.000000e+00 : f32
    %19 = vector.broadcast %cst_9 : f32 to vector<96x32xf32>
    %c0_i32 = arith.constant 0 : i32
    %20 = vector.broadcast %c0_i32 : i32 to vector<96x1xi32>
    %21 = arith.cmpi eq, %18, %20 : vector<96x1xi32>
    %22 = vector.extract_strided_slice %17 {offsets = [0, 0], sizes = [96, 32], strides = [1, 1]} : vector<96x64xf32> to vector<96x32xf32>
    %cst_10 = arith.constant 0.000000e+00 : f32
    %23 = vector.shape_cast %21 : vector<96x1xi1> to vector<96x1xi1>
    %24 = vector.broadcast %23 : vector<96x1xi1> to vector<96x32xi1>
    %25 = vector.broadcast %cst_10 : f32 to vector<96x32xf32>
    %26 = arith.select %24, %22, %25 : vector<96x32xi1>, vector<96x32xf32>
    %27 = arith.addf %19, %26 : vector<96x32xf32>
    %c1_i32 = arith.constant 1 : i32
    %28 = vector.broadcast %c1_i32 : i32 to vector<96x1xi32>
    %29 = arith.cmpi eq, %18, %28 : vector<96x1xi32>
    %30 = vector.extract_strided_slice %17 {offsets = [0, 32], sizes = [96, 32], strides = [1, 1]} : vector<96x64xf32> to vector<96x32xf32>
    %cst_11 = arith.constant 0.000000e+00 : f32
    %31 = vector.shape_cast %29 : vector<96x1xi1> to vector<96x1xi1>
    %32 = vector.broadcast %31 : vector<96x1xi1> to vector<96x32xi1>
    %33 = vector.broadcast %cst_11 : f32 to vector<96x32xf32>
    %34 = arith.select %32, %30, %33 : vector<96x32xi1>, vector<96x32xf32>
    %35 = arith.addf %27, %34 : vector<96x32xf32>
    %c0_12 = arith.constant 0 : index
    %c0_13 = arith.constant 0 : index
    %36 = vector.load %arg2[%c0_12, %c0_13] : memref<192x1xi32, #tpu.memory_space<vmem>>, vector<192x1xi32>
    %37 = tpu.iota {dimensions = array<i32: 1>} : vector<192x96xi32>
    %38 = vector.broadcast %36 : vector<192x1xi32> to vector<192x96xi32>
    %39 = arith.cmpi eq, %38, %37 : vector<192x96xi32>
    %40 = arith.extui %39 : vector<192x96xi1> to vector<192x96xi32>
    %41 = arith.sitofp %40 : vector<192x96xi32> to vector<192x96xf32>
    %c0_14 = arith.constant 0 : index
    %c0_15 = arith.constant 0 : index
    %42 = vector.load %arg3[%c0_14, %c0_15] : memref<1x192xi32, #tpu.memory_space<vmem>>, vector<1x192xi32>
    %43 = tpu.iota {dimensions = array<i32: 0>} : vector<96x192xi32>
    %44 = vector.broadcast %42 : vector<1x192xi32> to vector<96x192xi32>
    %45 = arith.cmpi eq, %43, %44 : vector<96x192xi32>
    %46 = arith.extui %45 : vector<96x192xi1> to vector<96x192xi32>
    %47 = arith.sitofp %46 : vector<96x192xi32> to vector<96x192xf32>
    %cst_16 = arith.constant dense<0.000000e+00> : vector<192x32xf32>
    %48 = tpu.matmul %41, %35, %cst_16 {dimension_numbers = #tpu.dot_dimension_numbers<[1], [0], [0], [1], [0, 0, 1, 1], [], []>} : vector<192x96xf32>, vector<96x32xf32>, vector<192x32xf32> -> vector<192x32xf32>
    %c0_17 = arith.constant 0 : index
    %c0_18 = arith.constant 0 : index
    %49 = vector.load %arg13[%c0_17, %c0_18] : memref<32x96xf32, #tpu.memory_space<vmem>>, vector<32x96xf32>
    %cst_19 = arith.constant dense<0.000000e+00> : vector<192x96xf32>
    %50 = tpu.matmul %48, %49, %cst_19 {dimension_numbers = #tpu.dot_dimension_numbers<[1], [0], [0], [1], [0, 0, 1, 1], [], []>} : vector<192x32xf32>, vector<32x96xf32>, vector<192x96xf32> -> vector<192x96xf32>
    %c0_20 = arith.constant 0 : index
    %c0_21 = arith.constant 0 : index
    %51 = vector.load %arg4[%c0_20, %c0_21] : memref<192x1xi32, #tpu.memory_space<vmem>>, vector<192x1xi32>
    %cst_22 = arith.constant 0.000000e+00 : f32
    %52 = vector.broadcast %cst_22 : f32 to vector<192x32xf32>
    %c0_i32_23 = arith.constant 0 : i32
    %53 = vector.broadcast %c0_i32_23 : i32 to vector<192x1xi32>
    %54 = arith.cmpi eq, %51, %53 : vector<192x1xi32>
    %55 = vector.extract_strided_slice %50 {offsets = [0, 0], sizes = [192, 32], strides = [1, 1]} : vector<192x96xf32> to vector<192x32xf32>
    %cst_24 = arith.constant 0.000000e+00 : f32
    %56 = vector.shape_cast %54 : vector<192x1xi1> to vector<192x1xi1>
    %57 = vector.broadcast %56 : vector<192x1xi1> to vector<192x32xi1>
    %58 = vector.broadcast %cst_24 : f32 to vector<192x32xf32>
    %59 = arith.select %57, %55, %58 : vector<192x32xi1>, vector<192x32xf32>
    %60 = arith.addf %52, %59 : vector<192x32xf32>
    %c1_i32_25 = arith.constant 1 : i32
    %61 = vector.broadcast %c1_i32_25 : i32 to vector<192x1xi32>
    %62 = arith.cmpi eq, %51, %61 : vector<192x1xi32>
    %63 = vector.extract_strided_slice %50 {offsets = [0, 32], sizes = [192, 32], strides = [1, 1]} : vector<192x96xf32> to vector<192x32xf32>
    %cst_26 = arith.constant 0.000000e+00 : f32
    %64 = vector.shape_cast %62 : vector<192x1xi1> to vector<192x1xi1>
    %65 = vector.broadcast %64 : vector<192x1xi1> to vector<192x32xi1>
    %66 = vector.broadcast %cst_26 : f32 to vector<192x32xf32>
    %67 = arith.select %65, %63, %66 : vector<192x32xi1>, vector<192x32xf32>
    %68 = arith.addf %60, %67 : vector<192x32xf32>
    %c2_i32 = arith.constant 2 : i32
    %69 = vector.broadcast %c2_i32 : i32 to vector<192x1xi32>
    %70 = arith.cmpi eq, %51, %69 : vector<192x1xi32>
    %71 = vector.extract_strided_slice %50 {offsets = [0, 64], sizes = [192, 32], strides = [1, 1]} : vector<192x96xf32> to vector<192x32xf32>
    %cst_27 = arith.constant 0.000000e+00 : f32
    %72 = vector.shape_cast %70 : vector<192x1xi1> to vector<192x1xi1>
    %73 = vector.broadcast %72 : vector<192x1xi1> to vector<192x32xi1>
    %74 = vector.broadcast %cst_27 : f32 to vector<192x32xf32>
    %75 = arith.select %73, %71, %74 : vector<192x32xi1>, vector<192x32xf32>
    %76 = arith.addf %68, %75 : vector<192x32xf32>
    %c0_28 = arith.constant 0 : index
    %c0_29 = arith.constant 0 : index
    %77 = vector.load %arg5[%c0_28, %c0_29] : memref<192x1xf32, #tpu.memory_space<vmem>>, vector<192x1xf32>
    %78 = vector.broadcast %77 : vector<192x1xf32> to vector<192x32xf32>
    %79 = arith.mulf %76, %78 : vector<192x32xf32>
    %cst_30 = arith.constant dense<0.000000e+00> : vector<96x32xf32>
    %80 = tpu.matmul %47, %79, %cst_30 {dimension_numbers = #tpu.dot_dimension_numbers<[1], [0], [0], [1], [0, 0, 1, 1], [], []>} : vector<96x192xf32>, vector<192x32xf32>, vector<96x32xf32> -> vector<96x32xf32>
    %cst_31 = arith.constant 0.000000e+00 : f32
    %81 = vector.broadcast %cst_31 : f32 to vector<96x32xf32>
    %82 = arith.maximumf %80, %81 : vector<96x32xf32>
    %c0_32 = arith.constant 0 : index
    %c0_33 = arith.constant 0 : index
    %83 = vector.load %arg14[%c0_32, %c0_33] : memref<32x18xf32, #tpu.memory_space<vmem>>, vector<32x18xf32>
    %cst_34 = arith.constant dense<0.000000e+00> : vector<96x18xf32>
    %84 = tpu.matmul %82, %83, %cst_34 {dimension_numbers = #tpu.dot_dimension_numbers<[1], [0], [0], [1], [0, 0, 1, 1], [], []>} : vector<96x32xf32>, vector<32x18xf32>, vector<96x18xf32> -> vector<96x18xf32>
    %c0_35 = arith.constant 0 : index
    %c0_36 = arith.constant 0 : index
    %85 = vector.load %arg15[%c0_35, %c0_36] : memref<1x18xf32, #tpu.memory_space<vmem>>, vector<1x18xf32>
    %86 = vector.broadcast %85 : vector<1x18xf32> to vector<96x18xf32>
    %87 = arith.addf %84, %86 : vector<96x18xf32>
    %88 = vector.extract_strided_slice %87 {offsets = [0, 0], sizes = [96, 1], strides = [1, 1]} : vector<96x18xf32> to vector<96x1xf32>
    %89 = arith.negf %88 : vector<96x1xf32>
    %90 = math.exp %89 : vector<96x1xf32>
    %cst_37 = arith.constant 1.000000e+00 : f32
    %91 = vector.broadcast %cst_37 : f32 to vector<96x1xf32>
    %92 = arith.addf %91, %90 : vector<96x1xf32>
    %93 = arith.divf %91, %92 : vector<96x1xf32>
    %cst_38 = arith.constant 1.000000e-07 : f32
    %cst_39 = arith.constant 1.000000e+10 : f32
    %94 = vector.broadcast %cst_38 : f32 to vector<96x1xf32>
    %95 = arith.maximumf %94, %93 : vector<96x1xf32>
    %96 = vector.broadcast %cst_39 : f32 to vector<96x1xf32>
    %97 = arith.minimumf %96, %95 : vector<96x1xf32>
    %98 = vector.extract_strided_slice %87 {offsets = [0, 1], sizes = [96, 1], strides = [1, 1]} : vector<96x18xf32> to vector<96x1xf32>
    %99 = vector.shape_cast %98 : vector<96x1xf32> to vector<1x96x1xf32>
    %cst_40 = arith.constant dense<0.000000e+00> : vector<1xf32>
    %100 = vector.multi_reduction <add>, %99, %cst_40 [1, 2] : vector<1x96x1xf32> to vector<1xf32>
    %101 = vector.shape_cast %100 : vector<1xf32> to vector<1x1x1xf32>
    %102 = vector.extract %101[0, 0, 0] : f32 from vector<1x1x1xf32>
    %103 = vector.broadcast %102 : f32 to vector<1x1xf32>
    %cst_41 = arith.constant 0.010416667 : f32
    %104 = vector.broadcast %cst_41 : f32 to vector<1x1xf32>
    %105 = arith.mulf %103, %104 : vector<1x1xf32>
    %106 = vector.extract_strided_slice %87 {offsets = [0, 2], sizes = [96, 16], strides = [1, 1]} : vector<96x18xf32> to vector<96x16xf32>
    %107 = arith.negf %106 : vector<96x16xf32>
    %108 = math.exp %107 : vector<96x16xf32>
    %cst_42 = arith.constant 1.000000e+00 : f32
    %109 = vector.broadcast %cst_42 : f32 to vector<96x16xf32>
    %110 = arith.addf %109, %108 : vector<96x16xf32>
    %111 = arith.divf %109, %110 : vector<96x16xf32>
    %c0_43 = arith.constant 0 : index
    %c0_44 = arith.constant 0 : index
    %112 = vector.load %arg17[%c0_43, %c0_44] : memref<96x16xf32, #tpu.memory_space<vmem>>, vector<96x16xf32>
    tpu.vector_store %arg17[%c0_43, %c0_44], %111 {strides = array<i32>} : memref<96x16xf32, #tpu.memory_space<vmem>>, vector<96x16xf32>,
    %113 = vector.extract_strided_slice %97 {offsets = [0, 0], sizes = [64, 1], strides = [1, 1]} : vector<96x1xf32> to vector<64x1xf32>
    %c0_45 = arith.constant 0 : index
    %c0_46 = arith.constant 0 : index
    %114 = vector.load %arg7[%c0_45, %c0_46] : memref<64x1xf32, #tpu.memory_space<vmem>>, vector<64x1xf32>
    %115 = math.log %113 : vector<64x1xf32>
    %116 = arith.mulf %114, %115 : vector<64x1xf32>
    %117 = vector.shape_cast %116 : vector<64x1xf32> to vector<1x64x1xf32>
    %cst_47 = arith.constant dense<0.000000e+00> : vector<1xf32>
    %118 = vector.multi_reduction <add>, %117, %cst_47 [1, 2] : vector<1x64x1xf32> to vector<1xf32>
    %119 = vector.shape_cast %118 : vector<1xf32> to vector<1x1x1xf32>
    %120 = vector.extract %119[0, 0, 0] : f32 from vector<1x1x1xf32>
    %121 = vector.broadcast %120 : f32 to vector<1x1xf32>
    %cst_48 = arith.constant 0.000000e+00 : f32
    %122 = vector.broadcast %cst_48 : f32 to vector<1x1xf32>
    %123 = arith.subf %122, %121 : vector<1x1xf32>
    %cst_49 = arith.constant 1.44269502 : f32
    %124 = vector.broadcast %cst_49 : f32 to vector<1x1xf32>
    %125 = arith.mulf %123, %124 : vector<1x1xf32>
    %c0_50 = arith.constant 0 : index
    %c0_51 = arith.constant 0 : index
    %126 = vector.load %arg8[%c0_50, %c0_51] : memref<8x64xf32, #tpu.memory_space<vmem>>, vector<8x64xf32>
    %cst_52 = arith.constant dense<0.000000e+00> : vector<8x1xf32>
    %127 = tpu.matmul %126, %113, %cst_52 {dimension_numbers = #tpu.dot_dimension_numbers<[1], [0], [0], [1], [0, 0, 1, 1], [], []>} : vector<8x64xf32>, vector<64x1xf32>, vector<8x1xf32> -> vector<8x1xf32>
    %c0_53 = arith.constant 0 : index
    %c0_54 = arith.constant 0 : index
    %128 = vector.load %arg9[%c0_53, %c0_54] : memref<8x64xf32, #tpu.memory_space<vmem>>, vector<8x64xf32>
    %cst_55 = arith.constant dense<0.000000e+00> : vector<8x1xf32>
    %129 = tpu.matmul %128, %113, %cst_55 {dimension_numbers = #tpu.dot_dimension_numbers<[1], [0], [0], [1], [0, 0, 1, 1], [], []>} : vector<8x64xf32>, vector<64x1xf32>, vector<8x1xf32> -> vector<8x1xf32>
    %cst_56 = arith.constant 1.000000e+00 : f32
    %130 = vector.broadcast %cst_56 : f32 to vector<8x1xf32>
    %131 = arith.subf %127, %130 : vector<8x1xf32>
    %132 = arith.mulf %131, %131 : vector<8x1xf32>
    %133 = vector.shape_cast %132 : vector<8x1xf32> to vector<1x8x1xf32>
    %cst_57 = arith.constant dense<0.000000e+00> : vector<1xf32>
    %134 = vector.multi_reduction <add>, %133, %cst_57 [1, 2] : vector<1x8x1xf32> to vector<1xf32>
    %135 = vector.shape_cast %134 : vector<1xf32> to vector<1x1x1xf32>
    %136 = vector.extract %135[0, 0, 0] : f32 from vector<1x1x1xf32>
    %137 = vector.broadcast %136 : f32 to vector<1x1xf32>
    %cst_58 = arith.constant 1.000000e+00 : f32
    %138 = vector.broadcast %cst_58 : f32 to vector<8x1xf32>
    %139 = arith.subf %129, %138 : vector<8x1xf32>
    %140 = arith.mulf %139, %139 : vector<8x1xf32>
    %141 = vector.shape_cast %140 : vector<8x1xf32> to vector<1x8x1xf32>
    %cst_59 = arith.constant dense<0.000000e+00> : vector<1xf32>
    %142 = vector.multi_reduction <add>, %141, %cst_59 [1, 2] : vector<1x8x1xf32> to vector<1xf32>
    %143 = vector.shape_cast %142 : vector<1xf32> to vector<1x1x1xf32>
    %144 = vector.extract %143[0, 0, 0] : f32 from vector<1x1x1xf32>
    %145 = vector.broadcast %144 : f32 to vector<1x1xf32>
    %146 = arith.addf %137, %145 : vector<1x1xf32>
    %147 = arith.mulf %113, %113 : vector<64x1xf32>
    %148 = vector.shape_cast %147 : vector<64x1xf32> to vector<1x64x1xf32>
    %cst_60 = arith.constant dense<0.000000e+00> : vector<1xf32>
    %149 = vector.multi_reduction <add>, %148, %cst_60 [1, 2] : vector<1x64x1xf32> to vector<1xf32>
    %150 = vector.shape_cast %149 : vector<1xf32> to vector<1x1x1xf32>
    %151 = vector.extract %150[0, 0, 0] : f32 from vector<1x1x1xf32>
    %152 = vector.broadcast %151 : f32 to vector<1x1xf32>
    %153 = arith.mulf %127, %127 : vector<8x1xf32>
    %154 = vector.shape_cast %153 : vector<8x1xf32> to vector<1x8x1xf32>
    %cst_61 = arith.constant dense<0.000000e+00> : vector<1xf32>
    %155 = vector.multi_reduction <add>, %154, %cst_61 [1, 2] : vector<1x8x1xf32> to vector<1xf32>
    %156 = vector.shape_cast %155 : vector<1xf32> to vector<1x1x1xf32>
    %157 = vector.extract %156[0, 0, 0] : f32 from vector<1x1x1xf32>
    %158 = vector.broadcast %157 : f32 to vector<1x1xf32>
    %159 = arith.mulf %129, %129 : vector<8x1xf32>
    %160 = vector.shape_cast %159 : vector<8x1xf32> to vector<1x8x1xf32>
    %cst_62 = arith.constant dense<0.000000e+00> : vector<1xf32>
    %161 = vector.multi_reduction <add>, %160, %cst_62 [1, 2] : vector<1x8x1xf32> to vector<1xf32>
    %162 = vector.shape_cast %161 : vector<1xf32> to vector<1x1x1xf32>
    %163 = vector.extract %162[0, 0, 0] : f32 from vector<1x1x1xf32>
    %164 = vector.broadcast %163 : f32 to vector<1x1xf32>
    %165 = arith.addf %158, %164 : vector<1x1xf32>
    %cst_63 = arith.constant 2.000000e+00 : f32
    %166 = vector.broadcast %cst_63 : f32 to vector<1x1xf32>
    %167 = arith.mulf %166, %152 : vector<1x1xf32>
    %168 = arith.subf %165, %167 : vector<1x1xf32>
    %cst_64 = arith.constant dense<0.000000e+00> : vector<192x1xf32>
    %169 = tpu.matmul %41, %97, %cst_64 {dimension_numbers = #tpu.dot_dimension_numbers<[1], [0], [0], [1], [0, 0, 1, 1], [], []>} : vector<192x96xf32>, vector<96x1xf32>, vector<192x1xf32> -> vector<192x1xf32>
    %cst_65 = arith.constant dense<0.000000e+00> : vector<96x1xf32>
    %170 = tpu.matmul %47, %169, %cst_65 {dimension_numbers = #tpu.dot_dimension_numbers<[1], [0], [0], [1], [0, 0, 1, 1], [], []>} : vector<96x192xf32>, vector<192x1xf32>, vector<96x1xf32> -> vector<96x1xf32>
    %cst_66 = arith.constant 1.000000e+00 : f32
    %171 = vector.broadcast %cst_66 : f32 to vector<96x1xf32>
    %172 = arith.subf %170, %171 : vector<96x1xf32>
    %173 = arith.mulf %172, %172 : vector<96x1xf32>
    %c0_67 = arith.constant 0 : index
    %c0_68 = arith.constant 0 : index
    %174 = vector.load %arg6[%c0_67, %c0_68] : memref<96x1xf32, #tpu.memory_space<vmem>>, vector<96x1xf32>
    %175 = arith.mulf %173, %174 : vector<96x1xf32>
    %c0_69 = arith.constant 0 : index
    %c0_70 = arith.constant 0 : index
    %176 = vector.load %arg18[%c0_69, %c0_70] : memref<96x1xf32, #tpu.memory_space<vmem>>, vector<96x1xf32>
    tpu.vector_store %arg18[%c0_69, %c0_70], %175 {strides = array<i32>} : memref<96x1xf32, #tpu.memory_space<vmem>>, vector<96x1xf32>,
    %177 = tpu.iota {dimensions = array<i32: 1>} : vector<1x4xi32>
    %c0_i32_71 = arith.constant 0 : i32
    %178 = vector.broadcast %c0_i32_71 : i32 to vector<1x4xi32>
    %179 = arith.cmpi eq, %177, %178 : vector<1x4xi32>
    %180 = arith.extui %179 : vector<1x4xi1> to vector<1x4xi32>
    %181 = arith.sitofp %180 : vector<1x4xi32> to vector<1x4xf32>
    %182 = vector.broadcast %105 : vector<1x1xf32> to vector<1x4xf32>
    %183 = arith.mulf %182, %181 : vector<1x4xf32>
    %c1_i32_72 = arith.constant 1 : i32
    %184 = vector.broadcast %c1_i32_72 : i32 to vector<1x4xi32>
    %185 = arith.cmpi eq, %177, %184 : vector<1x4xi32>
    %186 = arith.extui %185 : vector<1x4xi1> to vector<1x4xi32>
    %187 = arith.sitofp %186 : vector<1x4xi32> to vector<1x4xf32>
    %188 = vector.broadcast %146 : vector<1x1xf32> to vector<1x4xf32>
    %189 = arith.mulf %188, %187 : vector<1x4xf32>
    %190 = arith.addf %183, %189 : vector<1x4xf32>
    %c2_i32_73 = arith.constant 2 : i32
    %191 = vector.broadcast %c2_i32_73 : i32 to vector<1x4xi32>
    %192 = arith.cmpi eq, %177, %191 : vector<1x4xi32>
    %193 = arith.extui %192 : vector<1x4xi1> to vector<1x4xi32>
    %194 = arith.sitofp %193 : vector<1x4xi32> to vector<1x4xf32>
    %195 = vector.broadcast %168 : vector<1x1xf32> to vector<1x4xf32>
    %196 = arith.mulf %195, %194 : vector<1x4xf32>
    %197 = arith.addf %190, %196 : vector<1x4xf32>
    %c3_i32 = arith.constant 3 : i32
    %198 = vector.broadcast %c3_i32 : i32 to vector<1x4xi32>
    %199 = arith.cmpi eq, %177, %198 : vector<1x4xi32>
    %200 = arith.extui %199 : vector<1x4xi1> to vector<1x4xi32>
    %201 = arith.sitofp %200 : vector<1x4xi32> to vector<1x4xf32>
    %202 = vector.broadcast %125 : vector<1x1xf32> to vector<1x4xf32>
    %203 = arith.mulf %202, %201 : vector<1x4xf32>
    %204 = arith.addf %197, %203 : vector<1x4xf32>
    %c0_74 = arith.constant 0 : index
    %c0_75 = arith.constant 0 : index
    %205 = vector.load %arg16[%c0_74, %c0_75] : memref<1x4xf32, #tpu.memory_space<vmem>>, vector<1x4xf32>
    tpu.vector_store %arg16[%c0_74, %c0_75], %204 {strides = array<i32>} : memref<1x4xf32, #tpu.memory_space<vmem>>, vector<1x4xf32>,
    return
  }
}

</mosaic_0001>

<llo_original>
// kernel: model_forward.1
$region0: #{model_forward.1}
  #allocation0 [shape = 'u32[]', space=smem, size = 0x4, offset = 0x4, fixed_abs, tag = 'smem constant byte address 0x4 - core index']
  #allocation1 [shape = 'u32[144,128]{1,0:T(1,128)}', space=vmem, size = 0x12000, scoped, tag = 'internal scratch']
  %s0 = inlined_call_operand.vmem [shape: f32[96,2], index: 0, kind: input, shape index: {}]
  %s1 = inlined_call_operand.vmem [shape: s32[96,1], index: 1, kind: input, shape index: {}]
  %s2 = inlined_call_operand.vmem [shape: s32[192,1], index: 2, kind: input, shape index: {}]
  %s3 = inlined_call_operand.vmem [shape: s32[1,192], index: 3, kind: input, shape index: {}]
  %s4 = inlined_call_operand.vmem [shape: s32[192,1], index: 4, kind: input, shape index: {}]
  %s5 = inlined_call_operand.vmem [shape: f32[192,1], index: 5, kind: input, shape index: {}]
  %s6 = inlined_call_operand.vmem [shape: f32[96,1], index: 6, kind: input, shape index: {}]
  %s7 = inlined_call_operand.vmem [shape: f32[64,1], index: 7, kind: input, shape index: {}]
  %s8 = inlined_call_operand.vmem [shape: f32[8,64], index: 8, kind: input, shape index: {}]
  %s9 = inlined_call_operand.vmem [shape: f32[8,64], index: 9, kind: input, shape index: {}]
  %s10 = inlined_call_operand.vmem [shape: f32[2,32], index: 10, kind: input, shape index: {}]
  %s11 = inlined_call_operand.vmem [shape: f32[1,32], index: 11, kind: input, shape index: {}]
  %s12 = inlined_call_operand.vmem [shape: f32[32,64], index: 12, kind: input, shape index: {}]
  %s13 = inlined_call_operand.vmem [shape: f32[32,96], index: 13, kind: input, shape index: {}]
  %s14 = inlined_call_operand.vmem [shape: f32[32,18], index: 14, kind: input, shape index: {}]
  %s15 = inlined_call_operand.vmem [shape: f32[1,18], index: 15, kind: input, shape index: {}]
  %s16 = inlined_call_operand.vmem [shape: f32[1,4], index: 16, kind: output, shape index: {0}]
  %s17 = inlined_call_operand.vmem [shape: f32[96,16], index: 17, kind: output, shape index: {1}]
  %s18 = inlined_call_operand.vmem [shape: f32[96,1], index: 18, kind: output, shape index: {2}]
  %19 = xla_tuple %s16, %s17, %s18
  %s20 = sld [smem:[#allocation0]]
  $region90: #{model_forward.1} parent=0
    _
  %s22 = ssub.s32 1, %s20
  %s23 = scalar_select 0, %s22, %s20
  // Predicated region
  $region2: #{model_forward.1} parent=0 // pred_check
    _
  $region3: #{model_forward.1} parent=0 // pred_check_branch
    %25 = sbr.rel (0) target = $region5
  $region4: #{model_forward.1} parent=0 // pred_region
    _
  $region5: #{model_forward.1} parent=0 // pred_fallthru
    _
  // Predicated region
  $region6: #{model_forward.1} parent=0 // pred_check
    _
  $region7: #{model_forward.1} parent=0 // pred_check_branch
    %27 = sbr.rel (0) target = $region9
  $region8: #{model_forward.1} parent=0 // pred_region
    _
  $region9: #{model_forward.1} parent=0 // pred_fallthru
    _
  // Predicated region
  $region10: #{model_forward.1} parent=0 // pred_check
    _
  $region11: #{model_forward.1} parent=0 // pred_check_branch
    %29 = sbr.rel (0) target = $region13
  $region12: #{model_forward.1} parent=0 // pred_region
    _
  $region13: #{model_forward.1} parent=0 // pred_fallthru
    _
  // Predicated region
  $region14: #{model_forward.1} parent=0 // pred_check
    _
  $region15: #{model_forward.1} parent=0 // pred_check_branch
    %31 = sbr.rel (0) target = $region17
  $region16: #{model_forward.1} parent=0 // pred_region
    _
  $region17: #{model_forward.1} parent=0 // pred_fallthru
    _
  // Predicated region
  $region18: #{model_forward.1} parent=0 // pred_check
    _
  $region19: #{model_forward.1} parent=0 // pred_check_branch
    %33 = sbr.rel (0) target = $region21
  $region20: #{model_forward.1} parent=0 // pred_region
    _
  $region21: #{model_forward.1} parent=0 // pred_fallthru
    _
  // Predicated region
  $region22: #{model_forward.1} parent=0 // pred_check
    _
  $region23: #{model_forward.1} parent=0 // pred_check_branch
    %35 = sbr.rel (0) target = $region25
  $region24: #{model_forward.1} parent=0 // pred_region
    _
  $region25: #{model_forward.1} parent=0 // pred_fallthru
    _
  // Predicated region
  $region26: #{model_forward.1} parent=0 // pred_check
    _
  $region27: #{model_forward.1} parent=0 // pred_check_branch
    %37 = sbr.rel (0) target = $region29
  $region28: #{model_forward.1} parent=0 // pred_region
    _
  $region29: #{model_forward.1} parent=0 // pred_fallthru
    _
  // Predicated region
  $region30: #{model_forward.1} parent=0 // pred_check
    _
  $region31: #{model_forward.1} parent=0 // pred_check_branch
    %39 = sbr.rel (0) target = $region33
  $region32: #{model_forward.1} parent=0 // pred_region
    _
  $region33: #{model_forward.1} parent=0 // pred_fallthru
    _
  // Predicated region
  $region34: #{model_forward.1} parent=0 // pred_check
    _
  $region35: #{model_forward.1} parent=0 // pred_check_branch
    %41 = sbr.rel (0) target = $region37
  $region36: #{model_forward.1} parent=0 // pred_region
    _
  $region37: #{model_forward.1} parent=0 // pred_fallthru
    _
  // Predicated region
  $region38: #{model_forward.1} parent=0 // pred_check
    _
  $region39: #{model_forward.1} parent=0 // pred_check_branch
    %43 = sbr.rel (0) target = $region41
  $region40: #{model_forward.1} parent=0 // pred_region
    _
  $region41: #{model_forward.1} parent=0 // pred_fallthru
    _
  // Predicated region
  $region42: #{model_forward.1} parent=0 // pred_check
    _
  $region43: #{model_forward.1} parent=0 // pred_check_branch
    %45 = sbr.rel (0) target = $region45
  $region44: #{model_forward.1} parent=0 // pred_region
    _
  $region45: #{model_forward.1} parent=0 // pred_fallthru
    _
  // Predicated region
  $region46: #{model_forward.1} parent=0 // pred_check
    _
  $region47: #{model_forward.1} parent=0 // pred_check_branch
    %47 = sbr.rel (0) target = $region49
  $region48: #{model_forward.1} parent=0 // pred_region
    _
  $region49: #{model_forward.1} parent=0 // pred_fallthru
    _
  // Predicated region
  $region50: #{model_forward.1} parent=0 // pred_check
    _
  $region51: #{model_forward.1} parent=0 // pred_check_branch
    %49 = sbr.rel (0) target = $region53
  $region52: #{model_forward.1} parent=0 // pred_region
    _
  $region53: #{model_forward.1} parent=0 // pred_fallthru
    _
  // Predicated region
  $region54: #{model_forward.1} parent=0 // pred_check
    _
  $region55: #{model_forward.1} parent=0 // pred_check_branch
    %51 = sbr.rel (0) target = $region57
  $region56: #{model_forward.1} parent=0 // pred_region
    _
  $region57: #{model_forward.1} parent=0 // pred_fallthru
    _
  // Predicated region
  $region58: #{model_forward.1} parent=0 // pred_check
    _
  $region59: #{model_forward.1} parent=0 // pred_check_branch
    %53 = sbr.rel (0) target = $region61
  $region60: #{model_forward.1} parent=0 // pred_region
    _
  $region61: #{model_forward.1} parent=0 // pred_fallthru
    _
  // Predicated region
  $region62: #{model_forward.1} parent=0 // pred_check
    _
  $region63: #{model_forward.1} parent=0 // pred_check_branch
    %55 = sbr.rel (0) target = $region65
  $region64: #{model_forward.1} parent=0 // pred_region
    _
  $region65: #{model_forward.1} parent=0 // pred_fallthru
    _
  %v56 = vld [vmem:[%s0] sm:$0xff]
  %v57 = vld [vmem:[%s0 + $0x8] sm:$0xff]
  %v58 = vld [vmem:[%s0 + $0x10] sm:$0xff]
  %v59 = vld [vmem:[%s0 + $0x18] sm:$0xff]
  %v60 = vld [vmem:[%s0 + $0x20] sm:$0xff]
  %v61 = vld [vmem:[%s0 + $0x28] sm:$0xff]
  %v62 = vld [vmem:[%s0 + $0x30] sm:$0xff]
  %v63 = vld [vmem:[%s0 + $0x38] sm:$0xff]
  %v64 = vld [vmem:[%s0 + $0x40] sm:$0xff]
  %v65 = vld [vmem:[%s0 + $0x48] sm:$0xff]
  %v66 = vld [vmem:[%s0 + $0x50] sm:$0xff]
  %v67 = vld [vmem:[%s0 + $0x58] sm:$0xff]
  %v68 = vld [vmem:[%s10] sm:$0x3]
  %70 = vset.pattern.permute.xlu0 0
  %71 = vperm.xlu0 %70, %v56
  %v72 = vpop.permute.xlu0 %71
  %75 = vset.pattern.permute.xlu0 0
  %76 = vperm.xlu0 %75, %v57
  %v77 = vpop.permute.xlu0 %76
  %80 = vset.pattern.permute.xlu0 0
  %81 = vperm.xlu0 %80, %v58
  %v82 = vpop.permute.xlu0 %81
  %85 = vset.pattern.permute.xlu0 0
  %86 = vperm.xlu0 %85, %v59
  %v87 = vpop.permute.xlu0 %86
  %90 = vset.pattern.permute.xlu0 0
  %91 = vperm.xlu0 %90, %v60
  %v92 = vpop.permute.xlu0 %91
  %95 = vset.pattern.permute.xlu0 0
  %96 = vperm.xlu0 %95, %v61
  %v97 = vpop.permute.xlu0 %96
  %100 = vset.pattern.permute.xlu0 0
  %101 = vperm.xlu0 %100, %v62
  %v102 = vpop.permute.xlu0 %101
  %105 = vset.pattern.permute.xlu0 0
  %106 = vperm.xlu0 %105, %v63
  %v107 = vpop.permute.xlu0 %106
  %110 = vset.pattern.permute.xlu0 0
  %111 = vperm.xlu0 %110, %v64
  %v112 = vpop.permute.xlu0 %111
  %115 = vset.pattern.permute.xlu0 0
  %116 = vperm.xlu0 %115, %v65
  %v117 = vpop.permute.xlu0 %116
  %120 = vset.pattern.permute.xlu0 0
  %121 = vperm.xlu0 %120, %v66
  %v122 = vpop.permute.xlu0 %121
  %125 = vset.pattern.permute.xlu0 0
  %126 = vperm.xlu0 %125, %v67
  %v127 = vpop.permute.xlu0 %126
  %v129 = vlaneseq
  %v130 = vshrl.u32 %v129, 7
  %v131 = vsub.s32 0, %v130
  %v132 = vrot.slane %v68, %v131
  %v133 = vmul.f32 %v72, %v132
  %v134 = vmul.f32 %v77, %v132
  %v135 = vmul.f32 %v82, %v132
  %v136 = vmul.f32 %v87, %v132
  %v137 = vmul.f32 %v92, %v132
  %v138 = vmul.f32 %v97, %v132
  %v139 = vmul.f32 %v102, %v132
  %v140 = vmul.f32 %v107, %v132
  %v141 = vmul.f32 %v112, %v132
  %v142 = vmul.f32 %v117, %v132
  %v143 = vmul.f32 %v122, %v132
  %v144 = vmul.f32 %v127, %v132
  %145 = vset.pattern.permute.xlu0 1
  %146 = vperm.xlu0 %145, %v56
  %v147 = vpop.permute.xlu0 %146
  %149 = vset.pattern.permute.xlu0 1
  %150 = vperm.xlu0 %149, %v57
  %v151 = vpop.permute.xlu0 %150
  %153 = vset.pattern.permute.xlu0 1
  %154 = vperm.xlu0 %153, %v58
  %v155 = vpop.permute.xlu0 %154
  %157 = vset.pattern.permute.xlu0 1
  %158 = vperm.xlu0 %157, %v59
  %v159 = vpop.permute.xlu0 %158
  %161 = vset.pattern.permute.xlu0 1
  %162 = vperm.xlu0 %161, %v60
  %v163 = vpop.permute.xlu0 %162
  %165 = vset.pattern.permute.xlu0 1
  %166 = vperm.xlu0 %165, %v61
  %v167 = vpop.permute.xlu0 %166
  %169 = vset.pattern.permute.xlu0 1
  %170 = vperm.xlu0 %169, %v62
  %v171 = vpop.permute.xlu0 %170
  %173 = vset.pattern.permute.xlu0 1
  %174 = vperm.xlu0 %173, %v63
  %v175 = vpop.permute.xlu0 %174
  %177 = vset.pattern.permute.xlu0 1
  %178 = vperm.xlu0 %177, %v64
  %v179 = vpop.permute.xlu0 %178
  %181 = vset.pattern.permute.xlu0 1
  %182 = vperm.xlu0 %181, %v65
  %v183 = vpop.permute.xlu0 %182
  %185 = vset.pattern.permute.xlu0 1
  %186 = vperm.xlu0 %185, %v66
  %v187 = vpop.permute.xlu0 %186
  %189 = vset.pattern.permute.xlu0 1
  %190 = vperm.xlu0 %189, %v67
  %v191 = vpop.permute.xlu0 %190
  %v193 = vlaneseq
  %v194 = vshrl.u32 %v193, 7
  %v195 = vsub.s32 1, %v194
  %v196 = vrot.slane %v68, %v195
  %v197 = vmul.f32 %v147, %v196
  %v198 = vmul.f32 %v151, %v196
  %v199 = vmul.f32 %v155, %v196
  %v200 = vmul.f32 %v159, %v196
  %v201 = vmul.f32 %v163, %v196
  %v202 = vmul.f32 %v167, %v196
  %v203 = vmul.f32 %v171, %v196
  %v204 = vmul.f32 %v175, %v196
  %v205 = vmul.f32 %v179, %v196
  %v206 = vmul.f32 %v183, %v196
  %v207 = vmul.f32 %v187, %v196
  %v208 = vmul.f32 %v191, %v196
  %v209 = vadd.f32 %v133, %v197
  %v210 = vadd.f32 %v134, %v198
  %v211 = vadd.f32 %v135, %v199
  %v212 = vadd.f32 %v136, %v200
  %v213 = vadd.f32 %v137, %v201
  %v214 = vadd.f32 %v138, %v202
  %v215 = vadd.f32 %v139, %v203
  %v216 = vadd.f32 %v140, %v204
  %v217 = vadd.f32 %v141, %v205
  %v218 = vadd.f32 %v142, %v206
  %v219 = vadd.f32 %v143, %v207
  %v220 = vadd.f32 %v144, %v208
  %v221 = vld [vmem:[%s11] sm:$0x1]
  %v223 = vlaneseq
  %v224 = vshrl.u32 %v223, 7
  %v225 = vsub.s32 0, %v224
  %v226 = vrot.slane %v221, %v225
  %v228 = vadd.f32 %v209, %v226
  %v229 = vadd.f32 %v210, %v226
  %v230 = vadd.f32 %v211, %v226
  %v231 = vadd.f32 %v212, %v226
  %v232 = vadd.f32 %v213, %v226
  %v233 = vadd.f32 %v214, %v226
  %v234 = vadd.f32 %v215, %v226
  %v235 = vadd.f32 %v216, %v226
  %v236 = vadd.f32 %v217, %v226
  %v237 = vadd.f32 %v218, %v226
  %v238 = vadd.f32 %v219, %v226
  %v239 = vadd.f32 %v220, %v226
  %v240 = vld [vmem:[%s12] sm:$0xff]
  %v241 = vld [vmem:[%s12 + $0x8] sm:$0xff]
  %v242 = vld [vmem:[%s12 + $0x10] sm:$0xff]
  %v243 = vld [vmem:[%s12 + $0x18] sm:$0xff]
  %vm244 = vcmask 261120
  %v246 = vsel %vm244, %v228, 0
  %v249 = vsel %vm244, %v229, 0
  %v252 = vsel %vm244, %v230, 0
  %v255 = vsel %vm244, %v231, 0
  %v258 = vsel %vm244, %v232, 0
  %v261 = vsel %vm244, %v233, 0
  %v264 = vsel %vm244, %v234, 0
  %v267 = vsel %vm244, %v235, 0
  %v270 = vsel %vm244, %v236, 0
  %v273 = vsel %vm244, %v237, 0
  %v276 = vsel %vm244, %v238, 0
  %v279 = vsel %vm244, %v239, 0
  %281 = vmatprep.subr.mxu0 0.0
  %282 = vmatpush1.msra.mxu0 %v240
  %283 = vmatprep.subr.mxu0 0.0
  %284 = vmatpush1.msra.mxu0 %v241
  %285 = vmatprep.subr.mxu0 0.0
  %286 = vmatpush1.msra.mxu0 %v242
  %287 = vmatprep.subr.mxu0 0.0
  %288 = vmatpush1.msra.mxu0 %v243
  %289 = vmatprep.subr.mxu0 0.0
  %290 = vmatpush1.msra.mxu0 0.0
  %291 = vmatprep.subr.mxu0 0.0
  %292 = vmatpush1.msra.mxu0 0.0
  %293 = vmatprep.subr.mxu0 0.0
  %294 = vmatpush1.msra.mxu0 0.0
  %295 = vmatprep.subr.mxu0 0.0
  %296 = vmatpush1.msra.mxu0 0.0
  %297 = vmatprep.subr.mxu0 0.0
  %298 = vmatpush1.msra.mxu0 0.0
  %299 = vmatprep.subr.mxu0 0.0
  %300 = vmatpush1.msra.mxu0 0.0
  %301 = vmatprep.subr.mxu0 0.0
  %302 = vmatpush1.msra.mxu0 0.0
  %303 = vmatprep.subr.mxu0 0.0
  %304 = vmatpush1.msra.mxu0 0.0
  %305 = vmatprep.subr.mxu0 0.0
  %306 = vmatpush1.msra.mxu0 0.0
  %307 = vmatprep.subr.mxu0 0.0
  %308 = vmatpush1.msra.mxu0 0.0
  %309 = vmatprep.subr.mxu0 0.0
  %310 = vmatpush1.msra.mxu0 0.0
  %311 = vmatprep.subr.mxu0 0.0
  %312 = vmatpush1.msra.mxu0 0.0
  %313 = vmatprep.subr.mxu0 0.0
  %314 = vmatpush1.msra.mxu0 0.0
  %315 = vmatprep.subr.mxu0 0.0
  %316 = vmatpush1.msra.mxu0 0.0
  %317 = vmatprep.subr.mxu0 0.0
  %318 = vmatpush1.msra.mxu0 0.0
  %319 = vmatprep.subr.mxu0 0.0
  %320 = vmatpush1.msra.mxu0 0.0
  %321 = vmatprep.subr.mxu0 0.0
  %322 = vmatpush1.msra.mxu0 0.0
  %323 = vmatprep.subr.mxu0 0.0
  %324 = vmatpush1.msra.mxu0 0.0
  %325 = vmatprep.subr.mxu0 0.0
  %326 = vmatpush1.msra.mxu0 0.0
  %327 = vmatprep.subr.mxu0 0.0
  %328 = vmatpush1.msra.mxu0 0.0
  %329 = vmatprep.subr.mxu0 0.0
  %330 = vmatpush1.msra.mxu0 0.0
  %331 = vmatprep.subr.mxu0 0.0
  %332 = vmatpush1.msra.mxu0 0.0
  %333 = vmatprep.subr.mxu0 0.0
  %334 = vmatpush1.msra.mxu0 0.0
  %335 = vmatprep.subr.mxu0 0.0
  %336 = vmatpush1.msra.mxu0 0.0
  %337 = vmatprep.subr.mxu0 0.0
  %338 = vmatpush1.msra.mxu0 0.0
  %339 = vmatprep.subr.mxu0 0.0
  %340 = vmatpush1.msra.mxu0 0.0
  %341 = vmatprep.subr.mxu0 0.0
  %342 = vmatpush1.msra.mxu0 0.0
  %343 = vmatprep.subr.mxu0 0.0
  %344 = vmatpush1.msra.mxu0 0.0
  %345 = vmatprep.mubr.f32.mxu0 0.0
  %346 = vmatmul.mubr.f32.gmra.mrb[0].mxu0 %v246
  %v347 = vpop.f32.mrb[0].mxu0
  %v348 = vadd.f32 0.0, %v347
  %v349 = vpop.f32.mrb[0].mxu0
  %350 = vmatprep.mubr.f32.mxu0 0.0
  %351 = vmatmul.mubr.f32.gmra.mrb[0].mxu0 %v249
  %v352 = vpop.f32.mrb[0].mxu0
  %v353 = vadd.f32 0.0, %v352
  %v354 = vpop.f32.mrb[0].mxu0
  %355 = vmatprep.mubr.f32.mxu0 0.0
  %356 = vmatmul.mubr.f32.gmra.mrb[0].mxu0 %v252
  %v357 = vpop.f32.mrb[0].mxu0
  %v358 = vadd.f32 0.0, %v357
  %v359 = vpop.f32.mrb[0].mxu0
  %360 = vmatprep.mubr.f32.mxu0 0.0
  %361 = vmatmul.mubr.f32.gmra.mrb[0].mxu0 %v255
  %v362 = vpop.f32.mrb[0].mxu0
  %v363 = vadd.f32 0.0, %v362
  %v364 = vpop.f32.mrb[0].mxu0
  %365 = vmatprep.mubr.f32.mxu0 0.0
  %366 = vmatmul.mubr.f32.gmra.mrb[0].mxu0 %v258
  %v367 = vpop.f32.mrb[0].mxu0
  %v368 = vadd.f32 0.0, %v367
  %v369 = vpop.f32.mrb[0].mxu0
  %370 = vmatprep.mubr.f32.mxu0 0.0
  %371 = vmatmul.mubr.f32.gmra.mrb[0].mxu0 %v261
  %v372 = vpop.f32.mrb[0].mxu0
  %v373 = vadd.f32 0.0, %v372
  %v374 = vpop.f32.mrb[0].mxu0
  %375 = vmatprep.mubr.f32.mxu0 0.0
  %376 = vmatmul.mubr.f32.gmra.mrb[0].mxu0 %v264
  %v377 = vpop.f32.mrb[0].mxu0
  %v378 = vadd.f32 0.0, %v377
  %v379 = vpop.f32.mrb[0].mxu0
  %380 = vmatprep.mubr.f32.mxu0 0.0
  %381 = vmatmul.mubr.f32.gmra.mrb[0].mxu0 %v267
  %v382 = vpop.f32.mrb[0].mxu0
  %v383 = vadd.f32 0.0, %v382
  %v384 = vpop.f32.mrb[0].mxu0
  %385 = vmatprep.mubr.f32.mxu0 0.0
  %386 = vmatmul.mubr.f32.gmra.mrb[0].mxu0 %v270
  %v387 = vpop.f32.mrb[0].mxu0
  %v388 = vadd.f32 0.0, %v387
  %v389 = vpop.f32.mrb[0].mxu0
  %390 = vmatprep.mubr.f32.mxu0 0.0
  %391 = vmatmul.mubr.f32.gmra.mrb[0].mxu0 %v273
  %v392 = vpop.f32.mrb[0].mxu0
  %v393 = vadd.f32 0.0, %v392
  %v394 = vpop.f32.mrb[0].mxu0
  %395 = vmatprep.mubr.f32.mxu0 0.0
  %396 = vmatmul.mubr.f32.gmra.mrb[0].mxu0 %v276
  %v397 = vpop.f32.mrb[0].mxu0
  %v398 = vadd.f32 0.0, %v397
  %v399 = vpop.f32.mrb[0].mxu0
  %400 = vmatprep.mubr.f32.mxu0 0.0
  %401 = vmatmul.mubr.f32.gmra.mrb[0].mxu0 %v279
  %v402 = vpop.f32.mrb[0].mxu0
  %v403 = vadd.f32 0.0, %v402
  %v404 = vpop.f32.mrb[0].mxu0
  %405 = vdwg.mxu0
  %v406 = vld [vmem:[%s1] sm:$0xff]
  %v407 = vld [vmem:[%s1 + $0x8] sm:$0xff]
  %v408 = vld [vmem:[%s1 + $0x10] sm:$0xff]
  %v409 = vld [vmem:[%s1 + $0x18] sm:$0xff]
  %v410 = vld [vmem:[%s1 + $0x20] sm:$0xff]
  %v411 = vld [vmem:[%s1 + $0x28] sm:$0xff]
  %v412 = vld [vmem:[%s1 + $0x30] sm:$0xff]
  %v413 = vld [vmem:[%s1 + $0x38] sm:$0xff]
  %v414 = vld [vmem:[%s1 + $0x40] sm:$0xff]
  %v415 = vld [vmem:[%s1 + $0x48] sm:$0xff]
  %v416 = vld [vmem:[%s1 + $0x50] sm:$0xff]
  %v417 = vld [vmem:[%s1 + $0x58] sm:$0xff]
  %vm418 = vcmp.eq.s32.totalorder %v406, 0
  %vm419 = vcmp.eq.s32.totalorder %v407, 0
  %vm420 = vcmp.eq.s32.totalorder %v408, 0
  %vm421 = vcmp.eq.s32.totalorder %v409, 0
  %vm422 = vcmp.eq.s32.totalorder %v410, 0
  %vm423 = vcmp.eq.s32.totalorder %v411, 0
  %vm424 = vcmp.eq.s32.totalorder %v412, 0
  %vm425 = vcmp.eq.s32.totalorder %v413, 0
  %vm426 = vcmp.eq.s32.totalorder %v414, 0
  %vm427 = vcmp.eq.s32.totalorder %v415, 0
  %vm428 = vcmp.eq.s32.totalorder %v416, 0
  %vm429 = vcmp.eq.s32.totalorder %v417, 0
  %v430 = vsel %vm418, 1, 0
  %v431 = vsel %vm419, 1, 0
  %v432 = vsel %vm420, 1, 0
  %v433 = vsel %vm421, 1, 0
  %v434 = vsel %vm422, 1, 0
  %v435 = vsel %vm423, 1, 0
  %v436 = vsel %vm424, 1, 0
  %v437 = vsel %vm425, 1, 0
  %v438 = vsel %vm426, 1, 0
  %v439 = vsel %vm427, 1, 0
  %v440 = vsel %vm428, 1, 0
  %v441 = vsel %vm429, 1, 0
  %442 = vset.pattern.permute.xlu0 0
  %443 = vperm.xlu0 %442, %v430
  %v444 = vpop.permute.xlu0 %443
  %445 = vset.pattern.permute.xlu0 0
  %446 = vperm.xlu0 %445, %v431
  %v447 = vpop.permute.xlu0 %446
  %448 = vset.pattern.permute.xlu0 0
  %449 = vperm.xlu0 %448, %v432
  %v450 = vpop.permute.xlu0 %449
  %451 = vset.pattern.permute.xlu0 0
  %452 = vperm.xlu0 %451, %v433
  %v453 = vpop.permute.xlu0 %452
  %454 = vset.pattern.permute.xlu0 0
  %455 = vperm.xlu0 %454, %v434
  %v456 = vpop.permute.xlu0 %455
  %457 = vset.pattern.permute.xlu0 0
  %458 = vperm.xlu0 %457, %v435
  %v459 = vpop.permute.xlu0 %458
  %460 = vset.pattern.permute.xlu0 0
  %461 = vperm.xlu0 %460, %v436
  %v462 = vpop.permute.xlu0 %461
  %463 = vset.pattern.permute.xlu0 0
  %464 = vperm.xlu0 %463, %v437
  %v465 = vpop.permute.xlu0 %464
  %466 = vset.pattern.permute.xlu0 0
  %467 = vperm.xlu0 %466, %v438
  %v468 = vpop.permute.xlu0 %467
  %469 = vset.pattern.permute.xlu0 0
  %470 = vperm.xlu0 %469, %v439
  %v471 = vpop.permute.xlu0 %470
  %472 = vset.pattern.permute.xlu0 0
  %473 = vperm.xlu0 %472, %v440
  %v474 = vpop.permute.xlu0 %473
  %475 = vset.pattern.permute.xlu0 0
  %476 = vperm.xlu0 %475, %v441
  %v477 = vpop.permute.xlu0 %476
  %vm478 = vcmp.eq.s32.totalorder %v444, 1
  %vm479 = vcmp.eq.s32.totalorder %v447, 1
  %vm480 = vcmp.eq.s32.totalorder %v450, 1
  %vm481 = vcmp.eq.s32.totalorder %v453, 1
  %vm482 = vcmp.eq.s32.totalorder %v456, 1
  %vm483 = vcmp.eq.s32.totalorder %v459, 1
  %vm484 = vcmp.eq.s32.totalorder %v462, 1
  %vm485 = vcmp.eq.s32.totalorder %v465, 1
  %vm486 = vcmp.eq.s32.totalorder %v468, 1
  %vm487 = vcmp.eq.s32.totalorder %v471, 1
  %vm488 = vcmp.eq.s32.totalorder %v474, 1
  %vm489 = vcmp.eq.s32.totalorder %v477, 1
  %v490 = vsel %vm478, %v348, 0.0
  %v491 = vsel %vm479, %v353, 0.0
  %v492 = vsel %vm480, %v358, 0.0
  %v493 = vsel %vm481, %v363, 0.0
  %v494 = vsel %vm482, %v368, 0.0
  %v495 = vsel %vm483, %v373, 0.0
  %v496 = vsel %vm484, %v378, 0.0
  %v497 = vsel %vm485, %v383, 0.0
  %v498 = vsel %vm486, %v388, 0.0
  %v499 = vsel %vm487, %v393, 0.0
  %v500 = vsel %vm488, %v398, 0.0
  %v501 = vsel %vm489, %v403, 0.0
  %v502 = vadd.f32 %v490, 0.0
  %v503 = vadd.f32 %v491, 0.0
  %v504 = vadd.f32 %v492, 0.0
  %v505 = vadd.f32 %v493, 0.0
  %v506 = vadd.f32 %v494, 0.0
  %v507 = vadd.f32 %v495, 0.0
  %v508 = vadd.f32 %v496, 0.0
  %v509 = vadd.f32 %v497, 0.0
  %v510 = vadd.f32 %v498, 0.0
  %v511 = vadd.f32 %v499, 0.0
  %v512 = vadd.f32 %v500, 0.0
  %v513 = vadd.f32 %v501, 0.0
  %vm514 = vcmp.eq.s32.totalorder %v406, 1
  %vm515 = vcmp.eq.s32.totalorder %v407, 1
  %vm516 = vcmp.eq.s32.totalorder %v408, 1
  %vm517 = vcmp.eq.s32.totalorder %v409, 1
  %vm518 = vcmp.eq.s32.totalorder %v410, 1
  %vm519 = vcmp.eq.s32.totalorder %v411, 1
  %vm520 = vcmp.eq.s32.totalorder %v412, 1
  %vm521 = vcmp.eq.s32.totalorder %v413, 1
  %vm522 = vcmp.eq.s32.totalorder %v414, 1
  %vm523 = vcmp.eq.s32.totalorder %v415, 1
  %vm524 = vcmp.eq.s32.totalorder %v416, 1
  %vm525 = vcmp.eq.s32.totalorder %v417, 1
  %v526 = vsel %vm514, 1, 0
  %v527 = vsel %vm515, 1, 0
  %v528 = vsel %vm516, 1, 0
  %v529 = vsel %vm517, 1, 0
  %v530 = vsel %vm518, 1, 0
  %v531 = vsel %vm519, 1, 0
  %v532 = vsel %vm520, 1, 0
  %v533 = vsel %vm521, 1, 0
  %v534 = vsel %vm522, 1, 0
  %v535 = vsel %vm523, 1, 0
  %v536 = vsel %vm524, 1, 0
  %v537 = vsel %vm525, 1, 0
  %538 = vset.pattern.permute.xlu0 0
  %539 = vperm.xlu0 %538, %v526
  %v540 = vpop.permute.xlu0 %539
  %541 = vset.pattern.permute.xlu0 0
  %542 = vperm.xlu0 %541, %v527
  %v543 = vpop.permute.xlu0 %542
  %544 = vset.pattern.permute.xlu0 0
  %545 = vperm.xlu0 %544, %v528
  %v546 = vpop.permute.xlu0 %545
  %547 = vset.pattern.permute.xlu0 0
  %548 = vperm.xlu0 %547, %v529
  %v549 = vpop.permute.xlu0 %548
  %550 = vset.pattern.permute.xlu0 0
  %551 = vperm.xlu0 %550, %v530
  %v552 = vpop.permute.xlu0 %551
  %553 = vset.pattern.permute.xlu0 0
  %554 = vperm.xlu0 %553, %v531
  %v555 = vpop.permute.xlu0 %554
  %556 = vset.pattern.permute.xlu0 0
  %557 = vperm.xlu0 %556, %v532
  %v558 = vpop.permute.xlu0 %557
  %559 = vset.pattern.permute.xlu0 0
  %560 = vperm.xlu0 %559, %v533
  %v561 = vpop.permute.xlu0 %560
  %562 = vset.pattern.permute.xlu0 0
  %563 = vperm.xlu0 %562, %v534
  %v564 = vpop.permute.xlu0 %563
  %565 = vset.pattern.permute.xlu0 0
  %566 = vperm.xlu0 %565, %v535
  %v567 = vpop.permute.xlu0 %566
  %568 = vset.pattern.permute.xlu0 0
  %569 = vperm.xlu0 %568, %v536
  %v570 = vpop.permute.xlu0 %569
  %571 = vset.pattern.permute.xlu0 0
  %572 = vperm.xlu0 %571, %v537
  %v573 = vpop.permute.xlu0 %572
  %vm574 = vcmp.eq.s32.totalorder %v540, 1
  %vm575 = vcmp.eq.s32.totalorder %v543, 1
  %vm576 = vcmp.eq.s32.totalorder %v546, 1
  %vm577 = vcmp.eq.s32.totalorder %v549, 1
  %vm578 = vcmp.eq.s32.totalorder %v552, 1
  %vm579 = vcmp.eq.s32.totalorder %v555, 1
  %vm580 = vcmp.eq.s32.totalorder %v558, 1
  %vm581 = vcmp.eq.s32.totalorder %v561, 1
  %vm582 = vcmp.eq.s32.totalorder %v564, 1
  %vm583 = vcmp.eq.s32.totalorder %v567, 1
  %vm584 = vcmp.eq.s32.totalorder %v570, 1
  %vm585 = vcmp.eq.s32.totalorder %v573, 1
  %v586 = vsel %vm574, %v348, 0.0
  %v587 = vsel %vm575, %v353, 0.0
  %v588 = vsel %vm576, %v358, 0.0
  %v589 = vsel %vm577, %v363, 0.0
  %v590 = vsel %vm578, %v368, 0.0
  %v591 = vsel %vm579, %v373, 0.0
  %v592 = vsel %vm580, %v378, 0.0
  %v593 = vsel %vm581, %v383, 0.0
  %v594 = vsel %vm582, %v388, 0.0
  %v595 = vsel %vm583, %v393, 0.0
  %v596 = vsel %vm584, %v398, 0.0
  %v597 = vsel %vm585, %v403, 0.0
  %610 = vrot.lane.b32.xlu0 %v586, 96
  %v611 = vpop.permute.xlu0 %610
  %612 = vrot.lane.b32.xlu0 %v587, 96
  %v613 = vpop.permute.xlu0 %612
  %614 = vrot.lane.b32.xlu0 %v588, 96
  %v615 = vpop.permute.xlu0 %614
  %616 = vrot.lane.b32.xlu0 %v589, 96
  %v617 = vpop.permute.xlu0 %616
  %618 = vrot.lane.b32.xlu0 %v590, 96
  %v619 = vpop.permute.xlu0 %618
  %620 = vrot.lane.b32.xlu0 %v591, 96
  %v621 = vpop.permute.xlu0 %620
  %622 = vrot.lane.b32.xlu0 %v592, 96
  %v623 = vpop.permute.xlu0 %622
  %624 = vrot.lane.b32.xlu0 %v593, 96
  %v625 = vpop.permute.xlu0 %624
  %626 = vrot.lane.b32.xlu0 %v594, 96
  %v627 = vpop.permute.xlu0 %626
  %628 = vrot.lane.b32.xlu0 %v595, 96
  %v629 = vpop.permute.xlu0 %628
  %630 = vrot.lane.b32.xlu0 %v596, 96
  %v631 = vpop.permute.xlu0 %630
  %632 = vrot.lane.b32.xlu0 %v597, 96
  %v633 = vpop.permute.xlu0 %632
  %v646 = vadd.f32 %v502, %v611
  %v647 = vadd.f32 %v503, %v613
  %v648 = vadd.f32 %v504, %v615
  %v649 = vadd.f32 %v505, %v617
  %v650 = vadd.f32 %v506, %v619
  %v651 = vadd.f32 %v507, %v621
  %v652 = vadd.f32 %v508, %v623
  %v653 = vadd.f32 %v509, %v625
  %v654 = vadd.f32 %v510, %v627
  %v655 = vadd.f32 %v511, %v629
  %v656 = vadd.f32 %v512, %v631
  %v657 = vadd.f32 %v513, %v633
  %v658 = vld [vmem:[%s2] sm:$0xff]
  %v659 = vld [vmem:[%s2 + $0x8] sm:$0xff]
  %v660 = vld [vmem:[%s2 + $0x10] sm:$0xff]
  %v661 = vld [vmem:[%s2 + $0x18] sm:$0xff]
  %v662 = vld [vmem:[%s2 + $0x20] sm:$0xff]
  %v663 = vld [vmem:[%s2 + $0x28] sm:$0xff]
  %v664 = vld [vmem:[%s2 + $0x30] sm:$0xff]
  %v665 = vld [vmem:[%s2 + $0x38] sm:$0xff]
  %v666 = vld [vmem:[%s2 + $0x40] sm:$0xff]
  %v667 = vld [vmem:[%s2 + $0x48] sm:$0xff]
  %v668 = vld [vmem:[%s2 + $0x50] sm:$0xff]
  %v669 = vld [vmem:[%s2 + $0x58] sm:$0xff]
  %v670 = vld [vmem:[%s2 + $0x60] sm:$0xff]
  %v671 = vld [vmem:[%s2 + $0x68] sm:$0xff]
  %v672 = vld [vmem:[%s2 + $0x70] sm:$0xff]
  %v673 = vld [vmem:[%s2 + $0x78] sm:$0xff]
  %v674 = vld [vmem:[%s2 + $0x80] sm:$0xff]
  %v675 = vld [vmem:[%s2 + $0x88] sm:$0xff]
  %v676 = vld [vmem:[%s2 + $0x90] sm:$0xff]
  %v677 = vld [vmem:[%s2 + $0x98] sm:$0xff]
  %v678 = vld [vmem:[%s2 + $0xa0] sm:$0xff]
  %v679 = vld [vmem:[%s2 + $0xa8] sm:$0xff]
  %v680 = vld [vmem:[%s2 + $0xb0] sm:$0xff]
  %v681 = vld [vmem:[%s2 + $0xb8] sm:$0xff]
  %v682 = vlaneseq
  %v683 = vand.u32 %v682, 127
  %684 = vset.pattern.permute.xlu0 0
  %685 = vperm.xlu0 %684, %v658
  %v686 = vpop.permute.xlu0 %685
  %687 = vset.pattern.permute.xlu0 0
  %688 = vperm.xlu0 %687, %v659
  %v689 = vpop.permute.xlu0 %688
  %690 = vset.pattern.permute.xlu0 0
  %691 = vperm.xlu0 %690, %v660
  %v692 = vpop.permute.xlu0 %691
  %693 = vset.pattern.permute.xlu0 0
  %694 = vperm.xlu0 %693, %v661
  %v695 = vpop.permute.xlu0 %694
  %696 = vset.pattern.permute.xlu0 0
  %697 = vperm.xlu0 %696, %v662
  %v698 = vpop.permute.xlu0 %697
  %699 = vset.pattern.permute.xlu0 0
  %700 = vperm.xlu0 %699, %v663
  %v701 = vpop.permute.xlu0 %700
  %702 = vset.pattern.permute.xlu0 0
  %703 = vperm.xlu0 %702, %v664
  %v704 = vpop.permute.xlu0 %703
  %705 = vset.pattern.permute.xlu0 0
  %706 = vperm.xlu0 %705, %v665
  %v707 = vpop.permute.xlu0 %706
  %708 = vset.pattern.permute.xlu0 0
  %709 = vperm.xlu0 %708, %v666
  %v710 = vpop.permute.xlu0 %709
  %711 = vset.pattern.permute.xlu0 0
  %712 = vperm.xlu0 %711, %v667
  %v713 = vpop.permute.xlu0 %712
  %714 = vset.pattern.permute.xlu0 0
  %715 = vperm.xlu0 %714, %v668
  %v716 = vpop.permute.xlu0 %715
  %717 = vset.pattern.permute.xlu0 0
  %718 = vperm.xlu0 %717, %v669
  %v719 = vpop.permute.xlu0 %718
  %720 = vset.pattern.permute.xlu0 0
  %721 = vperm.xlu0 %720, %v670
  %v722 = vpop.permute.xlu0 %721
  %723 = vset.pattern.permute.xlu0 0
  %724 = vperm.xlu0 %723, %v671
  %v725 = vpop.permute.xlu0 %724
  %726 = vset.pattern.permute.xlu0 0
  %727 = vperm.xlu0 %726, %v672
  %v728 = vpop.permute.xlu0 %727
  %729 = vset.pattern.permute.xlu0 0
  %730 = vperm.xlu0 %729, %v673
  %v731 = vpop.permute.xlu0 %730
  %732 = vset.pattern.permute.xlu0 0
  %733 = vperm.xlu0 %732, %v674
  %v734 = vpop.permute.xlu0 %733
  %735 = vset.pattern.permute.xlu0 0
  %736 = vperm.xlu0 %735, %v675
  %v737 = vpop.permute.xlu0 %736
  %738 = vset.pattern.permute.xlu0 0
  %739 = vperm.xlu0 %738, %v676
  %v740 = vpop.permute.xlu0 %739
  %741 = vset.pattern.permute.xlu0 0
  %742 = vperm.xlu0 %741, %v677
  %v743 = vpop.permute.xlu0 %742
  %744 = vset.pattern.permute.xlu0 0
  %745 = vperm.xlu0 %744, %v678
  %v746 = vpop.permute.xlu0 %745
  %747 = vset.pattern.permute.xlu0 0
  %748 = vperm.xlu0 %747, %v679
  %v749 = vpop.permute.xlu0 %748
  %750 = vset.pattern.permute.xlu0 0
  %751 = vperm.xlu0 %750, %v680
  %v752 = vpop.permute.xlu0 %751
  %753 = vset.pattern.permute.xlu0 0
  %754 = vperm.xlu0 %753, %v681
  %v755 = vpop.permute.xlu0 %754
  %vm756 = vcmp.eq.s32.totalorder %v686, %v683
  %vm757 = vcmp.eq.s32.totalorder %v689, %v683
  %vm758 = vcmp.eq.s32.totalorder %v692, %v683
  %vm759 = vcmp.eq.s32.totalorder %v695, %v683
  %vm760 = vcmp.eq.s32.totalorder %v698, %v683
  %vm761 = vcmp.eq.s32.totalorder %v701, %v683
  %vm762 = vcmp.eq.s32.totalorder %v704, %v683
  %vm763 = vcmp.eq.s32.totalorder %v707, %v683
  %vm764 = vcmp.eq.s32.totalorder %v710, %v683
  %vm765 = vcmp.eq.s32.totalorder %v713, %v683
  %vm766 = vcmp.eq.s32.totalorder %v716, %v683
  %vm767 = vcmp.eq.s32.totalorder %v719, %v683
  %vm768 = vcmp.eq.s32.totalorder %v722, %v683
  %vm769 = vcmp.eq.s32.totalorder %v725, %v683
  %vm770 = vcmp.eq.s32.totalorder %v728, %v683
  %vm771 = vcmp.eq.s32.totalorder %v731, %v683
  %vm772 = vcmp.eq.s32.totalorder %v734, %v683
  %vm773 = vcmp.eq.s32.totalorder %v737, %v683
  %vm774 = vcmp.eq.s32.totalorder %v740, %v683
  %vm775 = vcmp.eq.s32.totalorder %v743, %v683
  %vm776 = vcmp.eq.s32.totalorder %v746, %v683
  %vm777 = vcmp.eq.s32.totalorder %v749, %v683
  %vm778 = vcmp.eq.s32.totalorder %v752, %v683
  %vm779 = vcmp.eq.s32.totalorder %v755, %v683
  %v780 = vsel %vm756, 1, 0
  %v781 = vsel %vm757, 1, 0
  %v782 = vsel %vm758, 1, 0
  %v783 = vsel %vm759, 1, 0
  %v784 = vsel %vm760, 1, 0
  %v785 = vsel %vm761, 1, 0
  %v786 = vsel %vm762, 1, 0
  %v787 = vsel %vm763, 1, 0
  %v788 = vsel %vm764, 1, 0
  %v789 = vsel %vm765, 1, 0
  %v790 = vsel %vm766, 1, 0
  %v791 = vsel %vm767, 1, 0
  %v792 = vsel %vm768, 1, 0
  %v793 = vsel %vm769, 1, 0
  %v794 = vsel %vm770, 1, 0
  %v795 = vsel %vm771, 1, 0
  %v796 = vsel %vm772, 1, 0
  %v797 = vsel %vm773, 1, 0
  %v798 = vsel %vm774, 1, 0
  %v799 = vsel %vm775, 1, 0
  %v800 = vsel %vm776, 1, 0
  %v801 = vsel %vm777, 1, 0
  %v802 = vsel %vm778, 1, 0
  %v803 = vsel %vm779, 1, 0
  %v804 = vcvt.s32.f32 %v780
  %v805 = vcvt.s32.f32 %v781
  %v806 = vcvt.s32.f32 %v782
  %v807 = vcvt.s32.f32 %v783
  %v808 = vcvt.s32.f32 %v784
  %v809 = vcvt.s32.f32 %v785
  %v810 = vcvt.s32.f32 %v786
  %v811 = vcvt.s32.f32 %v787
  %v812 = vcvt.s32.f32 %v788
  %v813 = vcvt.s32.f32 %v789
  %v814 = vcvt.s32.f32 %v790
  %v815 = vcvt.s32.f32 %v791
  %v816 = vcvt.s32.f32 %v792
  %v817 = vcvt.s32.f32 %v793
  %v818 = vcvt.s32.f32 %v794
  %v819 = vcvt.s32.f32 %v795
  %v820 = vcvt.s32.f32 %v796
  %v821 = vcvt.s32.f32 %v797
  %v822 = vcvt.s32.f32 %v798
  %v823 = vcvt.s32.f32 %v799
  %v824 = vcvt.s32.f32 %v800
  %v825 = vcvt.s32.f32 %v801
  %v826 = vcvt.s32.f32 %v802
  %v827 = vcvt.s32.f32 %v803
  %v828 = vld [vmem:[%s3] sm:$0x3]
  %v829 = vlaneseq
  %v830 = vshrl.u32 %v829, 7
  %v831 = vadd.s32 %v830, 8
  %v832 = vadd.s32 %v830, 16
  %v833 = vadd.s32 %v830, 24
  %v834 = vadd.s32 %v830, 32
  %v835 = vadd.s32 %v830, 40
  %v836 = vadd.s32 %v830, 48
  %v837 = vadd.s32 %v830, 56
  %v838 = vadd.s32 %v830, 64
  %v839 = vadd.s32 %v830, 72
  %v840 = vadd.s32 %v830, 80
  %v841 = vadd.s32 %v830, 88
  %v842 = vlaneseq
  %v843 = vshrl.u32 %v842, 7
  %v844 = vsub.s32 0, %v843
  %v845 = vrot.slane %v828, %v844
  %v846 = vlaneseq
  %v847 = vshrl.u32 %v846, 7
  %v848 = vsub.s32 1, %v847
  %v849 = vrot.slane %v828, %v848
  %vm850 = vcmp.eq.s32.totalorder %v830, %v845
  %vm851 = vcmp.eq.s32.totalorder %v830, %v849
  %vm852 = vcmp.eq.s32.totalorder %v831, %v845
  %vm853 = vcmp.eq.s32.totalorder %v831, %v849
  %vm854 = vcmp.eq.s32.totalorder %v832, %v845
  %vm855 = vcmp.eq.s32.totalorder %v832, %v849
  %vm856 = vcmp.eq.s32.totalorder %v833, %v845
  %vm857 = vcmp.eq.s32.totalorder %v833, %v849
  %vm858 = vcmp.eq.s32.totalorder %v834, %v845
  %vm859 = vcmp.eq.s32.totalorder %v834, %v849
  %vm860 = vcmp.eq.s32.totalorder %v835, %v845
  %vm861 = vcmp.eq.s32.totalorder %v835, %v849
  %vm862 = vcmp.eq.s32.totalorder %v836, %v845
  %vm863 = vcmp.eq.s32.totalorder %v836, %v849
  %vm864 = vcmp.eq.s32.totalorder %v837, %v845
  %vm865 = vcmp.eq.s32.totalorder %v837, %v849
  %vm866 = vcmp.eq.s32.totalorder %v838, %v845
  %vm867 = vcmp.eq.s32.totalorder %v838, %v849
  %vm868 = vcmp.eq.s32.totalorder %v839, %v845
  %vm869 = vcmp.eq.s32.totalorder %v839, %v849
  %vm870 = vcmp.eq.s32.totalorder %v840, %v845
  %vm871 = vcmp.eq.s32.totalorder %v840, %v849
  %vm872 = vcmp.eq.s32.totalorder %v841, %v845
  %vm873 = vcmp.eq.s32.totalorder %v841, %v849
  %v874 = vsel %vm850, 1, 0
  %v875 = vsel %vm851, 1, 0
  %v876 = vsel %vm852, 1, 0
  %v877 = vsel %vm853, 1, 0
  %v878 = vsel %vm854, 1, 0
  %v879 = vsel %vm855, 1, 0
  %v880 = vsel %vm856, 1, 0
  %v881 = vsel %vm857, 1, 0
  %v882 = vsel %vm858, 1, 0
  %v883 = vsel %vm859, 1, 0
  %v884 = vsel %vm860, 1, 0
  %v885 = vsel %vm861, 1, 0
  %v886 = vsel %vm862, 1, 0
  %v887 = vsel %vm863, 1, 0
  %v888 = vsel %vm864, 1, 0
  %v889 = vsel %vm865, 1, 0
  %v890 = vsel %vm866, 1, 0
  %v891 = vsel %vm867, 1, 0
  %v892 = vsel %vm868, 1, 0
  %v893 = vsel %vm869, 1, 0
  %v894 = vsel %vm870, 1, 0
  %v895 = vsel %vm871, 1, 0
  %v896 = vsel %vm872, 1, 0
  %v897 = vsel %vm873, 1, 0
  %v898 = vcvt.s32.f32 %v874
  %v899 = vcvt.s32.f32 %v875
  %v900 = vcvt.s32.f32 %v876
  %v901 = vcvt.s32.f32 %v877
  %v902 = vcvt.s32.f32 %v878
  %v903 = vcvt.s32.f32 %v879
  %v904 = vcvt.s32.f32 %v880
  %v905 = vcvt.s32.f32 %v881
  %v906 = vcvt.s32.f32 %v882
  %v907 = vcvt.s32.f32 %v883
  %v908 = vcvt.s32.f32 %v884
  %v909 = vcvt.s32.f32 %v885
  %v910 = vcvt.s32.f32 %v886
  %v911 = vcvt.s32.f32 %v887
  %v912 = vcvt.s32.f32 %v888
  %v913 = vcvt.s32.f32 %v889
  %v914 = vcvt.s32.f32 %v890
  %v915 = vcvt.s32.f32 %v891
  %v916 = vcvt.s32.f32 %v892
  %v917 = vcvt.s32.f32 %v893
  %v918 = vcvt.s32.f32 %v894
  %v919 = vcvt.s32.f32 %v895
  %v920 = vcvt.s32.f32 %v896
  %v921 = vcvt.s32.f32 %v897
  %vm922 = vcmask 785408
  %v924 = vsel %vm922, %v804, 0
  %v927 = vsel %vm922, %v805, 0
  %v930 = vsel %vm922, %v806, 0
  %v933 = vsel %vm922, %v807, 0
  %v936 = vsel %vm922, %v808, 0
  %v939 = vsel %vm922, %v809, 0
  %v942 = vsel %vm922, %v810, 0
  %v945 = vsel %vm922, %v811, 0
  %v948 = vsel %vm922, %v812, 0
  %v951 = vsel %vm922, %v813, 0
  %v954 = vsel %vm922, %v814, 0
  %v957 = vsel %vm922, %v815, 0
  %v960 = vsel %vm922, %v816, 0
  %v963 = vsel %vm922, %v817, 0
  %v966 = vsel %vm922, %v818, 0
  %v969 = vsel %vm922, %v819, 0
  %v972 = vsel %vm922, %v820, 0
  %v975 = vsel %vm922, %v821, 0
  %v978 = vsel %vm922, %v822, 0
  %v981 = vsel %vm922, %v823, 0
  %v984 = vsel %vm922, %v824, 0
  %v987 = vsel %vm922, %v825, 0
  %v990 = vsel %vm922, %v826, 0
  %v993 = vsel %vm922, %v827, 0
  %995 = vmatprep.subr.mxu0 0.0
  %996 = vmatpush1.msra.mxu0 %v646
  %997 = vmatprep.subr.mxu0 0.0
  %998 = vmatpush1.msra.mxu0 %v647
  %999 = vmatprep.subr.mxu0 0.0
  %1000 = vmatpush1.msra.mxu0 %v648
  %1001 = vmatprep.subr.mxu0 0.0
  %1002 = vmatpush1.msra.mxu0 %v649
  %1003 = vmatprep.subr.mxu0 0.0
  %1004 = vmatpush1.msra.mxu0 %v650
  %1005 = vmatprep.subr.mxu0 0.0
  %1006 = vmatpush1.msra.mxu0 %v651
  %1007 = vmatprep.subr.mxu0 0.0
  %1008 = vmatpush1.msra.mxu0 %v652
  %1009 = vmatprep.subr.mxu0 0.0
  %1010 = vmatpush1.msra.mxu0 %v653
  %1011 = vmatprep.subr.mxu0 0.0
  %1012 = vmatpush1.msra.mxu0 %v654
  %1013 = vmatprep.subr.mxu0 0.0
  %1014 = vmatpush1.msra.mxu0 %v655
  %1015 = vmatprep.subr.mxu0 0.0
  %1016 = vmatpush1.msra.mxu0 %v656
  %1017 = vmatprep.subr.mxu0 0.0
  %1018 = vmatpush1.msra.mxu0 %v657
  %1019 = vmatprep.subr.mxu0 0.0
  %1020 = vmatpush1.msra.mxu0 0.0
  %1021 = vmatprep.subr.mxu0 0.0
  %1022 = vmatpush1.msra.mxu0 0.0
  %1023 = vmatprep.subr.mxu0 0.0
  %1024 = vmatpush1.msra.mxu0 0.0
  %1025 = vmatprep.subr.mxu0 0.0
  %1026 = vmatpush1.msra.mxu0 0.0
  %1027 = vmatprep.subr.mxu0 0.0
  %1028 = vmatpush1.msra.mxu0 0.0
  %1029 = vmatprep.subr.mxu0 0.0
  %1030 = vmatpush1.msra.mxu0 0.0
  %1031 = vmatprep.subr.mxu0 0.0
  %1032 = vmatpush1.msra.mxu0 0.0
  %1033 = vmatprep.subr.mxu0 0.0
  %1034 = vmatpush1.msra.mxu0 0.0
  %1035 = vmatprep.subr.mxu0 0.0
  %1036 = vmatpush1.msra.mxu0 0.0
  %1037 = vmatprep.subr.mxu0 0.0
  %1038 = vmatpush1.msra.mxu0 0.0
  %1039 = vmatprep.subr.mxu0 0.0
  %1040 = vmatpush1.msra.mxu0 0.0
  %1041 = vmatprep.subr.mxu0 0.0
  %1042 = vmatpush1.msra.mxu0 0.0
  %1043 = vmatprep.subr.mxu0 0.0
  %1044 = vmatpush1.msra.mxu0 0.0
  %1045 = vmatprep.subr.mxu0 0.0
  %1046 = vmatpush1.msra.mxu0 0.0
  %1047 = vmatprep.subr.mxu0 0.0
  %1048 = vmatpush1.msra.mxu0 0.0
  %1049 = vmatprep.subr.mxu0 0.0
  %1050 = vmatpush1.msra.mxu0 0.0
  %1051 = vmatprep.subr.mxu0 0.0
  %1052 = vmatpush1.msra.mxu0 0.0
  %1053 = vmatprep.subr.mxu0 0.0
  %1054 = vmatpush1.msra.mxu0 0.0
  %1055 = vmatprep.subr.mxu0 0.0
  %1056 = vmatpush1.msra.mxu0 0.0
  %1057 = vmatprep.subr.mxu0 0.0
  %1058 = vmatpush1.msra.mxu0 0.0
  %1059 = vmatprep.mubr.f32.mxu0 0.0
  %1060 = vmatmul.mubr.f32.gmra.mrb[0].mxu0 %v924
  %v1061 = vpop.f32.mrb[0].mxu0
  %v1062 = vadd.f32 0.0, %v1061
  %v1063 = vpop.f32.mrb[0].mxu0
  %1064 = vmatprep.mubr.f32.mxu0 0.0
  %1065 = vmatmul.mubr.f32.gmra.mrb[0].mxu0 %v927
  %v1066 = vpop.f32.mrb[0].mxu0
  %v1067 = vadd.f32 0.0, %v1066
  %v1068 = vpop.f32.mrb[0].mxu0
  %1069 = vmatprep.mubr.f32.mxu0 0.0
  %1070 = vmatmul.mubr.f32.gmra.mrb[0].mxu0 %v930
  %v1071 = vpop.f32.mrb[0].mxu0
  %v1072 = vadd.f32 0.0, %v1071
  %v1073 = vpop.f32.mrb[0].mxu0
  %1074 = vmatprep.mubr.f32.mxu0 0.0
  %1075 = vmatmul.mubr.f32.gmra.mrb[0].mxu0 %v933
  %v1076 = vpop.f32.mrb[0].mxu0
  %v1077 = vadd.f32 0.0, %v1076
  %v1078 = vpop.f32.mrb[0].mxu0
  %1079 = vmatprep.mubr.f32.mxu0 0.0
  %1080 = vmatmul.mubr.f32.gmra.mrb[0].mxu0 %v936
  %v1081 = vpop.f32.mrb[0].mxu0
  %v1082 = vadd.f32 0.0, %v1081
  %v1083 = vpop.f32.mrb[0].mxu0
  %1084 = vmatprep.mubr.f32.mxu0 0.0
  %1085 = vmatmul.mubr.f32.gmra.mrb[0].mxu0 %v939
  %v1086 = vpop.f32.mrb[0].mxu0
  %v1087 = vadd.f32 0.0, %v1086
  %v1088 = vpop.f32.mrb[0].mxu0
  %1089 = vmatprep.mubr.f32.mxu0 0.0
  %1090 = vmatmul.mubr.f32.gmra.mrb[0].mxu0 %v942
  %v1091 = vpop.f32.mrb[0].mxu0
  %v1092 = vadd.f32 0.0, %v1091
  %v1093 = vpop.f32.mrb[0].mxu0
  %1094 = vmatprep.mubr.f32.mxu0 0.0
  %1095 = vmatmul.mubr.f32.gmra.mrb[0].mxu0 %v945
  %v1096 = vpop.f32.mrb[0].mxu0
  %v1097 = vadd.f32 0.0, %v1096
  %v1098 = vpop.f32.mrb[0].mxu0
  %1099 = vmatprep.mubr.f32.mxu0 0.0
  %1100 = vmatmul.mubr.f32.gmra.mrb[0].mxu0 %v948
  %v1101 = vpop.f32.mrb[0].mxu0
  %v1102 = vadd.f32 0.0, %v1101
  %v1103 = vpop.f32.mrb[0].mxu0
  %1104 = vmatprep.mubr.f32.mxu0 0.0
  %1105 = vmatmul.mubr.f32.gmra.mrb[0].mxu0 %v951
  %v1106 = vpop.f32.mrb[0].mxu0
  %v1107 = vadd.f32 0.0, %v1106
  %v1108 = vpop.f32.mrb[0].mxu0
  %1109 = vmatprep.mubr.f32.mxu0 0.0
  %1110 = vmatmul.mubr.f32.gmra.mrb[0].mxu0 %v954
  %v1111 = vpop.f32.mrb[0].mxu0
  %v1112 = vadd.f32 0.0, %v1111
  %v1113 = vpop.f32.mrb[0].mxu0
  %1114 = vmatprep.mubr.f32.mxu0 0.0
  %1115 = vmatmul.mubr.f32.gmra.mrb[0].mxu0 %v957
  %v1116 = vpop.f32.mrb[0].mxu0
  %v1117 = vadd.f32 0.0, %v1116
  %v1118 = vpop.f32.mrb[0].mxu0
  %1119 = vmatprep.mubr.f32.mxu0 0.0
  %1120 = vmatmul.mubr.f32.gmra.mrb[0].mxu0 %v960
  %v1121 = vpop.f32.mrb[0].mxu0
  %v1122 = vadd.f32 0.0, %v1121
  %v1123 = vpop.f32.mrb[0].mxu0
  %1124 = vmatprep.mubr.f32.mxu0 0.0
  %1125 = vmatmul.mubr.f32.gmra.mrb[0].mxu0 %v963
  %v1126 = vpop.f32.mrb[0].mxu0
  %v1127 = vadd.f32 0.0, %v1126
  %v1128 = vpop.f32.mrb[0].mxu0
  %1129 = vmatprep.mubr.f32.mxu0 0.0
  %1130 = vmatmul.mubr.f32.gmra.mrb[0].mxu0 %v966
  %v1131 = vpop.f32.mrb[0].mxu0
  %v1132 = vadd.f32 0.0, %v1131
  %v1133 = vpop.f32.mrb[0].mxu0
  %1134 = vmatprep.mubr.f32.mxu0 0.0
  %1135 = vmatmul.mubr.f32.gmra.mrb[0].mxu0 %v969
  %v1136 = vpop.f32.mrb[0].mxu0
  %v1137 = vadd.f32 0.0, %v1136
  %v1138 = vpop.f32.mrb[0].mxu0
  %1139 = vmatprep.mubr.f32.mxu0 0.0
  %1140 = vmatmul.mubr.f32.gmra.mrb[0].mxu0 %v972
  %v1141 = vpop.f32.mrb[0].mxu0
  %v1142 = vadd.f32 0.0, %v1141
  %v1143 = vpop.f32.mrb[0].mxu0
  %1144 = vmatprep.mubr.f32.mxu0 0.0
  %1145 = vmatmul.mubr.f32.gmra.mrb[0].mxu0 %v975
  %v1146 = vpop.f32.mrb[0].mxu0
  %v1147 = vadd.f32 0.0, %v1146
  %v1148 = vpop.f32.mrb[0].mxu0
  %1149 = vmatprep.mubr.f32.mxu0 0.0
  %1150 = vmatmul.mubr.f32.gmra.mrb[0].mxu0 %v978
  %v1151 = vpop.f32.mrb[0].mxu0
  %v1152 = vadd.f32 0.0, %v1151
  %v1153 = vpop.f32.mrb[0].mxu0
  %1154 = vmatprep.mubr.f32.mxu0 0.0
  %1155 = vmatmul.mubr.f32.gmra.mrb[0].mxu0 %v981
  %v1156 = vpop.f32.mrb[0].mxu0
  %v1157 = vadd.f32 0.0, %v1156
  %v1158 = vpop.f32.mrb[0].mxu0
  %1159 = vmatprep.mubr.f32.mxu0 0.0
  %1160 = vmatmul.mubr.f32.gmra.mrb[0].mxu0 %v984
  %v1161 = vpop.f32.mrb[0].mxu0
  %v1162 = vadd.f32 0.0, %v1161
  %v1163 = vpop.f32.mrb[0].mxu0
  %1164 = vmatprep.mubr.f32.mxu0 0.0
  %1165 = vmatmul.mubr.f32.gmra.mrb[0].mxu0 %v987
  %v1166 = vpop.f32.mrb[0].mxu0
  %v1167 = vadd.f32 0.0, %v1166
  %v1168 = vpop.f32.mrb[0].mxu0
  %1169 = vmatprep.mubr.f32.mxu0 0.0
  %1170 = vmatmul.mubr.f32.gmra.mrb[0].mxu0 %v990
  %v1171 = vpop.f32.mrb[0].mxu0
  %v1172 = vadd.f32 0.0, %v1171
  %v1173 = vpop.f32.mrb[0].mxu0
  %1174 = vmatprep.mubr.f32.mxu0 0.0
  %1175 = vmatmul.mubr.f32.gmra.mrb[0].mxu0 %v993
  %v1176 = vpop.f32.mrb[0].mxu0
  %v1177 = vadd.f32 0.0, %v1176
  %v1178 = vpop.f32.mrb[0].mxu0
  %1179 = vdwg.mxu0
  %v1180 = vld [vmem:[%s13] sm:$0xff]
  %v1181 = vld [vmem:[%s13 + $0x8] sm:$0xff]
  %v1182 = vld [vmem:[%s13 + $0x10] sm:$0xff]
  %v1183 = vld [vmem:[%s13 + $0x18] sm:$0xff]
  %v1185 = vsel %vm244, %v1062, 0
  %v1188 = vsel %vm244, %v1067, 0
  %v1191 = vsel %vm244, %v1072, 0
  %v1194 = vsel %vm244, %v1077, 0
  %v1197 = vsel %vm244, %v1082, 0
  %v1200 = vsel %vm244, %v1087, 0
  %v1203 = vsel %vm244, %v1092, 0
  %v1206 = vsel %vm244, %v1097, 0
  %v1209 = vsel %vm244, %v1102, 0
  %v1212 = vsel %vm244, %v1107, 0
  %v1215 = vsel %vm244, %v1112, 0
  %v1218 = vsel %vm244, %v1117, 0
  %v1221 = vsel %vm244, %v1122, 0
  %v1224 = vsel %vm244, %v1127, 0
  %v1227 = vsel %vm244, %v1132, 0
  %v1230 = vsel %vm244, %v1137, 0
  %v1233 = vsel %vm244, %v1142, 0
  %v1236 = vsel %vm244, %v1147, 0
  %v1239 = vsel %vm244, %v1152, 0
  %v1242 = vsel %vm244, %v1157, 0
  %v1245 = vsel %vm244, %v1162, 0
  %v1248 = vsel %vm244, %v1167, 0
  %v1251 = vsel %vm244, %v1172, 0
  %v1254 = vsel %vm244, %v1177, 0
  %1256 = vmatprep.subr.mxu0 0.0
  %1257 = vmatpush1.msra.mxu0 %v1180
  %1258 = vmatprep.subr.mxu0 0.0
  %1259 = vmatpush1.msra.mxu0 %v1181
  %1260 = vmatprep.subr.mxu0 0.0
  %1261 = vmatpush1.msra.mxu0 %v1182
  %1262 = vmatprep.subr.mxu0 0.0
  %1263 = vmatpush1.msra.mxu0 %v1183
  %1264 = vmatprep.subr.mxu0 0.0
  %1265 = vmatpush1.msra.mxu0 0.0
  %1266 = vmatprep.subr.mxu0 0.0
  %1267 = vmatpush1.msra.mxu0 0.0
  %1268 = vmatprep.subr.mxu0 0.0
  %1269 = vmatpush1.msra.mxu0 0.0
  %1270 = vmatprep.subr.mxu0 0.0
  %1271 = vmatpush1.msra.mxu0 0.0
  %1272 = vmatprep.subr.mxu0 0.0
  %1273 = vmatpush1.msra.mxu0 0.0
  %1274 = vmatprep.subr.mxu0 0.0
  %1275 = vmatpush1.msra.mxu0 0.0
  %1276 = vmatprep.subr.mxu0 0.0
  %1277 = vmatpush1.msra.mxu0 0.0
  %1278 = vmatprep.subr.mxu0 0.0
  %1279 = vmatpush1.msra.mxu0 0.0
  %1280 = vmatprep.subr.mxu0 0.0
  %1281 = vmatpush1.msra.mxu0 0.0
  %1282 = vmatprep.subr.mxu0 0.0
  %1283 = vmatpush1.msra.mxu0 0.0
  %1284 = vmatprep.subr.mxu0 0.0
  %1285 = vmatpush1.msra.mxu0 0.0
  %1286 = vmatprep.subr.mxu0 0.0
  %1287 = vmatpush1.msra.mxu0 0.0
  %1288 = vmatprep.subr.mxu0 0.0
  %1289 = vmatpush1.msra.mxu0 0.0
  %1290 = vmatprep.subr.mxu0 0.0
  %1291 = vmatpush1.msra.mxu0 0.0
  %1292 = vmatprep.subr.mxu0 0.0
  %1293 = vmatpush1.msra.mxu0 0.0
  %1294 = vmatprep.subr.mxu0 0.0
  %1295 = vmatpush1.msra.mxu0 0.0
  %1296 = vmatprep.subr.mxu0 0.0
  %1297 = vmatpush1.msra.mxu0 0.0
  %1298 = vmatprep.subr.mxu0 0.0
  %1299 = vmatpush1.msra.mxu0 0.0
  %1300 = vmatprep.subr.mxu0 0.0
  %1301 = vmatpush1.msra.mxu0 0.0
  %1302 = vmatprep.subr.mxu0 0.0
  %1303 = vmatpush1.msra.mxu0 0.0
  %1304 = vmatprep.subr.mxu0 0.0
  %1305 = vmatpush1.msra.mxu0 0.0
  %1306 = vmatprep.subr.mxu0 0.0
  %1307 = vmatpush1.msra.mxu0 0.0
  %1308 = vmatprep.subr.mxu0 0.0
  %1309 = vmatpush1.msra.mxu0 0.0
  %1310 = vmatprep.subr.mxu0 0.0
  %1311 = vmatpush1.msra.mxu0 0.0
  %1312 = vmatprep.subr.mxu0 0.0
  %1313 = vmatpush1.msra.mxu0 0.0
  %1314 = vmatprep.subr.mxu0 0.0
  %1315 = vmatpush1.msra.mxu0 0.0
  %1316 = vmatprep.subr.mxu0 0.0
  %1317 = vmatpush1.msra.mxu0 0.0
  %1318 = vmatprep.subr.mxu0 0.0
  %1319 = vmatpush1.msra.mxu0 0.0
  %1320 = vmatprep.mubr.f32.mxu0 0.0
  %1321 = vmatmul.mubr.f32.gmra.mrb[0].mxu0 %v1185
  %v1322 = vpop.f32.mrb[0].mxu0
  %v1323 = vadd.f32 0.0, %v1322
  %v1324 = vpop.f32.mrb[0].mxu0
  %1325 = vmatprep.mubr.f32.mxu0 0.0
  %1326 = vmatmul.mubr.f32.gmra.mrb[0].mxu0 %v1188
  %v1327 = vpop.f32.mrb[0].mxu0
  %v1328 = vadd.f32 0.0, %v1327
  %v1329 = vpop.f32.mrb[0].mxu0
  %1330 = vmatprep.mubr.f32.mxu0 0.0
  %1331 = vmatmul.mubr.f32.gmra.mrb[0].mxu0 %v1191
  %v1332 = vpop.f32.mrb[0].mxu0
  %v1333 = vadd.f32 0.0, %v1332
  %v1334 = vpop.f32.mrb[0].mxu0
  %1335 = vmatprep.mubr.f32.mxu0 0.0
  %1336 = vmatmul.mubr.f32.gmra.mrb[0].mxu0 %v1194
  %v1337 = vpop.f32.mrb[0].mxu0
  %v1338 = vadd.f32 0.0, %v1337
  %v1339 = vpop.f32.mrb[0].mxu0
  %1340 = vmatprep.mubr.f32.mxu0 0.0
  %1341 = vmatmul.mubr.f32.gmra.mrb[0].mxu0 %v1197
  %v1342 = vpop.f32.mrb[0].mxu0
  %v1343 = vadd.f32 0.0, %v1342
  %v1344 = vpop.f32.mrb[0].mxu0
  %1345 = vmatprep.mubr.f32.mxu0 0.0
  %1346 = vmatmul.mubr.f32.gmra.mrb[0].mxu0 %v1200
  %v1347 = vpop.f32.mrb[0].mxu0
  %v1348 = vadd.f32 0.0, %v1347
  %v1349 = vpop.f32.mrb[0].mxu0
  %1350 = vmatprep.mubr.f32.mxu0 0.0
  %1351 = vmatmul.mubr.f32.gmra.mrb[0].mxu0 %v1203
  %v1352 = vpop.f32.mrb[0].mxu0
  %v1353 = vadd.f32 0.0, %v1352
  %v1354 = vpop.f32.mrb[0].mxu0
  %1355 = vmatprep.mubr.f32.mxu0 0.0
  %1356 = vmatmul.mubr.f32.gmra.mrb[0].mxu0 %v1206
  %v1357 = vpop.f32.mrb[0].mxu0
  %v1358 = vadd.f32 0.0, %v1357
  %v1359 = vpop.f32.mrb[0].mxu0
  %1360 = vmatprep.mubr.f32.mxu0 0.0
  %1361 = vmatmul.mubr.f32.gmra.mrb[0].mxu0 %v1209
  %v1362 = vpop.f32.mrb[0].mxu0
  %v1363 = vadd.f32 0.0, %v1362
  %v1364 = vpop.f32.mrb[0].mxu0
  %1365 = vmatprep.mubr.f32.mxu0 0.0
  %1366 = vmatmul.mubr.f32.gmra.mrb[0].mxu0 %v1212
  %v1367 = vpop.f32.mrb[0].mxu0
  %v1368 = vadd.f32 0.0, %v1367
  %v1369 = vpop.f32.mrb[0].mxu0
  %1370 = vmatprep.mubr.f32.mxu0 0.0
  %1371 = vmatmul.mubr.f32.gmra.mrb[0].mxu0 %v1215
  %v1372 = vpop.f32.mrb[0].mxu0
  %v1373 = vadd.f32 0.0, %v1372
  %v1374 = vpop.f32.mrb[0].mxu0
  %1375 = vmatprep.mubr.f32.mxu0 0.0
  %1376 = vmatmul.mubr.f32.gmra.mrb[0].mxu0 %v1218
  %v1377 = vpop.f32.mrb[0].mxu0
  %v1378 = vadd.f32 0.0, %v1377
  %v1379 = vpop.f32.mrb[0].mxu0
  %1380 = vmatprep.mubr.f32.mxu0 0.0
  %1381 = vmatmul.mubr.f32.gmra.mrb[0].mxu0 %v1221
  %v1382 = vpop.f32.mrb[0].mxu0
  %v1383 = vadd.f32 0.0, %v1382
  %v1384 = vpop.f32.mrb[0].mxu0
  %1385 = vmatprep.mubr.f32.mxu0 0.0
  %1386 = vmatmul.mubr.f32.gmra.mrb[0].mxu0 %v1224
  %v1387 = vpop.f32.mrb[0].mxu0
  %v1388 = vadd.f32 0.0, %v1387
  %v1389 = vpop.f32.mrb[0].mxu0
  %1390 = vmatprep.mubr.f32.mxu0 0.0
  %1391 = vmatmul.mubr.f32.gmra.mrb[0].mxu0 %v1227
  %v1392 = vpop.f32.mrb[0].mxu0
  %v1393 = vadd.f32 0.0, %v1392
  %v1394 = vpop.f32.mrb[0].mxu0
  %1395 = vmatprep.mubr.f32.mxu0 0.0
  %1396 = vmatmul.mubr.f32.gmra.mrb[0].mxu0 %v1230
  %v1397 = vpop.f32.mrb[0].mxu0
  %v1398 = vadd.f32 0.0, %v1397
  %v1399 = vpop.f32.mrb[0].mxu0
  %1400 = vmatprep.mubr.f32.mxu0 0.0
  %1401 = vmatmul.mubr.f32.gmra.mrb[0].mxu0 %v1233
  %v1402 = vpop.f32.mrb[0].mxu0
  %v1403 = vadd.f32 0.0, %v1402
  %v1404 = vpop.f32.mrb[0].mxu0
  %1405 = vmatprep.mubr.f32.mxu0 0.0
  %1406 = vmatmul.mubr.f32.gmra.mrb[0].mxu0 %v1236
  %v1407 = vpop.f32.mrb[0].mxu0
  %v1408 = vadd.f32 0.0, %v1407
  %v1409 = vpop.f32.mrb[0].mxu0
  %1410 = vmatprep.mubr.f32.mxu0 0.0
  %1411 = vmatmul.mubr.f32.gmra.mrb[0].mxu0 %v1239
  %v1412 = vpop.f32.mrb[0].mxu0
  %v1413 = vadd.f32 0.0, %v1412
  %v1414 = vpop.f32.mrb[0].mxu0
  %1415 = vmatprep.mubr.f32.mxu0 0.0
  %1416 = vmatmul.mubr.f32.gmra.mrb[0].mxu0 %v1242
  %v1417 = vpop.f32.mrb[0].mxu0
  %v1418 = vadd.f32 0.0, %v1417
  %v1419 = vpop.f32.mrb[0].mxu0
  %1420 = vmatprep.mubr.f32.mxu0 0.0
  %1421 = vmatmul.mubr.f32.gmra.mrb[0].mxu0 %v1245
  %v1422 = vpop.f32.mrb[0].mxu0
  %v1423 = vadd.f32 0.0, %v1422
  %v1424 = vpop.f32.mrb[0].mxu0
  %1425 = vmatprep.mubr.f32.mxu0 0.0
  %1426 = vmatmul.mubr.f32.gmra.mrb[0].mxu0 %v1248
  %v1427 = vpop.f32.mrb[0].mxu0
  %v1428 = vadd.f32 0.0, %v1427
  %v1429 = vpop.f32.mrb[0].mxu0
  %1430 = vmatprep.mubr.f32.mxu0 0.0
  %1431 = vmatmul.mubr.f32.gmra.mrb[0].mxu0 %v1251
  %v1432 = vpop.f32.mrb[0].mxu0
  %v1433 = vadd.f32 0.0, %v1432
  %v1434 = vpop.f32.mrb[0].mxu0
  %1435 = vmatprep.mubr.f32.mxu0 0.0
  %1436 = vmatmul.mubr.f32.gmra.mrb[0].mxu0 %v1254
  %v1437 = vpop.f32.mrb[0].mxu0
  %v1438 = vadd.f32 0.0, %v1437
  %v1439 = vpop.f32.mrb[0].mxu0
  %1440 = vdwg.mxu0
  %v1441 = vld [vmem:[%s4] sm:$0xff]
  %v1442 = vld [vmem:[%s4 + $0x8] sm:$0xff]
  %v1443 = vld [vmem:[%s4 + $0x10] sm:$0xff]
  %v1444 = vld [vmem:[%s4 + $0x18] sm:$0xff]
  %v1445 = vld [vmem:[%s4 + $0x20] sm:$0xff]
  %v1446 = vld [vmem:[%s4 + $0x28] sm:$0xff]
  %v1447 = vld [vmem:[%s4 + $0x30] sm:$0xff]
  %v1448 = vld [vmem:[%s4 + $0x38] sm:$0xff]
  %v1449 = vld [vmem:[%s4 + $0x40] sm:$0xff]
  %v1450 = vld [vmem:[%s4 + $0x48] sm:$0xff]
  %v1451 = vld [vmem:[%s4 + $0x50] sm:$0xff]
  %v1452 = vld [vmem:[%s4 + $0x58] sm:$0xff]
  %v1453 = vld [vmem:[%s4 + $0x60] sm:$0xff]
  %v1454 = vld [vmem:[%s4 + $0x68] sm:$0xff]
  %v1455 = vld [vmem:[%s4 + $0x70] sm:$0xff]
  %v1456 = vld [vmem:[%s4 + $0x78] sm:$0xff]
  %v1457 = vld [vmem:[%s4 + $0x80] sm:$0xff]
  %v1458 = vld [vmem:[%s4 + $0x88] sm:$0xff]
  %v1459 = vld [vmem:[%s4 + $0x90] sm:$0xff]
  %v1460 = vld [vmem:[%s4 + $0x98] sm:$0xff]
  %v1461 = vld [vmem:[%s4 + $0xa0] sm:$0xff]
  %v1462 = vld [vmem:[%s4 + $0xa8] sm:$0xff]
  %v1463 = vld [vmem:[%s4 + $0xb0] sm:$0xff]
  %v1464 = vld [vmem:[%s4 + $0xb8] sm:$0xff]
  %vm1465 = vcmp.eq.s32.totalorder %v1441, 0
  %vm1466 = vcmp.eq.s32.totalorder %v1442, 0
  %vm1467 = vcmp.eq.s32.totalorder %v1443, 0
  %vm1468 = vcmp.eq.s32.totalorder %v1444, 0
  %vm1469 = vcmp.eq.s32.totalorder %v1445, 0
  %vm1470 = vcmp.eq.s32.totalorder %v1446, 0
  %vm1471 = vcmp.eq.s32.totalorder %v1447, 0
  %vm1472 = vcmp.eq.s32.totalorder %v1448, 0
  %vm1473 = vcmp.eq.s32.totalorder %v1449, 0
  %vm1474 = vcmp.eq.s32.totalorder %v1450, 0
  %vm1475 = vcmp.eq.s32.totalorder %v1451, 0
  %vm1476 = vcmp.eq.s32.totalorder %v1452, 0
  %vm1477 = vcmp.eq.s32.totalorder %v1453, 0
  %vm1478 = vcmp.eq.s32.totalorder %v1454, 0
  %vm1479 = vcmp.eq.s32.totalorder %v1455, 0
  %vm1480 = vcmp.eq.s32.totalorder %v1456, 0
  %vm1481 = vcmp.eq.s32.totalorder %v1457, 0
  %vm1482 = vcmp.eq.s32.totalorder %v1458, 0
  %vm1483 = vcmp.eq.s32.totalorder %v1459, 0
  %vm1484 = vcmp.eq.s32.totalorder %v1460, 0
  %vm1485 = vcmp.eq.s32.totalorder %v1461, 0
  %vm1486 = vcmp.eq.s32.totalorder %v1462, 0
  %vm1487 = vcmp.eq.s32.totalorder %v1463, 0
  %vm1488 = vcmp.eq.s32.totalorder %v1464, 0
  %v1489 = vsel %vm1465, 1, 0
  %v1490 = vsel %vm1466, 1, 0
  %v1491 = vsel %vm1467, 1, 0
  %v1492 = vsel %vm1468, 1, 0
  %v1493 = vsel %vm1469, 1, 0
  %v1494 = vsel %vm1470, 1, 0
  %v1495 = vsel %vm1471, 1, 0
  %v1496 = vsel %vm1472, 1, 0
  %v1497 = vsel %vm1473, 1, 0
  %v1498 = vsel %vm1474, 1, 0
  %v1499 = vsel %vm1475, 1, 0
  %v1500 = vsel %vm1476, 1, 0
  %v1501 = vsel %vm1477, 1, 0
  %v1502 = vsel %vm1478, 1, 0
  %v1503 = vsel %vm1479, 1, 0
  %v1504 = vsel %vm1480, 1, 0
  %v1505 = vsel %vm1481, 1, 0
  %v1506 = vsel %vm1482, 1, 0
  %v1507 = vsel %vm1483, 1, 0
  %v1508 = vsel %vm1484, 1, 0
  %v1509 = vsel %vm1485, 1, 0
  %v1510 = vsel %vm1486, 1, 0
  %v1511 = vsel %vm1487, 1, 0
  %v1512 = vsel %vm1488, 1, 0
  %1513 = vset.pattern.permute.xlu0 0
  %1514 = vperm.xlu0 %1513, %v1489
  %v1515 = vpop.permute.xlu0 %1514
  %1516 = vset.pattern.permute.xlu0 0
  %1517 = vperm.xlu0 %1516, %v1490
  %v1518 = vpop.permute.xlu0 %1517
  %1519 = vset.pattern.permute.xlu0 0
  %1520 = vperm.xlu0 %1519, %v1491
  %v1521 = vpop.permute.xlu0 %1520
  %1522 = vset.pattern.permute.xlu0 0
  %1523 = vperm.xlu0 %1522, %v1492
  %v1524 = vpop.permute.xlu0 %1523
  %1525 = vset.pattern.permute.xlu0 0
  %1526 = vperm.xlu0 %1525, %v1493
  %v1527 = vpop.permute.xlu0 %1526
  %1528 = vset.pattern.permute.xlu0 0
  %1529 = vperm.xlu0 %1528, %v1494
  %v1530 = vpop.permute.xlu0 %1529
  %1531 = vset.pattern.permute.xlu0 0
  %1532 = vperm.xlu0 %1531, %v1495
  %v1533 = vpop.permute.xlu0 %1532
  %1534 = vset.pattern.permute.xlu0 0
  %1535 = vperm.xlu0 %1534, %v1496
  %v1536 = vpop.permute.xlu0 %1535
  %1537 = vset.pattern.permute.xlu0 0
  %1538 = vperm.xlu0 %1537, %v1497
  %v1539 = vpop.permute.xlu0 %1538
  %1540 = vset.pattern.permute.xlu0 0
  %1541 = vperm.xlu0 %1540, %v1498
  %v1542 = vpop.permute.xlu0 %1541
  %1543 = vset.pattern.permute.xlu0 0
  %1544 = vperm.xlu0 %1543, %v1499
  %v1545 = vpop.permute.xlu0 %1544
  %1546 = vset.pattern.permute.xlu0 0
  %1547 = vperm.xlu0 %1546, %v1500
  %v1548 = vpop.permute.xlu0 %1547
  %1549 = vset.pattern.permute.xlu0 0
  %1550 = vperm.xlu0 %1549, %v1501
  %v1551 = vpop.permute.xlu0 %1550
  %1552 = vset.pattern.permute.xlu0 0
  %1553 = vperm.xlu0 %1552, %v1502
  %v1554 = vpop.permute.xlu0 %1553
  %1555 = vset.pattern.permute.xlu0 0
  %1556 = vperm.xlu0 %1555, %v1503
  %v1557 = vpop.permute.xlu0 %1556
  %1558 = vset.pattern.permute.xlu0 0
  %1559 = vperm.xlu0 %1558, %v1504
  %v1560 = vpop.permute.xlu0 %1559
  %1561 = vset.pattern.permute.xlu0 0
  %1562 = vperm.xlu0 %1561, %v1505
  %v1563 = vpop.permute.xlu0 %1562
  %1564 = vset.pattern.permute.xlu0 0
  %1565 = vperm.xlu0 %1564, %v1506
  %v1566 = vpop.permute.xlu0 %1565
  %1567 = vset.pattern.permute.xlu0 0
  %1568 = vperm.xlu0 %1567, %v1507
  %v1569 = vpop.permute.xlu0 %1568
  %1570 = vset.pattern.permute.xlu0 0
  %1571 = vperm.xlu0 %1570, %v1508
  %v1572 = vpop.permute.xlu0 %1571
  %1573 = vset.pattern.permute.xlu0 0
  %1574 = vperm.xlu0 %1573, %v1509
  %v1575 = vpop.permute.xlu0 %1574
  %1576 = vset.pattern.permute.xlu0 0
  %1577 = vperm.xlu0 %1576, %v1510
  %v1578 = vpop.permute.xlu0 %1577
  %1579 = vset.pattern.permute.xlu0 0
  %1580 = vperm.xlu0 %1579, %v1511
  %v1581 = vpop.permute.xlu0 %1580
  %1582 = vset.pattern.permute.xlu0 0
  %1583 = vperm.xlu0 %1582, %v1512
  %v1584 = vpop.permute.xlu0 %1583
  %vm1585 = vcmp.eq.s32.totalorder %v1515, 1
  %vm1586 = vcmp.eq.s32.totalorder %v1518, 1
  %vm1587 = vcmp.eq.s32.totalorder %v1521, 1
  %vm1588 = vcmp.eq.s32.totalorder %v1524, 1
  %vm1589 = vcmp.eq.s32.totalorder %v1527, 1
  %vm1590 = vcmp.eq.s32.totalorder %v1530, 1
  %vm1591 = vcmp.eq.s32.totalorder %v1533, 1
  %vm1592 = vcmp.eq.s32.totalorder %v1536, 1
  %vm1593 = vcmp.eq.s32.totalorder %v1539, 1
  %vm1594 = vcmp.eq.s32.totalorder %v1542, 1
  %vm1595 = vcmp.eq.s32.totalorder %v1545, 1
  %vm1596 = vcmp.eq.s32.totalorder %v1548, 1
  %vm1597 = vcmp.eq.s32.totalorder %v1551, 1
  %vm1598 = vcmp.eq.s32.totalorder %v1554, 1
  %vm1599 = vcmp.eq.s32.totalorder %v1557, 1
  %vm1600 = vcmp.eq.s32.totalorder %v1560, 1
  %vm1601 = vcmp.eq.s32.totalorder %v1563, 1
  %vm1602 = vcmp.eq.s32.totalorder %v1566, 1
  %vm1603 = vcmp.eq.s32.totalorder %v1569, 1
  %vm1604 = vcmp.eq.s32.totalorder %v1572, 1
  %vm1605 = vcmp.eq.s32.totalorder %v1575, 1
  %vm1606 = vcmp.eq.s32.totalorder %v1578, 1
  %vm1607 = vcmp.eq.s32.totalorder %v1581, 1
  %vm1608 = vcmp.eq.s32.totalorder %v1584, 1
  %v1609 = vsel %vm1585, %v1323, 0.0
  %v1610 = vsel %vm1586, %v1328, 0.0
  %v1611 = vsel %vm1587, %v1333, 0.0
  %v1612 = vsel %vm1588, %v1338, 0.0
  %v1613 = vsel %vm1589, %v1343, 0.0
  %v1614 = vsel %vm1590, %v1348, 0.0
  %v1615 = vsel %vm1591, %v1353, 0.0
  %v1616 = vsel %vm1592, %v1358, 0.0
  %v1617 = vsel %vm1593, %v1363, 0.0
  %v1618 = vsel %vm1594, %v1368, 0.0
  %v1619 = vsel %vm1595, %v1373, 0.0
  %v1620 = vsel %vm1596, %v1378, 0.0
  %v1621 = vsel %vm1597, %v1383, 0.0
  %v1622 = vsel %vm1598, %v1388, 0.0
  %v1623 = vsel %vm1599, %v1393, 0.0
  %v1624 = vsel %vm1600, %v1398, 0.0
  %v1625 = vsel %vm1601, %v1403, 0.0
  %v1626 = vsel %vm1602, %v1408, 0.0
  %v1627 = vsel %vm1603, %v1413, 0.0
  %v1628 = vsel %vm1604, %v1418, 0.0
  %v1629 = vsel %vm1605, %v1423, 0.0
  %v1630 = vsel %vm1606, %v1428, 0.0
  %v1631 = vsel %vm1607, %v1433, 0.0
  %v1632 = vsel %vm1608, %v1438, 0.0
  %v1633 = vadd.f32 %v1609, 0.0
  %v1634 = vadd.f32 %v1610, 0.0
  %v1635 = vadd.f32 %v1611, 0.0
  %v1636 = vadd.f32 %v1612, 0.0
  %v1637 = vadd.f32 %v1613, 0.0
  %v1638 = vadd.f32 %v1614, 0.0
  %v1639 = vadd.f32 %v1615, 0.0
  %v1640 = vadd.f32 %v1616, 0.0
  %v1641 = vadd.f32 %v1617, 0.0
  %v1642 = vadd.f32 %v1618, 0.0
  %v1643 = vadd.f32 %v1619, 0.0
  %v1644 = vadd.f32 %v1620, 0.0
  %v1645 = vadd.f32 %v1621, 0.0
  %v1646 = vadd.f32 %v1622, 0.0
  %v1647 = vadd.f32 %v1623, 0.0
  %v1648 = vadd.f32 %v1624, 0.0
  %v1649 = vadd.f32 %v1625, 0.0
  %v1650 = vadd.f32 %v1626, 0.0
  %v1651 = vadd.f32 %v1627, 0.0
  %v1652 = vadd.f32 %v1628, 0.0
  %v1653 = vadd.f32 %v1629, 0.0
  %v1654 = vadd.f32 %v1630, 0.0
  %v1655 = vadd.f32 %v1631, 0.0
  %v1656 = vadd.f32 %v1632, 0.0
  %vm1657 = vcmp.eq.s32.totalorder %v1441, 1
  %vm1658 = vcmp.eq.s32.totalorder %v1442, 1
  %vm1659 = vcmp.eq.s32.totalorder %v1443, 1
  %vm1660 = vcmp.eq.s32.totalorder %v1444, 1
  %vm1661 = vcmp.eq.s32.totalorder %v1445, 1
  %vm1662 = vcmp.eq.s32.totalorder %v1446, 1
  %vm1663 = vcmp.eq.s32.totalorder %v1447, 1
  %vm1664 = vcmp.eq.s32.totalorder %v1448, 1
  %vm1665 = vcmp.eq.s32.totalorder %v1449, 1
  %vm1666 = vcmp.eq.s32.totalorder %v1450, 1
  %vm1667 = vcmp.eq.s32.totalorder %v1451, 1
  %vm1668 = vcmp.eq.s32.totalorder %v1452, 1
  %vm1669 = vcmp.eq.s32.totalorder %v1453, 1
  %vm1670 = vcmp.eq.s32.totalorder %v1454, 1
  %vm1671 = vcmp.eq.s32.totalorder %v1455, 1
  %vm1672 = vcmp.eq.s32.totalorder %v1456, 1
  %vm1673 = vcmp.eq.s32.totalorder %v1457, 1
  %vm1674 = vcmp.eq.s32.totalorder %v1458, 1
  %vm1675 = vcmp.eq.s32.totalorder %v1459, 1
  %vm1676 = vcmp.eq.s32.totalorder %v1460, 1
  %vm1677 = vcmp.eq.s32.totalorder %v1461, 1
  %vm1678 = vcmp.eq.s32.totalorder %v1462, 1
  %vm1679 = vcmp.eq.s32.totalorder %v1463, 1
  %vm1680 = vcmp.eq.s32.totalorder %v1464, 1
  %v1681 = vsel %vm1657, 1, 0
  %v1682 = vsel %vm1658, 1, 0
  %v1683 = vsel %vm1659, 1, 0
  %v1684 = vsel %vm1660, 1, 0
  %v1685 = vsel %vm1661, 1, 0
  %v1686 = vsel %vm1662, 1, 0
  %v1687 = vsel %vm1663, 1, 0
  %v1688 = vsel %vm1664, 1, 0
  %v1689 = vsel %vm1665, 1, 0
  %v1690 = vsel %vm1666, 1, 0
  %v1691 = vsel %vm1667, 1, 0
  %v1692 = vsel %vm1668, 1, 0
  %v1693 = vsel %vm1669, 1, 0
  %v1694 = vsel %vm1670, 1, 0
  %v1695 = vsel %vm1671, 1, 0
  %v1696 = vsel %vm1672, 1, 0
  %v1697 = vsel %vm1673, 1, 0
  %v1698 = vsel %vm1674, 1, 0
  %v1699 = vsel %vm1675, 1, 0
  %v1700 = vsel %vm1676, 1, 0
  %v1701 = vsel %vm1677, 1, 0
  %v1702 = vsel %vm1678, 1, 0
  %v1703 = vsel %vm1679, 1, 0
  %v1704 = vsel %vm1680, 1, 0
  %1705 = vset.pattern.permute.xlu0 0
  %1706 = vperm.xlu0 %1705, %v1681
  %v1707 = vpop.permute.xlu0 %1706
  %1708 = vset.pattern.permute.xlu0 0
  %1709 = vperm.xlu0 %1708, %v1682
  %v1710 = vpop.permute.xlu0 %1709
  %1711 = vset.pattern.permute.xlu0 0
  %1712 = vperm.xlu0 %1711, %v1683
  %v1713 = vpop.permute.xlu0 %1712
  %1714 = vset.pattern.permute.xlu0 0
  %1715 = vperm.xlu0 %1714, %v1684
  %v1716 = vpop.permute.xlu0 %1715
  %1717 = vset.pattern.permute.xlu0 0
  %1718 = vperm.xlu0 %1717, %v1685
  %v1719 = vpop.permute.xlu0 %1718
  %1720 = vset.pattern.permute.xlu0 0
  %1721 = vperm.xlu0 %1720, %v1686
  %v1722 = vpop.permute.xlu0 %1721
  %1723 = vset.pattern.permute.xlu0 0
  %1724 = vperm.xlu0 %1723, %v1687
  %v1725 = vpop.permute.xlu0 %1724
  %1726 = vset.pattern.permute.xlu0 0
  %1727 = vperm.xlu0 %1726, %v1688
  %v1728 = vpop.permute.xlu0 %1727
  %1729 = vset.pattern.permute.xlu0 0
  %1730 = vperm.xlu0 %1729, %v1689
  %v1731 = vpop.permute.xlu0 %1730
  %1732 = vset.pattern.permute.xlu0 0
  %1733 = vperm.xlu0 %1732, %v1690
  %v1734 = vpop.permute.xlu0 %1733
  %1735 = vset.pattern.permute.xlu0 0
  %1736 = vperm.xlu0 %1735, %v1691
  %v1737 = vpop.permute.xlu0 %1736
  %1738 = vset.pattern.permute.xlu0 0
  %1739 = vperm.xlu0 %1738, %v1692
  %v1740 = vpop.permute.xlu0 %1739
  %1741 = vset.pattern.permute.xlu0 0
  %1742 = vperm.xlu0 %1741, %v1693
  %v1743 = vpop.permute.xlu0 %1742
  %1744 = vset.pattern.permute.xlu0 0
  %1745 = vperm.xlu0 %1744, %v1694
  %v1746 = vpop.permute.xlu0 %1745
  %1747 = vset.pattern.permute.xlu0 0
  %1748 = vperm.xlu0 %1747, %v1695
  %v1749 = vpop.permute.xlu0 %1748
  %1750 = vset.pattern.permute.xlu0 0
  %1751 = vperm.xlu0 %1750, %v1696
  %v1752 = vpop.permute.xlu0 %1751
  %1753 = vset.pattern.permute.xlu0 0
  %1754 = vperm.xlu0 %1753, %v1697
  %v1755 = vpop.permute.xlu0 %1754
  %1756 = vset.pattern.permute.xlu0 0
  %1757 = vperm.xlu0 %1756, %v1698
  %v1758 = vpop.permute.xlu0 %1757
  %1759 = vset.pattern.permute.xlu0 0
  %1760 = vperm.xlu0 %1759, %v1699
  %v1761 = vpop.permute.xlu0 %1760
  %1762 = vset.pattern.permute.xlu0 0
  %1763 = vperm.xlu0 %1762, %v1700
  %v1764 = vpop.permute.xlu0 %1763
  %1765 = vset.pattern.permute.xlu0 0
  %1766 = vperm.xlu0 %1765, %v1701
  %v1767 = vpop.permute.xlu0 %1766
  %1768 = vset.pattern.permute.xlu0 0
  %1769 = vperm.xlu0 %1768, %v1702
  %v1770 = vpop.permute.xlu0 %1769
  %1771 = vset.pattern.permute.xlu0 0
  %1772 = vperm.xlu0 %1771, %v1703
  %v1773 = vpop.permute.xlu0 %1772
  %1774 = vset.pattern.permute.xlu0 0
  %1775 = vperm.xlu0 %1774, %v1704
  %v1776 = vpop.permute.xlu0 %1775
  %vm1777 = vcmp.eq.s32.totalorder %v1707, 1
  %vm1778 = vcmp.eq.s32.totalorder %v1710, 1
  %vm1779 = vcmp.eq.s32.totalorder %v1713, 1
  %vm1780 = vcmp.eq.s32.totalorder %v1716, 1
  %vm1781 = vcmp.eq.s32.totalorder %v1719, 1
  %vm1782 = vcmp.eq.s32.totalorder %v1722, 1
  %vm1783 = vcmp.eq.s32.totalorder %v1725, 1
  %vm1784 = vcmp.eq.s32.totalorder %v1728, 1
  %vm1785 = vcmp.eq.s32.totalorder %v1731, 1
  %vm1786 = vcmp.eq.s32.totalorder %v1734, 1
  %vm1787 = vcmp.eq.s32.totalorder %v1737, 1
  %vm1788 = vcmp.eq.s32.totalorder %v1740, 1
  %vm1789 = vcmp.eq.s32.totalorder %v1743, 1
  %vm1790 = vcmp.eq.s32.totalorder %v1746, 1
  %vm1791 = vcmp.eq.s32.totalorder %v1749, 1
  %vm1792 = vcmp.eq.s32.totalorder %v1752, 1
  %vm1793 = vcmp.eq.s32.totalorder %v1755, 1
  %vm1794 = vcmp.eq.s32.totalorder %v1758, 1
  %vm1795 = vcmp.eq.s32.totalorder %v1761, 1
  %vm1796 = vcmp.eq.s32.totalorder %v1764, 1
  %vm1797 = vcmp.eq.s32.totalorder %v1767, 1
  %vm1798 = vcmp.eq.s32.totalorder %v1770, 1
  %vm1799 = vcmp.eq.s32.totalorder %v1773, 1
  %vm1800 = vcmp.eq.s32.totalorder %v1776, 1
  %v1801 = vsel %vm1777, %v1323, 0.0
  %v1802 = vsel %vm1778, %v1328, 0.0
  %v1803 = vsel %vm1779, %v1333, 0.0
  %v1804 = vsel %vm1780, %v1338, 0.0
  %v1805 = vsel %vm1781, %v1343, 0.0
  %v1806 = vsel %vm1782, %v1348, 0.0
  %v1807 = vsel %vm1783, %v1353, 0.0
  %v1808 = vsel %vm1784, %v1358, 0.0
  %v1809 = vsel %vm1785, %v1363, 0.0
  %v1810 = vsel %vm1786, %v1368, 0.0
  %v1811 = vsel %vm1787, %v1373, 0.0
  %v1812 = vsel %vm1788, %v1378, 0.0
  %v1813 = vsel %vm1789, %v1383, 0.0
  %v1814 = vsel %vm1790, %v1388, 0.0
  %v1815 = vsel %vm1791, %v1393, 0.0
  %v1816 = vsel %vm1792, %v1398, 0.0
  %v1817 = vsel %vm1793, %v1403, 0.0
  %v1818 = vsel %vm1794, %v1408, 0.0
  %v1819 = vsel %vm1795, %v1413, 0.0
  %v1820 = vsel %vm1796, %v1418, 0.0
  %v1821 = vsel %vm1797, %v1423, 0.0
  %v1822 = vsel %vm1798, %v1428, 0.0
  %v1823 = vsel %vm1799, %v1433, 0.0
  %v1824 = vsel %vm1800, %v1438, 0.0
  %1849 = vrot.lane.b32.xlu0 %v1801, 96
  %v1850 = vpop.permute.xlu0 %1849
  %1851 = vrot.lane.b32.xlu0 %v1802, 96
  %v1852 = vpop.permute.xlu0 %1851
  %1853 = vrot.lane.b32.xlu0 %v1803, 96
  %v1854 = vpop.permute.xlu0 %1853
  %1855 = vrot.lane.b32.xlu0 %v1804, 96
  %v1856 = vpop.permute.xlu0 %1855
  %1857 = vrot.lane.b32.xlu0 %v1805, 96
  %v1858 = vpop.permute.xlu0 %1857
  %1859 = vrot.lane.b32.xlu0 %v1806, 96
  %v1860 = vpop.permute.xlu0 %1859
  %1861 = vrot.lane.b32.xlu0 %v1807, 96
  %v1862 = vpop.permute.xlu0 %1861
  %1863 = vrot.lane.b32.xlu0 %v1808, 96
  %v1864 = vpop.permute.xlu0 %1863
  %1865 = vrot.lane.b32.xlu0 %v1809, 96
  %v1866 = vpop.permute.xlu0 %1865
  %1867 = vrot.lane.b32.xlu0 %v1810, 96
  %v1868 = vpop.permute.xlu0 %1867
  %1869 = vrot.lane.b32.xlu0 %v1811, 96
  %v1870 = vpop.permute.xlu0 %1869
  %1871 = vrot.lane.b32.xlu0 %v1812, 96
  %v1872 = vpop.permute.xlu0 %1871
  %1873 = vrot.lane.b32.xlu0 %v1813, 96
  %v1874 = vpop.permute.xlu0 %1873
  %1875 = vrot.lane.b32.xlu0 %v1814, 96
  %v1876 = vpop.permute.xlu0 %1875
  %1877 = vrot.lane.b32.xlu0 %v1815, 96
  %v1878 = vpop.permute.xlu0 %1877
  %1879 = vrot.lane.b32.xlu0 %v1816, 96
  %v1880 = vpop.permute.xlu0 %1879
  %1881 = vrot.lane.b32.xlu0 %v1817, 96
  %v1882 = vpop.permute.xlu0 %1881
  %1883 = vrot.lane.b32.xlu0 %v1818, 96
  %v1884 = vpop.permute.xlu0 %1883
  %1885 = vrot.lane.b32.xlu0 %v1819, 96
  %v1886 = vpop.permute.xlu0 %1885
  %1887 = vrot.lane.b32.xlu0 %v1820, 96
  %v1888 = vpop.permute.xlu0 %1887
  %1889 = vrot.lane.b32.xlu0 %v1821, 96
  %v1890 = vpop.permute.xlu0 %1889
  %1891 = vrot.lane.b32.xlu0 %v1822, 96
  %v1892 = vpop.permute.xlu0 %1891
  %1893 = vrot.lane.b32.xlu0 %v1823, 96
  %v1894 = vpop.permute.xlu0 %1893
  %1895 = vrot.lane.b32.xlu0 %v1824, 96
  %v1896 = vpop.permute.xlu0 %1895
  %v1921 = vadd.f32 %v1633, %v1850
  %v1922 = vadd.f32 %v1634, %v1852
  %v1923 = vadd.f32 %v1635, %v1854
  %v1924 = vadd.f32 %v1636, %v1856
  %v1925 = vadd.f32 %v1637, %v1858
  %v1926 = vadd.f32 %v1638, %v1860
  %v1927 = vadd.f32 %v1639, %v1862
  %v1928 = vadd.f32 %v1640, %v1864
  %v1929 = vadd.f32 %v1641, %v1866
  %v1930 = vadd.f32 %v1642, %v1868
  %v1931 = vadd.f32 %v1643, %v1870
  %v1932 = vadd.f32 %v1644, %v1872
  %v1933 = vadd.f32 %v1645, %v1874
  %v1934 = vadd.f32 %v1646, %v1876
  %v1935 = vadd.f32 %v1647, %v1878
  %v1936 = vadd.f32 %v1648, %v1880
  %v1937 = vadd.f32 %v1649, %v1882
  %v1938 = vadd.f32 %v1650, %v1884
  %v1939 = vadd.f32 %v1651, %v1886
  %v1940 = vadd.f32 %v1652, %v1888
  %v1941 = vadd.f32 %v1653, %v1890
  %v1942 = vadd.f32 %v1654, %v1892
  %v1943 = vadd.f32 %v1655, %v1894
  %v1944 = vadd.f32 %v1656, %v1896
  %vm1945 = vcmp.eq.s32.totalorder %v1441, 2
  %vm1946 = vcmp.eq.s32.totalorder %v1442, 2
  %vm1947 = vcmp.eq.s32.totalorder %v1443, 2
  %vm1948 = vcmp.eq.s32.totalorder %v1444, 2
  %vm1949 = vcmp.eq.s32.totalorder %v1445, 2
  %vm1950 = vcmp.eq.s32.totalorder %v1446, 2
  %vm1951 = vcmp.eq.s32.totalorder %v1447, 2
  %vm1952 = vcmp.eq.s32.totalorder %v1448, 2
  %vm1953 = vcmp.eq.s32.totalorder %v1449, 2
  %vm1954 = vcmp.eq.s32.totalorder %v1450, 2
  %vm1955 = vcmp.eq.s32.totalorder %v1451, 2
  %vm1956 = vcmp.eq.s32.totalorder %v1452, 2
  %vm1957 = vcmp.eq.s32.totalorder %v1453, 2
  %vm1958 = vcmp.eq.s32.totalorder %v1454, 2
  %vm1959 = vcmp.eq.s32.totalorder %v1455, 2
  %vm1960 = vcmp.eq.s32.totalorder %v1456, 2
  %vm1961 = vcmp.eq.s32.totalorder %v1457, 2
  %vm1962 = vcmp.eq.s32.totalorder %v1458, 2
  %vm1963 = vcmp.eq.s32.totalorder %v1459, 2
  %vm1964 = vcmp.eq.s32.totalorder %v1460, 2
  %vm1965 = vcmp.eq.s32.totalorder %v1461, 2
  %vm1966 = vcmp.eq.s32.totalorder %v1462, 2
  %vm1967 = vcmp.eq.s32.totalorder %v1463, 2
  %vm1968 = vcmp.eq.s32.totalorder %v1464, 2
  %v1969 = vsel %vm1945, 1, 0
  %v1970 = vsel %vm1946, 1, 0
  %v1971 = vsel %vm1947, 1, 0
  %v1972 = vsel %vm1948, 1, 0
  %v1973 = vsel %vm1949, 1, 0
  %v1974 = vsel %vm1950, 1, 0
  %v1975 = vsel %vm1951, 1, 0
  %v1976 = vsel %vm1952, 1, 0
  %v1977 = vsel %vm1953, 1, 0
  %v1978 = vsel %vm1954, 1, 0
  %v1979 = vsel %vm1955, 1, 0
  %v1980 = vsel %vm1956, 1, 0
  %v1981 = vsel %vm1957, 1, 0
  %v1982 = vsel %vm1958, 1, 0
  %v1983 = vsel %vm1959, 1, 0
  %v1984 = vsel %vm1960, 1, 0
  %v1985 = vsel %vm1961, 1, 0
  %v1986 = vsel %vm1962, 1, 0
  %v1987 = vsel %vm1963, 1, 0
  %v1988 = vsel %vm1964, 1, 0
  %v1989 = vsel %vm1965, 1, 0
  %v1990 = vsel %vm1966, 1, 0
  %v1991 = vsel %vm1967, 1, 0
  %v1992 = vsel %vm1968, 1, 0
  %1993 = vset.pattern.permute.xlu0 0
  %1994 = vperm.xlu0 %1993, %v1969
  %v1995 = vpop.permute.xlu0 %1994
  %1996 = vset.pattern.permute.xlu0 0
  %1997 = vperm.xlu0 %1996, %v1970
  %v1998 = vpop.permute.xlu0 %1997
  %1999 = vset.pattern.permute.xlu0 0
  %2000 = vperm.xlu0 %1999, %v1971
  %v2001 = vpop.permute.xlu0 %2000
  %2002 = vset.pattern.permute.xlu0 0
  %2003 = vperm.xlu0 %2002, %v1972
  %v2004 = vpop.permute.xlu0 %2003
  %2005 = vset.pattern.permute.xlu0 0
  %2006 = vperm.xlu0 %2005, %v1973
  %v2007 = vpop.permute.xlu0 %2006
  %2008 = vset.pattern.permute.xlu0 0
  %2009 = vperm.xlu0 %2008, %v1974
  %v2010 = vpop.permute.xlu0 %2009
  %2011 = vset.pattern.permute.xlu0 0
  %2012 = vperm.xlu0 %2011, %v1975
  %v2013 = vpop.permute.xlu0 %2012
  %2014 = vset.pattern.permute.xlu0 0
  %2015 = vperm.xlu0 %2014, %v1976
  %v2016 = vpop.permute.xlu0 %2015
  %2017 = vset.pattern.permute.xlu0 0
  %2018 = vperm.xlu0 %2017, %v1977
  %v2019 = vpop.permute.xlu0 %2018
  %2020 = vset.pattern.permute.xlu0 0
  %2021 = vperm.xlu0 %2020, %v1978
  %v2022 = vpop.permute.xlu0 %2021
  %2023 = vset.pattern.permute.xlu0 0
  %2024 = vperm.xlu0 %2023, %v1979
  %v2025 = vpop.permute.xlu0 %2024
  %2026 = vset.pattern.permute.xlu0 0
  %2027 = vperm.xlu0 %2026, %v1980
  %v2028 = vpop.permute.xlu0 %2027
  %2029 = vset.pattern.permute.xlu0 0
  %2030 = vperm.xlu0 %2029, %v1981
  %v2031 = vpop.permute.xlu0 %2030
  %2032 = vset.pattern.permute.xlu0 0
  %2033 = vperm.xlu0 %2032, %v1982
  %v2034 = vpop.permute.xlu0 %2033
  %2035 = vset.pattern.permute.xlu0 0
  %2036 = vperm.xlu0 %2035, %v1983
  %v2037 = vpop.permute.xlu0 %2036
  %2038 = vset.pattern.permute.xlu0 0
  %2039 = vperm.xlu0 %2038, %v1984
  %v2040 = vpop.permute.xlu0 %2039
  %2041 = vset.pattern.permute.xlu0 0
  %2042 = vperm.xlu0 %2041, %v1985
  %v2043 = vpop.permute.xlu0 %2042
  %2044 = vset.pattern.permute.xlu0 0
  %2045 = vperm.xlu0 %2044, %v1986
  %v2046 = vpop.permute.xlu0 %2045
  %2047 = vset.pattern.permute.xlu0 0
  %2048 = vperm.xlu0 %2047, %v1987
  %v2049 = vpop.permute.xlu0 %2048
  %2050 = vset.pattern.permute.xlu0 0
  %2051 = vperm.xlu0 %2050, %v1988
  %v2052 = vpop.permute.xlu0 %2051
  %2053 = vset.pattern.permute.xlu0 0
  %2054 = vperm.xlu0 %2053, %v1989
  %v2055 = vpop.permute.xlu0 %2054
  %2056 = vset.pattern.permute.xlu0 0
  %2057 = vperm.xlu0 %2056, %v1990
  %v2058 = vpop.permute.xlu0 %2057
  %2059 = vset.pattern.permute.xlu0 0
  %2060 = vperm.xlu0 %2059, %v1991
  %v2061 = vpop.permute.xlu0 %2060
  %2062 = vset.pattern.permute.xlu0 0
  %2063 = vperm.xlu0 %2062, %v1992
  %v2064 = vpop.permute.xlu0 %2063
  %vm2065 = vcmp.eq.s32.totalorder %v1995, 1
  %vm2066 = vcmp.eq.s32.totalorder %v1998, 1
  %vm2067 = vcmp.eq.s32.totalorder %v2001, 1
  %vm2068 = vcmp.eq.s32.totalorder %v2004, 1
  %vm2069 = vcmp.eq.s32.totalorder %v2007, 1
  %vm2070 = vcmp.eq.s32.totalorder %v2010, 1
  %vm2071 = vcmp.eq.s32.totalorder %v2013, 1
  %vm2072 = vcmp.eq.s32.totalorder %v2016, 1
  %vm2073 = vcmp.eq.s32.totalorder %v2019, 1
  %vm2074 = vcmp.eq.s32.totalorder %v2022, 1
  %vm2075 = vcmp.eq.s32.totalorder %v2025, 1
  %vm2076 = vcmp.eq.s32.totalorder %v2028, 1
  %vm2077 = vcmp.eq.s32.totalorder %v2031, 1
  %vm2078 = vcmp.eq.s32.totalorder %v2034, 1
  %vm2079 = vcmp.eq.s32.totalorder %v2037, 1
  %vm2080 = vcmp.eq.s32.totalorder %v2040, 1
  %vm2081 = vcmp.eq.s32.totalorder %v2043, 1
  %vm2082 = vcmp.eq.s32.totalorder %v2046, 1
  %vm2083 = vcmp.eq.s32.totalorder %v2049, 1
  %vm2084 = vcmp.eq.s32.totalorder %v2052, 1
  %vm2085 = vcmp.eq.s32.totalorder %v2055, 1
  %vm2086 = vcmp.eq.s32.totalorder %v2058, 1
  %vm2087 = vcmp.eq.s32.totalorder %v2061, 1
  %vm2088 = vcmp.eq.s32.totalorder %v2064, 1
  %v2089 = vsel %vm2065, %v1323, 0.0
  %v2090 = vsel %vm2066, %v1328, 0.0
  %v2091 = vsel %vm2067, %v1333, 0.0
  %v2092 = vsel %vm2068, %v1338, 0.0
  %v2093 = vsel %vm2069, %v1343, 0.0
  %v2094 = vsel %vm2070, %v1348, 0.0
  %v2095 = vsel %vm2071, %v1353, 0.0
  %v2096 = vsel %vm2072, %v1358, 0.0
  %v2097 = vsel %vm2073, %v1363, 0.0
  %v2098 = vsel %vm2074, %v1368, 0.0
  %v2099 = vsel %vm2075, %v1373, 0.0
  %v2100 = vsel %vm2076, %v1378, 0.0
  %v2101 = vsel %vm2077, %v1383, 0.0
  %v2102 = vsel %vm2078, %v1388, 0.0
  %v2103 = vsel %vm2079, %v1393, 0.0
  %v2104 = vsel %vm2080, %v1398, 0.0
  %v2105 = vsel %vm2081, %v1403, 0.0
  %v2106 = vsel %vm2082, %v1408, 0.0
  %v2107 = vsel %vm2083, %v1413, 0.0
  %v2108 = vsel %vm2084, %v1418, 0.0
  %v2109 = vsel %vm2085, %v1423, 0.0
  %v2110 = vsel %vm2086, %v1428, 0.0
  %v2111 = vsel %vm2087, %v1433, 0.0
  %v2112 = vsel %vm2088, %v1438, 0.0
  %2137 = vrot.lane.b32.xlu0 %v2089, 64
  %v2138 = vpop.permute.xlu0 %2137
  %2139 = vrot.lane.b32.xlu0 %v2090, 64
  %v2140 = vpop.permute.xlu0 %2139
  %2141 = vrot.lane.b32.xlu0 %v2091, 64
  %v2142 = vpop.permute.xlu0 %2141
  %2143 = vrot.lane.b32.xlu0 %v2092, 64
  %v2144 = vpop.permute.xlu0 %2143
  %2145 = vrot.lane.b32.xlu0 %v2093, 64
  %v2146 = vpop.permute.xlu0 %2145
  %2147 = vrot.lane.b32.xlu0 %v2094, 64
  %v2148 = vpop.permute.xlu0 %2147
  %2149 = vrot.lane.b32.xlu0 %v2095, 64
  %v2150 = vpop.permute.xlu0 %2149
  %2151 = vrot.lane.b32.xlu0 %v2096, 64
  %v2152 = vpop.permute.xlu0 %2151
  %2153 = vrot.lane.b32.xlu0 %v2097, 64
  %v2154 = vpop.permute.xlu0 %2153
  %2155 = vrot.lane.b32.xlu0 %v2098, 64
  %v2156 = vpop.permute.xlu0 %2155
  %2157 = vrot.lane.b32.xlu0 %v2099, 64
  %v2158 = vpop.permute.xlu0 %2157
  %2159 = vrot.lane.b32.xlu0 %v2100, 64
  %v2160 = vpop.permute.xlu0 %2159
  %2161 = vrot.lane.b32.xlu0 %v2101, 64
  %v2162 = vpop.permute.xlu0 %2161
  %2163 = vrot.lane.b32.xlu0 %v2102, 64
  %v2164 = vpop.permute.xlu0 %2163
  %2165 = vrot.lane.b32.xlu0 %v2103, 64
  %v2166 = vpop.permute.xlu0 %2165
  %2167 = vrot.lane.b32.xlu0 %v2104, 64
  %v2168 = vpop.permute.xlu0 %2167
  %2169 = vrot.lane.b32.xlu0 %v2105, 64
  %v2170 = vpop.permute.xlu0 %2169
  %2171 = vrot.lane.b32.xlu0 %v2106, 64
  %v2172 = vpop.permute.xlu0 %2171
  %2173 = vrot.lane.b32.xlu0 %v2107, 64
  %v2174 = vpop.permute.xlu0 %2173
  %2175 = vrot.lane.b32.xlu0 %v2108, 64
  %v2176 = vpop.permute.xlu0 %2175
  %2177 = vrot.lane.b32.xlu0 %v2109, 64
  %v2178 = vpop.permute.xlu0 %2177
  %2179 = vrot.lane.b32.xlu0 %v2110, 64
  %v2180 = vpop.permute.xlu0 %2179
  %2181 = vrot.lane.b32.xlu0 %v2111, 64
  %v2182 = vpop.permute.xlu0 %2181
  %2183 = vrot.lane.b32.xlu0 %v2112, 64
  %v2184 = vpop.permute.xlu0 %2183
  %v2209 = vadd.f32 %v1921, %v2138
  %v2210 = vadd.f32 %v1922, %v2140
  %v2211 = vadd.f32 %v1923, %v2142
  %v2212 = vadd.f32 %v1924, %v2144
  %v2213 = vadd.f32 %v1925, %v2146
  %v2214 = vadd.f32 %v1926, %v2148
  %v2215 = vadd.f32 %v1927, %v2150
  %v2216 = vadd.f32 %v1928, %v2152
  %v2217 = vadd.f32 %v1929, %v2154
  %v2218 = vadd.f32 %v1930, %v2156
  %v2219 = vadd.f32 %v1931, %v2158
  %v2220 = vadd.f32 %v1932, %v2160
  %v2221 = vadd.f32 %v1933, %v2162
  %v2222 = vadd.f32 %v1934, %v2164
  %v2223 = vadd.f32 %v1935, %v2166
  %v2224 = vadd.f32 %v1936, %v2168
  %v2225 = vadd.f32 %v1937, %v2170
  %v2226 = vadd.f32 %v1938, %v2172
  %v2227 = vadd.f32 %v1939, %v2174
  %v2228 = vadd.f32 %v1940, %v2176
  %v2229 = vadd.f32 %v1941, %v2178
  %v2230 = vadd.f32 %v1942, %v2180
  %v2231 = vadd.f32 %v1943, %v2182
  %v2232 = vadd.f32 %v1944, %v2184
  %v2233 = vld [vmem:[%s5] sm:$0xff]
  %v2234 = vld [vmem:[%s5 + $0x8] sm:$0xff]
  %v2235 = vld [vmem:[%s5 + $0x10] sm:$0xff]
  %v2236 = vld [vmem:[%s5 + $0x18] sm:$0xff]
  %v2237 = vld [vmem:[%s5 + $0x20] sm:$0xff]
  %v2238 = vld [vmem:[%s5 + $0x28] sm:$0xff]
  %v2239 = vld [vmem:[%s5 + $0x30] sm:$0xff]
  %v2240 = vld [vmem:[%s5 + $0x38] sm:$0xff]
  %v2241 = vld [vmem:[%s5 + $0x40] sm:$0xff]
  %v2242 = vld [vmem:[%s5 + $0x48] sm:$0xff]
  %v2243 = vld [vmem:[%s5 + $0x50] sm:$0xff]
  %v2244 = vld [vmem:[%s5 + $0x58] sm:$0xff]
  %v2245 = vld [vmem:[%s5 + $0x60] sm:$0xff]
  %v2246 = vld [vmem:[%s5 + $0x68] sm:$0xff]
  %v2247 = vld [vmem:[%s5 + $0x70] sm:$0xff]
  %v2248 = vld [vmem:[%s5 + $0x78] sm:$0xff]
  %v2249 = vld [vmem:[%s5 + $0x80] sm:$0xff]
  %v2250 = vld [vmem:[%s5 + $0x88] sm:$0xff]
  %v2251 = vld [vmem:[%s5 + $0x90] sm:$0xff]
  %v2252 = vld [vmem:[%s5 + $0x98] sm:$0xff]
  %v2253 = vld [vmem:[%s5 + $0xa0] sm:$0xff]
  %v2254 = vld [vmem:[%s5 + $0xa8] sm:$0xff]
  %v2255 = vld [vmem:[%s5 + $0xb0] sm:$0xff]
  %v2256 = vld [vmem:[%s5 + $0xb8] sm:$0xff]
  %2258 = vset.pattern.permute.xlu0 0
  %2259 = vperm.xlu0 %2258, %v2233
  %v2260 = vpop.permute.xlu0 %2259
  %2263 = vset.pattern.permute.xlu0 0
  %2264 = vperm.xlu0 %2263, %v2234
  %v2265 = vpop.permute.xlu0 %2264
  %2268 = vset.pattern.permute.xlu0 0
  %2269 = vperm.xlu0 %2268, %v2235
  %v2270 = vpop.permute.xlu0 %2269
  %2273 = vset.pattern.permute.xlu0 0
  %2274 = vperm.xlu0 %2273, %v2236
  %v2275 = vpop.permute.xlu0 %2274
  %2278 = vset.pattern.permute.xlu0 0
  %2279 = vperm.xlu0 %2278, %v2237
  %v2280 = vpop.permute.xlu0 %2279
  %2283 = vset.pattern.permute.xlu0 0
  %2284 = vperm.xlu0 %2283, %v2238
  %v2285 = vpop.permute.xlu0 %2284
  %2288 = vset.pattern.permute.xlu0 0
  %2289 = vperm.xlu0 %2288, %v2239
  %v2290 = vpop.permute.xlu0 %2289
  %2293 = vset.pattern.permute.xlu0 0
  %2294 = vperm.xlu0 %2293, %v2240
  %v2295 = vpop.permute.xlu0 %2294
  %2298 = vset.pattern.permute.xlu0 0
  %2299 = vperm.xlu0 %2298, %v2241
  %v2300 = vpop.permute.xlu0 %2299
  %2303 = vset.pattern.permute.xlu0 0
  %2304 = vperm.xlu0 %2303, %v2242
  %v2305 = vpop.permute.xlu0 %2304
  %2308 = vset.pattern.permute.xlu0 0
  %2309 = vperm.xlu0 %2308, %v2243
  %v2310 = vpop.permute.xlu0 %2309
  %2313 = vset.pattern.permute.xlu0 0
  %2314 = vperm.xlu0 %2313, %v2244
  %v2315 = vpop.permute.xlu0 %2314
  %2318 = vset.pattern.permute.xlu0 0
  %2319 = vperm.xlu0 %2318, %v2245
  %v2320 = vpop.permute.xlu0 %2319
  %2323 = vset.pattern.permute.xlu0 0
  %2324 = vperm.xlu0 %2323, %v2246
  %v2325 = vpop.permute.xlu0 %2324
  %2328 = vset.pattern.permute.xlu0 0
  %2329 = vperm.xlu0 %2328, %v2247
  %v2330 = vpop.permute.xlu0 %2329
  %2333 = vset.pattern.permute.xlu0 0
  %2334 = vperm.xlu0 %2333, %v2248
  %v2335 = vpop.permute.xlu0 %2334
  %2338 = vset.pattern.permute.xlu0 0
  %2339 = vperm.xlu0 %2338, %v2249
  %v2340 = vpop.permute.xlu0 %2339
  %2343 = vset.pattern.permute.xlu0 0
  %2344 = vperm.xlu0 %2343, %v2250
  %v2345 = vpop.permute.xlu0 %2344
  %2348 = vset.pattern.permute.xlu0 0
  %2349 = vperm.xlu0 %2348, %v2251
  %v2350 = vpop.permute.xlu0 %2349
  %2353 = vset.pattern.permute.xlu0 0
  %2354 = vperm.xlu0 %2353, %v2252
  %v2355 = vpop.permute.xlu0 %2354
  %2358 = vset.pattern.permute.xlu0 0
  %2359 = vperm.xlu0 %2358, %v2253
  %v2360 = vpop.permute.xlu0 %2359
  %2363 = vset.pattern.permute.xlu0 0
  %2364 = vperm.xlu0 %2363, %v2254
  %v2365 = vpop.permute.xlu0 %2364
  %2368 = vset.pattern.permute.xlu0 0
  %2369 = vperm.xlu0 %2368, %v2255
  %v2370 = vpop.permute.xlu0 %2369
  %2373 = vset.pattern.permute.xlu0 0
  %2374 = vperm.xlu0 %2373, %v2256
  %v2375 = vpop.permute.xlu0 %2374
  %v2377 = vmul.f32 %v2209, %v2260
  %v2378 = vmul.f32 %v2210, %v2265
  %v2379 = vmul.f32 %v2211, %v2270
  %v2380 = vmul.f32 %v2212, %v2275
  %v2381 = vmul.f32 %v2213, %v2280
  %v2382 = vmul.f32 %v2214, %v2285
  %v2383 = vmul.f32 %v2215, %v2290
  %v2384 = vmul.f32 %v2216, %v2295
  %v2385 = vmul.f32 %v2217, %v2300
  %v2386 = vmul.f32 %v2218, %v2305
  %v2387 = vmul.f32 %v2219, %v2310
  %v2388 = vmul.f32 %v2220, %v2315
  %v2389 = vmul.f32 %v2221, %v2320
  %v2390 = vmul.f32 %v2222, %v2325
  %v2391 = vmul.f32 %v2223, %v2330
  %v2392 = vmul.f32 %v2224, %v2335
  %v2393 = vmul.f32 %v2225, %v2340
  %v2394 = vmul.f32 %v2226, %v2345
  %v2395 = vmul.f32 %v2227, %v2350
  %v2396 = vmul.f32 %v2228, %v2355
  %v2397 = vmul.f32 %v2229, %v2360
  %v2398 = vmul.f32 %v2230, %v2365
  %v2399 = vmul.f32 %v2231, %v2370
  %v2400 = vmul.f32 %v2232, %v2375
  %vm2401 = vcmask 523264
  %v2403 = vsel %vm2401, %v899, 0
  %v2406 = vsel %vm2401, %v901, 0
  %v2409 = vsel %vm2401, %v903, 0
  %v2412 = vsel %vm2401, %v905, 0
  %v2415 = vsel %vm2401, %v907, 0
  %v2418 = vsel %vm2401, %v909, 0
  %v2421 = vsel %vm2401, %v911, 0
  %v2424 = vsel %vm2401, %v913, 0
  %v2427 = vsel %vm2401, %v915, 0
  %v2430 = vsel %vm2401, %v917, 0
  %v2433 = vsel %vm2401, %v919, 0
  %v2436 = vsel %vm2401, %v921, 0
  %2438 = vmatprep.subr.mxu0 0.0
  %2439 = vmatpush1.msra.mxu0 %v2377
  %2440 = vmatprep.subr.mxu0 0.0
  %2441 = vmatpush1.msra.mxu0 %v2378
  %2442 = vmatprep.subr.mxu0 0.0
  %2443 = vmatpush1.msra.mxu0 %v2379
  %2444 = vmatprep.subr.mxu0 0.0
  %2445 = vmatpush1.msra.mxu0 %v2380
  %2446 = vmatprep.subr.mxu0 0.0
  %2447 = vmatpush1.msra.mxu0 %v2381
  %2448 = vmatprep.subr.mxu0 0.0
  %2449 = vmatpush1.msra.mxu0 %v2382
  %2450 = vmatprep.subr.mxu0 0.0
  %2451 = vmatpush1.msra.mxu0 %v2383
  %2452 = vmatprep.subr.mxu0 0.0
  %2453 = vmatpush1.msra.mxu0 %v2384
  %2454 = vmatprep.subr.mxu0 0.0
  %2455 = vmatpush1.msra.mxu0 %v2385
  %2456 = vmatprep.subr.mxu0 0.0
  %2457 = vmatpush1.msra.mxu0 %v2386
  %2458 = vmatprep.subr.mxu0 0.0
  %2459 = vmatpush1.msra.mxu0 %v2387
  %2460 = vmatprep.subr.mxu0 0.0
  %2461 = vmatpush1.msra.mxu0 %v2388
  %2462 = vmatprep.subr.mxu0 0.0
  %2463 = vmatpush1.msra.mxu0 %v2389
  %2464 = vmatprep.subr.mxu0 0.0
  %2465 = vmatpush1.msra.mxu0 %v2390
  %2466 = vmatprep.subr.mxu0 0.0
  %2467 = vmatpush1.msra.mxu0 %v2391
  %2468 = vmatprep.subr.mxu0 0.0
  %2469 = vmatpush1.msra.mxu0 %v2392
  %2470 = vmatprep.subr.mxu0 0.0
  %2471 = vmatpush1.msra.mxu0 %v2393
  %2472 = vmatprep.subr.mxu0 0.0
  %2473 = vmatpush1.msra.mxu0 %v2394
  %2474 = vmatprep.subr.mxu0 0.0
  %2475 = vmatpush1.msra.mxu0 %v2395
  %2476 = vmatprep.subr.mxu0 0.0
  %2477 = vmatpush1.msra.mxu0 %v2396
  %2478 = vmatprep.subr.mxu0 0.0
  %2479 = vmatpush1.msra.mxu0 %v2397
  %2480 = vmatprep.subr.mxu0 0.0
  %2481 = vmatpush1.msra.mxu0 %v2398
  %2482 = vmatprep.subr.mxu0 0.0
  %2483 = vmatpush1.msra.mxu0 %v2399
  %2484 = vmatprep.subr.mxu0 0.0
  %2485 = vmatpush1.msra.mxu0 %v2400
  %2486 = vmatprep.subr.mxu0 0.0
  %2487 = vmatpush1.msra.mxu0 0.0
  %2488 = vmatprep.subr.mxu0 0.0
  %2489 = vmatpush1.msra.mxu0 0.0
  %2490 = vmatprep.subr.mxu0 0.0
  %2491 = vmatpush1.msra.mxu0 0.0
  %2492 = vmatprep.subr.mxu0 0.0
  %2493 = vmatpush1.msra.mxu0 0.0
  %2494 = vmatprep.subr.mxu0 0.0
  %2495 = vmatpush1.msra.mxu0 0.0
  %2496 = vmatprep.subr.mxu0 0.0
  %2497 = vmatpush1.msra.mxu0 0.0
  %2498 = vmatprep.subr.mxu0 0.0
  %2499 = vmatpush1.msra.mxu0 0.0
  %2500 = vmatprep.subr.mxu0 0.0
  %2501 = vmatpush1.msra.mxu0 0.0
  %2502 = vmatprep.mubr.f32.mxu0 %v2403
  %2503 = vmatmul.mubr.f32.gmra.mrb[0].mxu0 %v898
  %v2504 = vpop.f32.mrb[0].mxu0
  %v2505 = vadd.f32 0.0, %v2504
  %v2506 = vpop.f32.mrb[0].mxu0
  %2507 = vmatprep.mubr.f32.mxu0 %v2406
  %2508 = vmatmul.mubr.f32.gmra.mrb[0].mxu0 %v900
  %v2509 = vpop.f32.mrb[0].mxu0
  %v2510 = vadd.f32 0.0, %v2509
  %v2511 = vpop.f32.mrb[0].mxu0
  %2512 = vmatprep.mubr.f32.mxu0 %v2409
  %2513 = vmatmul.mubr.f32.gmra.mrb[0].mxu0 %v902
  %v2514 = vpop.f32.mrb[0].mxu0
  %v2515 = vadd.f32 0.0, %v2514
  %v2516 = vpop.f32.mrb[0].mxu0
  %2517 = vmatprep.mubr.f32.mxu0 %v2412
  %2518 = vmatmul.mubr.f32.gmra.mrb[0].mxu0 %v904
  %v2519 = vpop.f32.mrb[0].mxu0
  %v2520 = vadd.f32 0.0, %v2519
  %v2521 = vpop.f32.mrb[0].mxu0
  %2522 = vmatprep.mubr.f32.mxu0 %v2415
  %2523 = vmatmul.mubr.f32.gmra.mrb[0].mxu0 %v906
  %v2524 = vpop.f32.mrb[0].mxu0
  %v2525 = vadd.f32 0.0, %v2524
  %v2526 = vpop.f32.mrb[0].mxu0
  %2527 = vmatprep.mubr.f32.mxu0 %v2418
  %2528 = vmatmul.mubr.f32.gmra.mrb[0].mxu0 %v908
  %v2529 = vpop.f32.mrb[0].mxu0
  %v2530 = vadd.f32 0.0, %v2529
  %v2531 = vpop.f32.mrb[0].mxu0
  %2532 = vmatprep.mubr.f32.mxu0 %v2421
  %2533 = vmatmul.mubr.f32.gmra.mrb[0].mxu0 %v910
  %v2534 = vpop.f32.mrb[0].mxu0
  %v2535 = vadd.f32 0.0, %v2534
  %v2536 = vpop.f32.mrb[0].mxu0
  %2537 = vmatprep.mubr.f32.mxu0 %v2424
  %2538 = vmatmul.mubr.f32.gmra.mrb[0].mxu0 %v912
  %v2539 = vpop.f32.mrb[0].mxu0
  %v2540 = vadd.f32 0.0, %v2539
  %v2541 = vpop.f32.mrb[0].mxu0
  %2542 = vmatprep.mubr.f32.mxu0 %v2427
  %2543 = vmatmul.mubr.f32.gmra.mrb[0].mxu0 %v914
  %v2544 = vpop.f32.mrb[0].mxu0
  %v2545 = vadd.f32 0.0, %v2544
  %v2546 = vpop.f32.mrb[0].mxu0
  %2547 = vmatprep.mubr.f32.mxu0 %v2430
  %2548 = vmatmul.mubr.f32.gmra.mrb[0].mxu0 %v916
  %v2549 = vpop.f32.mrb[0].mxu0
  %v2550 = vadd.f32 0.0, %v2549
  %v2551 = vpop.f32.mrb[0].mxu0
  %2552 = vmatprep.mubr.f32.mxu0 %v2433
  %2553 = vmatmul.mubr.f32.gmra.mrb[0].mxu0 %v918
  %v2554 = vpop.f32.mrb[0].mxu0
  %v2555 = vadd.f32 0.0, %v2554
  %v2556 = vpop.f32.mrb[0].mxu0
  %2557 = vmatprep.mubr.f32.mxu0 %v2436
  %2558 = vmatmul.mubr.f32.gmra.mrb[0].mxu0 %v920
  %v2559 = vpop.f32.mrb[0].mxu0
  %v2560 = vadd.f32 0.0, %v2559
  %v2561 = vpop.f32.mrb[0].mxu0
  %2562 = vdwg.mxu0
  %v2563 = vmax.f32 %v2505, 0.0
  %v2564 = vmax.f32 %v2510, 0.0
  %v2565 = vmax.f32 %v2515, 0.0
  %v2566 = vmax.f32 %v2520, 0.0
  %v2567 = vmax.f32 %v2525, 0.0
  %v2568 = vmax.f32 %v2530, 0.0
  %v2569 = vmax.f32 %v2535, 0.0
  %v2570 = vmax.f32 %v2540, 0.0
  %v2571 = vmax.f32 %v2545, 0.0
  %v2572 = vmax.f32 %v2550, 0.0
  %v2573 = vmax.f32 %v2555, 0.0
  %v2574 = vmax.f32 %v2560, 0.0
  %v2575 = vld [vmem:[%s14] sm:$0xff]
  %v2576 = vld [vmem:[%s14 + $0x8] sm:$0xff]
  %v2577 = vld [vmem:[%s14 + $0x10] sm:$0xff]
  %v2578 = vld [vmem:[%s14 + $0x18] sm:$0xff]
  %v2579 = vld [vmem:[%s15] sm:$0x1]
  %v2581 = vlaneseq
  %v2582 = vshrl.u32 %v2581, 7
  %v2583 = vsub.s32 0, %v2582
  %v2584 = vrot.slane %v2579, %v2583
  %v2587 = vsel %vm244, %v2563, 0
  %v2590 = vsel %vm244, %v2564, 0
  %v2593 = vsel %vm244, %v2565, 0
  %v2596 = vsel %vm244, %v2566, 0
  %v2599 = vsel %vm244, %v2567, 0
  %v2602 = vsel %vm244, %v2568, 0
  %v2605 = vsel %vm244, %v2569, 0
  %v2608 = vsel %vm244, %v2570, 0
  %v2611 = vsel %vm244, %v2571, 0
  %v2614 = vsel %vm244, %v2572, 0
  %v2617 = vsel %vm244, %v2573, 0
  %v2620 = vsel %vm244, %v2574, 0
  %2622 = vmatprep.subr.mxu0 0.0
  %2623 = vmatpush1.msra.mxu0 %v2575
  %2624 = vmatprep.subr.mxu0 0.0
  %2625 = vmatpush1.msra.mxu0 %v2576
  %2626 = vmatprep.subr.mxu0 0.0
  %2627 = vmatpush1.msra.mxu0 %v2577
  %2628 = vmatprep.subr.mxu0 0.0
  %2629 = vmatpush1.msra.mxu0 %v2578
  %2630 = vmatprep.subr.mxu0 0.0
  %2631 = vmatpush1.msra.mxu0 0.0
  %2632 = vmatprep.subr.mxu0 0.0
  %2633 = vmatpush1.msra.mxu0 0.0
  %2634 = vmatprep.subr.mxu0 0.0
  %2635 = vmatpush1.msra.mxu0 0.0
  %2636 = vmatprep.subr.mxu0 0.0
  %2637 = vmatpush1.msra.mxu0 0.0
  %2638 = vmatprep.subr.mxu0 0.0
  %2639 = vmatpush1.msra.mxu0 0.0
  %2640 = vmatprep.subr.mxu0 0.0
  %2641 = vmatpush1.msra.mxu0 0.0
  %2642 = vmatprep.subr.mxu0 0.0
  %2643 = vmatpush1.msra.mxu0 0.0
  %2644 = vmatprep.subr.mxu0 0.0
  %2645 = vmatpush1.msra.mxu0 0.0
  %2646 = vmatprep.subr.mxu0 0.0
  %2647 = vmatpush1.msra.mxu0 0.0
  %2648 = vmatprep.subr.mxu0 0.0
  %2649 = vmatpush1.msra.mxu0 0.0
  %2650 = vmatprep.subr.mxu0 0.0
  %2651 = vmatpush1.msra.mxu0 0.0
  %2652 = vmatprep.subr.mxu0 0.0
  %2653 = vmatpush1.msra.mxu0 0.0
  %2654 = vmatprep.subr.mxu0 0.0
  %2655 = vmatpush1.msra.mxu0 0.0
  %2656 = vmatprep.subr.mxu0 0.0
  %2657 = vmatpush1.msra.mxu0 0.0
  %2658 = vmatprep.subr.mxu0 0.0
  %2659 = vmatpush1.msra.mxu0 0.0
  %2660 = vmatprep.subr.mxu0 0.0
  %2661 = vmatpush1.msra.mxu0 0.0
  %2662 = vmatprep.subr.mxu0 0.0
  %2663 = vmatpush1.msra.mxu0 0.0
  %2664 = vmatprep.subr.mxu0 0.0
  %2665 = vmatpush1.msra.mxu0 0.0
  %2666 = vmatprep.subr.mxu0 0.0
  %2667 = vmatpush1.msra.mxu0 0.0
  %2668 = vmatprep.subr.mxu0 0.0
  %2669 = vmatpush1.msra.mxu0 0.0
  %2670 = vmatprep.subr.mxu0 0.0
  %2671 = vmatpush1.msra.mxu0 0.0
  %2672 = vmatprep.subr.mxu0 0.0
  %2673 = vmatpush1.msra.mxu0 0.0
  %2674 = vmatprep.subr.mxu0 0.0
  %2675 = vmatpush1.msra.mxu0 0.0
  %2676 = vmatprep.subr.mxu0 0.0
  %2677 = vmatpush1.msra.mxu0 0.0
  %2678 = vmatprep.subr.mxu0 0.0
  %2679 = vmatpush1.msra.mxu0 0.0
  %2680 = vmatprep.subr.mxu0 0.0
  %2681 = vmatpush1.msra.mxu0 0.0
  %2682 = vmatprep.subr.mxu0 0.0
  %2683 = vmatpush1.msra.mxu0 0.0
  %2684 = vmatprep.subr.mxu0 0.0
  %2685 = vmatpush1.msra.mxu0 0.0
  %2686 = vmatprep.mubr.f32.mxu0 0.0
  %2687 = vmatmul.mubr.f32.gmra.mrb[0].mxu0 %v2587
  %v2688 = vpop.f32.mrb[0].mxu0
  %v2689 = vadd.f32 %v2584, %v2688
  %v2690 = vpop.f32.mrb[0].mxu0
  %2691 = vmatprep.mubr.f32.mxu0 0.0
  %2692 = vmatmul.mubr.f32.gmra.mrb[0].mxu0 %v2590
  %v2693 = vpop.f32.mrb[0].mxu0
  %v2694 = vadd.f32 %v2584, %v2693
  %v2695 = vpop.f32.mrb[0].mxu0
  %2696 = vmatprep.mubr.f32.mxu0 0.0
  %2697 = vmatmul.mubr.f32.gmra.mrb[0].mxu0 %v2593
  %v2698 = vpop.f32.mrb[0].mxu0
  %v2699 = vadd.f32 %v2584, %v2698
  %v2700 = vpop.f32.mrb[0].mxu0
  %2701 = vmatprep.mubr.f32.mxu0 0.0
  %2702 = vmatmul.mubr.f32.gmra.mrb[0].mxu0 %v2596
  %v2703 = vpop.f32.mrb[0].mxu0
  %v2704 = vadd.f32 %v2584, %v2703
  %v2705 = vpop.f32.mrb[0].mxu0
  %2706 = vmatprep.mubr.f32.mxu0 0.0
  %2707 = vmatmul.mubr.f32.gmra.mrb[0].mxu0 %v2599
  %v2708 = vpop.f32.mrb[0].mxu0
  %v2709 = vadd.f32 %v2584, %v2708
  %v2710 = vpop.f32.mrb[0].mxu0
  %2711 = vmatprep.mubr.f32.mxu0 0.0
  %2712 = vmatmul.mubr.f32.gmra.mrb[0].mxu0 %v2602
  %v2713 = vpop.f32.mrb[0].mxu0
  %v2714 = vadd.f32 %v2584, %v2713
  %v2715 = vpop.f32.mrb[0].mxu0
  %2716 = vmatprep.mubr.f32.mxu0 0.0
  %2717 = vmatmul.mubr.f32.gmra.mrb[0].mxu0 %v2605
  %v2718 = vpop.f32.mrb[0].mxu0
  %v2719 = vadd.f32 %v2584, %v2718
  %v2720 = vpop.f32.mrb[0].mxu0
  %2721 = vmatprep.mubr.f32.mxu0 0.0
  %2722 = vmatmul.mubr.f32.gmra.mrb[0].mxu0 %v2608
  %v2723 = vpop.f32.mrb[0].mxu0
  %v2724 = vadd.f32 %v2584, %v2723
  %v2725 = vpop.f32.mrb[0].mxu0
  %2726 = vmatprep.mubr.f32.mxu0 0.0
  %2727 = vmatmul.mubr.f32.gmra.mrb[0].mxu0 %v2611
  %v2728 = vpop.f32.mrb[0].mxu0
  %v2729 = vadd.f32 %v2584, %v2728
  %v2730 = vpop.f32.mrb[0].mxu0
  %2731 = vmatprep.mubr.f32.mxu0 0.0
  %2732 = vmatmul.mubr.f32.gmra.mrb[0].mxu0 %v2614
  %v2733 = vpop.f32.mrb[0].mxu0
  %v2734 = vadd.f32 %v2584, %v2733
  %v2735 = vpop.f32.mrb[0].mxu0
  %2736 = vmatprep.mubr.f32.mxu0 0.0
  %2737 = vmatmul.mubr.f32.gmra.mrb[0].mxu0 %v2617
  %v2738 = vpop.f32.mrb[0].mxu0
  %v2739 = vadd.f32 %v2584, %v2738
  %v2740 = vpop.f32.mrb[0].mxu0
  %2741 = vmatprep.mubr.f32.mxu0 0.0
  %2742 = vmatmul.mubr.f32.gmra.mrb[0].mxu0 %v2620
  %v2743 = vpop.f32.mrb[0].mxu0
  %v2744 = vadd.f32 %v2584, %v2743
  %v2745 = vpop.f32.mrb[0].mxu0
  %2746 = vdwg.mxu0
  %v2747 = vxor.u32 %v2689, 2147483648
  %v2748 = vxor.u32 %v2694, 2147483648
  %v2749 = vxor.u32 %v2699, 2147483648
  %v2750 = vxor.u32 %v2704, 2147483648
  %v2751 = vxor.u32 %v2709, 2147483648
  %v2752 = vxor.u32 %v2714, 2147483648
  %v2753 = vxor.u32 %v2719, 2147483648
  %v2754 = vxor.u32 %v2724, 2147483648
  %v2755 = vxor.u32 %v2729, 2147483648
  %v2756 = vxor.u32 %v2734, 2147483648
  %v2757 = vxor.u32 %v2739, 2147483648
  %v2758 = vxor.u32 %v2744, 2147483648
  %v2759 = vmul.f32 %v2747, 1.442695
  %v2760 = vpow.pop %v2759
  %v2761 = vmul.f32 %v2748, 1.442695
  %v2762 = vpow.pop %v2761
  %v2763 = vmul.f32 %v2749, 1.442695
  %v2764 = vpow.pop %v2763
  %v2765 = vmul.f32 %v2750, 1.442695
  %v2766 = vpow.pop %v2765
  %v2767 = vmul.f32 %v2751, 1.442695
  %v2768 = vpow.pop %v2767
  %v2769 = vmul.f32 %v2752, 1.442695
  %v2770 = vpow.pop %v2769
  %v2771 = vmul.f32 %v2753, 1.442695
  %v2772 = vpow.pop %v2771
  %v2773 = vmul.f32 %v2754, 1.442695
  %v2774 = vpow.pop %v2773
  %v2775 = vmul.f32 %v2755, 1.442695
  %v2776 = vpow.pop %v2775
  %v2777 = vmul.f32 %v2756, 1.442695
  %v2778 = vpow.pop %v2777
  %v2779 = vmul.f32 %v2757, 1.442695
  %v2780 = vpow.pop %v2779
  %v2781 = vmul.f32 %v2758, 1.442695
  %v2782 = vpow.pop %v2781
  %v2783 = vadd.f32 %v2760, 1.0
  %v2784 = vadd.f32 %v2762, 1.0
  %v2785 = vadd.f32 %v2764, 1.0
  %v2786 = vadd.f32 %v2766, 1.0
  %v2787 = vadd.f32 %v2768, 1.0
  %v2788 = vadd.f32 %v2770, 1.0
  %v2789 = vadd.f32 %v2772, 1.0
  %v2790 = vadd.f32 %v2774, 1.0
  %v2791 = vadd.f32 %v2776, 1.0
  %v2792 = vadd.f32 %v2778, 1.0
  %v2793 = vadd.f32 %v2780, 1.0
  %v2794 = vadd.f32 %v2782, 1.0
  %v2795 = vrcp.pop %v2783
  %v2796 = vmul.f32 1.0, %v2795
  %v2797 = vrcp.pop %v2784
  %v2798 = vmul.f32 1.0, %v2797
  %v2799 = vrcp.pop %v2785
  %v2800 = vmul.f32 1.0, %v2799
  %v2801 = vrcp.pop %v2786
  %v2802 = vmul.f32 1.0, %v2801
  %v2803 = vrcp.pop %v2787
  %v2804 = vmul.f32 1.0, %v2803
  %v2805 = vrcp.pop %v2788
  %v2806 = vmul.f32 1.0, %v2805
  %v2807 = vrcp.pop %v2789
  %v2808 = vmul.f32 1.0, %v2807
  %v2809 = vrcp.pop %v2790
  %v2810 = vmul.f32 1.0, %v2809
  %v2811 = vrcp.pop %v2791
  %v2812 = vmul.f32 1.0, %v2811
  %v2813 = vrcp.pop %v2792
  %v2814 = vmul.f32 1.0, %v2813
  %v2815 = vrcp.pop %v2793
  %v2816 = vmul.f32 1.0, %v2815
  %v2817 = vrcp.pop %v2794
  %v2818 = vmul.f32 1.0, %v2817
  %v2819 = vmax.f32 %v2796, 1e-07
  %v2820 = vmax.f32 %v2798, 1e-07
  %v2821 = vmax.f32 %v2800, 1e-07
  %v2822 = vmax.f32 %v2802, 1e-07
  %v2823 = vmax.f32 %v2804, 1e-07
  %v2824 = vmax.f32 %v2806, 1e-07
  %v2825 = vmax.f32 %v2808, 1e-07
  %v2826 = vmax.f32 %v2810, 1e-07
  %v2827 = vmax.f32 %v2812, 1e-07
  %v2828 = vmax.f32 %v2814, 1e-07
  %v2829 = vmax.f32 %v2816, 1e-07
  %v2830 = vmax.f32 %v2818, 1e-07
  %v2831 = vmin.f32 %v2819, 1e+10
  %v2832 = vmin.f32 %v2820, 1e+10
  %v2833 = vmin.f32 %v2821, 1e+10
  %v2834 = vmin.f32 %v2822, 1e+10
  %v2835 = vmin.f32 %v2823, 1e+10
  %v2836 = vmin.f32 %v2824, 1e+10
  %v2837 = vmin.f32 %v2825, 1e+10
  %v2838 = vmin.f32 %v2826, 1e+10
  %v2839 = vmin.f32 %v2827, 1e+10
  %v2840 = vmin.f32 %v2828, 1e+10
  %v2841 = vmin.f32 %v2829, 1e+10
  %v2842 = vmin.f32 %v2830, 1e+10
  %2855 = vrot.lane.b32.xlu0 %v2689, 127
  %v2856 = vpop.permute.xlu0 %2855
  %2857 = vrot.lane.b32.xlu0 %v2694, 127
  %v2858 = vpop.permute.xlu0 %2857
  %2859 = vrot.lane.b32.xlu0 %v2699, 127
  %v2860 = vpop.permute.xlu0 %2859
  %2861 = vrot.lane.b32.xlu0 %v2704, 127
  %v2862 = vpop.permute.xlu0 %2861
  %2863 = vrot.lane.b32.xlu0 %v2709, 127
  %v2864 = vpop.permute.xlu0 %2863
  %2865 = vrot.lane.b32.xlu0 %v2714, 127
  %v2866 = vpop.permute.xlu0 %2865
  %2867 = vrot.lane.b32.xlu0 %v2719, 127
  %v2868 = vpop.permute.xlu0 %2867
  %2869 = vrot.lane.b32.xlu0 %v2724, 127
  %v2870 = vpop.permute.xlu0 %2869
  %2871 = vrot.lane.b32.xlu0 %v2729, 127
  %v2872 = vpop.permute.xlu0 %2871
  %2873 = vrot.lane.b32.xlu0 %v2734, 127
  %v2874 = vpop.permute.xlu0 %2873
  %2875 = vrot.lane.b32.xlu0 %v2739, 127
  %v2876 = vpop.permute.xlu0 %2875
  %2877 = vrot.lane.b32.xlu0 %v2744, 127
  %v2878 = vpop.permute.xlu0 %2877
  %vm2891 = vcmask 7168
  %v2892 = vsel %vm2891, %v2856, 0.0
  %v2893 = vsel %vm2891, %v2858, 0.0
  %v2894 = vadd.f32 %v2892, %v2893
  %v2895 = vsel %vm2891, %v2860, 0.0
  %v2896 = vadd.f32 %v2894, %v2895
  %v2897 = vsel %vm2891, %v2862, 0.0
  %v2898 = vadd.f32 %v2896, %v2897
  %v2899 = vsel %vm2891, %v2864, 0.0
  %v2900 = vadd.f32 %v2898, %v2899
  %v2901 = vsel %vm2891, %v2866, 0.0
  %v2902 = vadd.f32 %v2900, %v2901
  %v2903 = vsel %vm2891, %v2868, 0.0
  %v2904 = vadd.f32 %v2902, %v2903
  %v2905 = vsel %vm2891, %v2870, 0.0
  %v2906 = vadd.f32 %v2904, %v2905
  %v2907 = vsel %vm2891, %v2872, 0.0
  %v2908 = vadd.f32 %v2906, %v2907
  %v2909 = vsel %vm2891, %v2874, 0.0
  %v2910 = vadd.f32 %v2908, %v2909
  %v2911 = vsel %vm2891, %v2876, 0.0
  %v2912 = vadd.f32 %v2910, %v2911
  %v2913 = vsel %vm2891, %v2878, 0.0
  %v2914 = vadd.f32 %v2912, %v2913
  %2915 = vadd.xlane.f32.xlu0 %v2914
  %v2916 = vpop.xlane.xlu0 %2915
  %v2917 = vrot.slane %v2916, 4
  %v2918 = vadd.f32 %v2916, %v2917
  %v2919 = vrot.slane %v2918, 2
  %v2920 = vadd.f32 %v2918, %v2919
  %v2921 = vrot.slane %v2920, 1
  %v2922 = vadd.f32 %v2920, %v2921
  %s2923 = vtos %v2922
  %v2924 = vstv %s2923
  %v2925 = vmul.f32 %v2924, 0.010416667
  %2938 = vrot.lane.b32.xlu0 %v2796, 126
  %v2939 = vpop.permute.xlu0 %2938
  %2940 = vrot.lane.b32.xlu0 %v2798, 126
  %v2941 = vpop.permute.xlu0 %2940
  %2942 = vrot.lane.b32.xlu0 %v2800, 126
  %v2943 = vpop.permute.xlu0 %2942
  %2944 = vrot.lane.b32.xlu0 %v2802, 126
  %v2945 = vpop.permute.xlu0 %2944
  %2946 = vrot.lane.b32.xlu0 %v2804, 126
  %v2947 = vpop.permute.xlu0 %2946
  %2948 = vrot.lane.b32.xlu0 %v2806, 126
  %v2949 = vpop.permute.xlu0 %2948
  %2950 = vrot.lane.b32.xlu0 %v2808, 126
  %v2951 = vpop.permute.xlu0 %2950
  %2952 = vrot.lane.b32.xlu0 %v2810, 126
  %v2953 = vpop.permute.xlu0 %2952
  %2954 = vrot.lane.b32.xlu0 %v2812, 126
  %v2955 = vpop.permute.xlu0 %2954
  %2956 = vrot.lane.b32.xlu0 %v2814, 126
  %v2957 = vpop.permute.xlu0 %2956
  %2958 = vrot.lane.b32.xlu0 %v2816, 126
  %v2959 = vpop.permute.xlu0 %2958
  %2960 = vrot.lane.b32.xlu0 %v2818, 126
  %v2961 = vpop.permute.xlu0 %2960
  %vm2974 = vcmask 130048
  %2975 = vst.msk [vmem:[%s17] sm:$0xff] %vm2974, %v2939
  %2976 = vst.msk [vmem:[%s17 + $0x8] sm:$0xff] %vm2974, %v2941
  %2977 = vst.msk [vmem:[%s17 + $0x10] sm:$0xff] %vm2974, %v2943
  %2978 = vst.msk [vmem:[%s17 + $0x18] sm:$0xff] %vm2974, %v2945
  %2979 = vst.msk [vmem:[%s17 + $0x20] sm:$0xff] %vm2974, %v2947
  %2980 = vst.msk [vmem:[%s17 + $0x28] sm:$0xff] %vm2974, %v2949
  %2981 = vst.msk [vmem:[%s17 + $0x30] sm:$0xff] %vm2974, %v2951
  %2982 = vst.msk [vmem:[%s17 + $0x38] sm:$0xff] %vm2974, %v2953
  %2983 = vst.msk [vmem:[%s17 + $0x40] sm:$0xff] %vm2974, %v2955
  %2984 = vst.msk [vmem:[%s17 + $0x48] sm:$0xff] %vm2974, %v2957
  %2985 = vst.msk [vmem:[%s17 + $0x50] sm:$0xff] %vm2974, %v2959
  %2986 = vst.msk [vmem:[%s17 + $0x58] sm:$0xff] %vm2974, %v2961
  %v2987 = vld [vmem:[%s7] sm:$0xff]
  %v2988 = vld [vmem:[%s7 + $0x8] sm:$0xff]
  %v2989 = vld [vmem:[%s7 + $0x10] sm:$0xff]
  %v2990 = vld [vmem:[%s7 + $0x18] sm:$0xff]
  %v2991 = vld [vmem:[%s7 + $0x20] sm:$0xff]
  %v2992 = vld [vmem:[%s7 + $0x28] sm:$0xff]
  %v2993 = vld [vmem:[%s7 + $0x30] sm:$0xff]
  %v2994 = vld [vmem:[%s7 + $0x38] sm:$0xff]
  %v2995 = vlog2.pop %v2831
  %v2996 = vmul.f32 %v2995, 0.6931472
  %v2997 = vlog2.pop %v2832
  %v2998 = vmul.f32 %v2997, 0.6931472
  %v2999 = vlog2.pop %v2833
  %v3000 = vmul.f32 %v2999, 0.6931472
  %v3001 = vlog2.pop %v2834
  %v3002 = vmul.f32 %v3001, 0.6931472
  %v3003 = vlog2.pop %v2835
  %v3004 = vmul.f32 %v3003, 0.6931472
  %v3005 = vlog2.pop %v2836
  %v3006 = vmul.f32 %v3005, 0.6931472
  %v3007 = vlog2.pop %v2837
  %v3008 = vmul.f32 %v3007, 0.6931472
  %v3009 = vlog2.pop %v2838
  %v3010 = vmul.f32 %v3009, 0.6931472
  %v3011 = vmul.f32 %v2987, %v2996
  %v3012 = vmul.f32 %v2988, %v2998
  %v3013 = vmul.f32 %v2989, %v3000
  %v3014 = vmul.f32 %v2990, %v3002
  %v3015 = vmul.f32 %v2991, %v3004
  %v3016 = vmul.f32 %v2992, %v3006
  %v3017 = vmul.f32 %v2993, %v3008
  %v3018 = vmul.f32 %v2994, %v3010
  %v3019 = vsel %vm2891, %v3011, 0.0
  %v3020 = vsel %vm2891, %v3012, 0.0
  %v3021 = vadd.f32 %v3019, %v3020
  %v3022 = vsel %vm2891, %v3013, 0.0
  %v3023 = vadd.f32 %v3021, %v3022
  %v3024 = vsel %vm2891, %v3014, 0.0
  %v3025 = vadd.f32 %v3023, %v3024
  %v3026 = vsel %vm2891, %v3015, 0.0
  %v3027 = vadd.f32 %v3025, %v3026
  %v3028 = vsel %vm2891, %v3016, 0.0
  %v3029 = vadd.f32 %v3027, %v3028
  %v3030 = vsel %vm2891, %v3017, 0.0
  %v3031 = vadd.f32 %v3029, %v3030
  %v3032 = vsel %vm2891, %v3018, 0.0
  %v3033 = vadd.f32 %v3031, %v3032
  %3034 = vadd.xlane.f32.xlu0 %v3033
  %v3035 = vpop.xlane.xlu0 %3034
  %v3036 = vrot.slane %v3035, 4
  %v3037 = vadd.f32 %v3035, %v3036
  %v3038 = vrot.slane %v3037, 2
  %v3039 = vadd.f32 %v3037, %v3038
  %v3040 = vrot.slane %v3039, 1
  %v3041 = vadd.f32 %v3039, %v3040
  %s3042 = vtos %v3041
  %v3043 = vstv %s3042
  %v3044 = vsub.f32 0.0, %v3043
  %v3045 = vmul.f32 %v3044, 1.442695
  %v3046 = vld [vmem:[%s8] sm:$0xff]
  %v3048 = vsel %vm2401, %v3046, 0
  %3050 = vmatprep.subr.mxu0 0.0
  %3051 = vmatpush1.msra.mxu0 %v2831
  %3052 = vmatprep.subr.mxu0 0.0
  %3053 = vmatpush1.msra.mxu0 %v2832
  %3054 = vmatprep.subr.mxu0 0.0
  %3055 = vmatpush1.msra.mxu0 %v2833
  %3056 = vmatprep.subr.mxu0 0.0
  %3057 = vmatpush1.msra.mxu0 %v2834
  %3058 = vmatprep.subr.mxu0 0.0
  %3059 = vmatpush1.msra.mxu0 %v2835
  %3060 = vmatprep.subr.mxu0 0.0
  %3061 = vmatpush1.msra.mxu0 %v2836
  %3062 = vmatprep.subr.mxu0 0.0
  %3063 = vmatpush1.msra.mxu0 %v2837
  %3064 = vmatprep.subr.mxu0 0.0
  %3065 = vmatpush1.msra.mxu0 %v2838
  %3066 = vmatprep.subr.mxu0 0.0
  %3067 = vmatpush1.msra.mxu0 0.0
  %3068 = vmatprep.subr.mxu0 0.0
  %3069 = vmatpush1.msra.mxu0 0.0
  %3070 = vmatprep.subr.mxu0 0.0
  %3071 = vmatpush1.msra.mxu0 0.0
  %3072 = vmatprep.subr.mxu0 0.0
  %3073 = vmatpush1.msra.mxu0 0.0
  %3074 = vmatprep.subr.mxu0 0.0
  %3075 = vmatpush1.msra.mxu0 0.0
  %3076 = vmatprep.subr.mxu0 0.0
  %3077 = vmatpush1.msra.mxu0 0.0
  %3078 = vmatprep.subr.mxu0 0.0
  %3079 = vmatpush1.msra.mxu0 0.0
  %3080 = vmatprep.subr.mxu0 0.0
  %3081 = vmatpush1.msra.mxu0 0.0
  %3082 = vmatprep.subr.mxu0 0.0
  %3083 = vmatpush1.msra.mxu0 0.0
  %3084 = vmatprep.subr.mxu0 0.0
  %3085 = vmatpush1.msra.mxu0 0.0
  %3086 = vmatprep.subr.mxu0 0.0
  %3087 = vmatpush1.msra.mxu0 0.0
  %3088 = vmatprep.subr.mxu0 0.0
  %3089 = vmatpush1.msra.mxu0 0.0
  %3090 = vmatprep.subr.mxu0 0.0
  %3091 = vmatpush1.msra.mxu0 0.0
  %3092 = vmatprep.subr.mxu0 0.0
  %3093 = vmatpush1.msra.mxu0 0.0
  %3094 = vmatprep.subr.mxu0 0.0
  %3095 = vmatpush1.msra.mxu0 0.0
  %3096 = vmatprep.subr.mxu0 0.0
  %3097 = vmatpush1.msra.mxu0 0.0
  %3098 = vmatprep.subr.mxu0 0.0
  %3099 = vmatpush1.msra.mxu0 0.0
  %3100 = vmatprep.subr.mxu0 0.0
  %3101 = vmatpush1.msra.mxu0 0.0
  %3102 = vmatprep.subr.mxu0 0.0
  %3103 = vmatpush1.msra.mxu0 0.0
  %3104 = vmatprep.subr.mxu0 0.0
  %3105 = vmatpush1.msra.mxu0 0.0
  %3106 = vmatprep.subr.mxu0 0.0
  %3107 = vmatpush1.msra.mxu0 0.0
  %3108 = vmatprep.subr.mxu0 0.0
  %3109 = vmatpush1.msra.mxu0 0.0
  %3110 = vmatprep.subr.mxu0 0.0
  %3111 = vmatpush1.msra.mxu0 0.0
  %3112 = vmatprep.subr.mxu0 0.0
  %3113 = vmatpush1.msra.mxu0 0.0
  %3114 = vmatprep.mubr.f32.mxu0 0.0
  %3115 = vmatmul.mubr.f32.gmra.mrb[0].mxu0 %v3048
  %v3116 = vpop.f32.mrb[0].mxu0
  %v3117 = vadd.f32 0.0, %v3116
  %v3118 = vpop.f32.mrb[0].mxu0
  %3119 = vdwg.mxu0
  %v3120 = vld [vmem:[%s9] sm:$0xff]
  %v3122 = vsel %vm2401, %v3120, 0
  %3124 = vmatprep.subr.mxu0 0.0
  %3125 = vmatpush1.msra.mxu0 %v2831
  %3126 = vmatprep.subr.mxu0 0.0
  %3127 = vmatpush1.msra.mxu0 %v2832
  %3128 = vmatprep.subr.mxu0 0.0
  %3129 = vmatpush1.msra.mxu0 %v2833
  %3130 = vmatprep.subr.mxu0 0.0
  %3131 = vmatpush1.msra.mxu0 %v2834
  %3132 = vmatprep.subr.mxu0 0.0
  %3133 = vmatpush1.msra.mxu0 %v2835
  %3134 = vmatprep.subr.mxu0 0.0
  %3135 = vmatpush1.msra.mxu0 %v2836
  %3136 = vmatprep.subr.mxu0 0.0
  %3137 = vmatpush1.msra.mxu0 %v2837
  %3138 = vmatprep.subr.mxu0 0.0
  %3139 = vmatpush1.msra.mxu0 %v2838
  %3140 = vmatprep.subr.mxu0 0.0
  %3141 = vmatpush1.msra.mxu0 0.0
  %3142 = vmatprep.subr.mxu0 0.0
  %3143 = vmatpush1.msra.mxu0 0.0
  %3144 = vmatprep.subr.mxu0 0.0
  %3145 = vmatpush1.msra.mxu0 0.0
  %3146 = vmatprep.subr.mxu0 0.0
  %3147 = vmatpush1.msra.mxu0 0.0
  %3148 = vmatprep.subr.mxu0 0.0
  %3149 = vmatpush1.msra.mxu0 0.0
  %3150 = vmatprep.subr.mxu0 0.0
  %3151 = vmatpush1.msra.mxu0 0.0
  %3152 = vmatprep.subr.mxu0 0.0
  %3153 = vmatpush1.msra.mxu0 0.0
  %3154 = vmatprep.subr.mxu0 0.0
  %3155 = vmatpush1.msra.mxu0 0.0
  %3156 = vmatprep.subr.mxu0 0.0
  %3157 = vmatpush1.msra.mxu0 0.0
  %3158 = vmatprep.subr.mxu0 0.0
  %3159 = vmatpush1.msra.mxu0 0.0
  %3160 = vmatprep.subr.mxu0 0.0
  %3161 = vmatpush1.msra.mxu0 0.0
  %3162 = vmatprep.subr.mxu0 0.0
  %3163 = vmatpush1.msra.mxu0 0.0
  %3164 = vmatprep.subr.mxu0 0.0
  %3165 = vmatpush1.msra.mxu0 0.0
  %3166 = vmatprep.subr.mxu0 0.0
  %3167 = vmatpush1.msra.mxu0 0.0
  %3168 = vmatprep.subr.mxu0 0.0
  %3169 = vmatpush1.msra.mxu0 0.0
  %3170 = vmatprep.subr.mxu0 0.0
  %3171 = vmatpush1.msra.mxu0 0.0
  %3172 = vmatprep.subr.mxu0 0.0
  %3173 = vmatpush1.msra.mxu0 0.0
  %3174 = vmatprep.subr.mxu0 0.0
  %3175 = vmatpush1.msra.mxu0 0.0
  %3176 = vmatprep.subr.mxu0 0.0
  %3177 = vmatpush1.msra.mxu0 0.0
  %3178 = vmatprep.subr.mxu0 0.0
  %3179 = vmatpush1.msra.mxu0 0.0
  %3180 = vmatprep.subr.mxu0 0.0
  %3181 = vmatpush1.msra.mxu0 0.0
  %3182 = vmatprep.subr.mxu0 0.0
  %3183 = vmatpush1.msra.mxu0 0.0
  %3184 = vmatprep.subr.mxu0 0.0
  %3185 = vmatpush1.msra.mxu0 0.0
  %3186 = vmatprep.subr.mxu0 0.0
  %3187 = vmatpush1.msra.mxu0 0.0
  %3188 = vmatprep.mubr.f32.mxu0 0.0
  %3189 = vmatmul.mubr.f32.gmra.mrb[0].mxu0 %v3122
  %v3190 = vpop.f32.mrb[0].mxu0
  %v3191 = vadd.f32 0.0, %v3190
  %v3192 = vpop.f32.mrb[0].mxu0
  %3193 = vdwg.mxu0
  %v3194 = vsub.f32 %v3117, 1.0
  %v3195 = vmul.f32 %v3194, %v3194
  %v3196 = vsel %vm2891, %v3195, 0.0
  %3197 = vadd.xlane.f32.xlu0 %v3196
  %v3198 = vpop.xlane.xlu0 %3197
  %v3199 = vrot.slane %v3198, 4
  %v3200 = vadd.f32 %v3198, %v3199
  %v3201 = vrot.slane %v3200, 2
  %v3202 = vadd.f32 %v3200, %v3201
  %v3203 = vrot.slane %v3202, 1
  %v3204 = vadd.f32 %v3202, %v3203
  %s3205 = vtos %v3204
  %v3206 = vstv %s3205
  %v3207 = vsub.f32 %v3191, 1.0
  %v3208 = vmul.f32 %v3207, %v3207
  %v3209 = vsel %vm2891, %v3208, 0.0
  %3210 = vadd.xlane.f32.xlu0 %v3209
  %v3211 = vpop.xlane.xlu0 %3210
  %v3212 = vrot.slane %v3211, 4
  %v3213 = vadd.f32 %v3211, %v3212
  %v3214 = vrot.slane %v3213, 2
  %v3215 = vadd.f32 %v3213, %v3214
  %v3216 = vrot.slane %v3215, 1
  %v3217 = vadd.f32 %v3215, %v3216
  %s3218 = vtos %v3217
  %v3219 = vstv %s3218
  %v3220 = vadd.f32 %v3206, %v3219
  %v3221 = vmul.f32 %v2831, %v2831
  %v3222 = vmul.f32 %v2832, %v2832
  %v3223 = vmul.f32 %v2833, %v2833
  %v3224 = vmul.f32 %v2834, %v2834
  %v3225 = vmul.f32 %v2835, %v2835
  %v3226 = vmul.f32 %v2836, %v2836
  %v3227 = vmul.f32 %v2837, %v2837
  %v3228 = vmul.f32 %v2838, %v2838
  %v3229 = vsel %vm2891, %v3221, 0.0
  %v3230 = vsel %vm2891, %v3222, 0.0
  %v3231 = vadd.f32 %v3229, %v3230
  %v3232 = vsel %vm2891, %v3223, 0.0
  %v3233 = vadd.f32 %v3231, %v3232
  %v3234 = vsel %vm2891, %v3224, 0.0
  %v3235 = vadd.f32 %v3233, %v3234
  %v3236 = vsel %vm2891, %v3225, 0.0
  %v3237 = vadd.f32 %v3235, %v3236
  %v3238 = vsel %vm2891, %v3226, 0.0
  %v3239 = vadd.f32 %v3237, %v3238
  %v3240 = vsel %vm2891, %v3227, 0.0
  %v3241 = vadd.f32 %v3239, %v3240
  %v3242 = vsel %vm2891, %v3228, 0.0
  %v3243 = vadd.f32 %v3241, %v3242
  %3244 = vadd.xlane.f32.xlu0 %v3243
  %v3245 = vpop.xlane.xlu0 %3244
  %v3246 = vrot.slane %v3245, 4
  %v3247 = vadd.f32 %v3245, %v3246
  %v3248 = vrot.slane %v3247, 2
  %v3249 = vadd.f32 %v3247, %v3248
  %v3250 = vrot.slane %v3249, 1
  %v3251 = vadd.f32 %v3249, %v3250
  %s3252 = vtos %v3251
  %v3253 = vstv %s3252
  %v3254 = vmul.f32 %v3117, %v3117
  %v3255 = vsel %vm2891, %v3254, 0.0
  %3256 = vadd.xlane.f32.xlu0 %v3255
  %v3257 = vpop.xlane.xlu0 %3256
  %v3258 = vrot.slane %v3257, 4
  %v3259 = vadd.f32 %v3257, %v3258
  %v3260 = vrot.slane %v3259, 2
  %v3261 = vadd.f32 %v3259, %v3260
  %v3262 = vrot.slane %v3261, 1
  %v3263 = vadd.f32 %v3261, %v3262
  %s3264 = vtos %v3263
  %v3265 = vstv %s3264
  %v3266 = vmul.f32 %v3191, %v3191
  %v3267 = vsel %vm2891, %v3266, 0.0
  %3268 = vadd.xlane.f32.xlu0 %v3267
  %v3269 = vpop.xlane.xlu0 %3268
  %v3270 = vrot.slane %v3269, 4
  %v3271 = vadd.f32 %v3269, %v3270
  %v3272 = vrot.slane %v3271, 2
  %v3273 = vadd.f32 %v3271, %v3272
  %v3274 = vrot.slane %v3273, 1
  %v3275 = vadd.f32 %v3273, %v3274
  %s3276 = vtos %v3275
  %v3277 = vstv %s3276
  %v3278 = vadd.f32 %v3265, %v3277
  %v3279 = vmul.f32 %v3253, 2.0
  %v3280 = vsub.f32 %v3278, %v3279
  %3281 = vmatprep.subr.mxu0 0.0
  %3282 = vmatpush1.msra.mxu0 %v2831
  %3283 = vmatprep.subr.mxu0 0.0
  %3284 = vmatpush1.msra.mxu0 %v2832
  %3285 = vmatprep.subr.mxu0 0.0
  %3286 = vmatpush1.msra.mxu0 %v2833
  %3287 = vmatprep.subr.mxu0 0.0
  %3288 = vmatpush1.msra.mxu0 %v2834
  %3289 = vmatprep.subr.mxu0 0.0
  %3290 = vmatpush1.msra.mxu0 %v2835
  %3291 = vmatprep.subr.mxu0 0.0
  %3292 = vmatpush1.msra.mxu0 %v2836
  %3293 = vmatprep.subr.mxu0 0.0
  %3294 = vmatpush1.msra.mxu0 %v2837
  %3295 = vmatprep.subr.mxu0 0.0
  %3296 = vmatpush1.msra.mxu0 %v2838
  %3297 = vmatprep.subr.mxu0 0.0
  %3298 = vmatpush1.msra.mxu0 %v2839
  %3299 = vmatprep.subr.mxu0 0.0
  %3300 = vmatpush1.msra.mxu0 %v2840
  %3301 = vmatprep.subr.mxu0 0.0
  %3302 = vmatpush1.msra.mxu0 %v2841
  %3303 = vmatprep.subr.mxu0 0.0
  %3304 = vmatpush1.msra.mxu0 %v2842
  %3305 = vmatprep.subr.mxu0 0.0
  %3306 = vmatpush1.msra.mxu0 0.0
  %3307 = vmatprep.subr.mxu0 0.0
  %3308 = vmatpush1.msra.mxu0 0.0
  %3309 = vmatprep.subr.mxu0 0.0
  %3310 = vmatpush1.msra.mxu0 0.0
  %3311 = vmatprep.subr.mxu0 0.0
  %3312 = vmatpush1.msra.mxu0 0.0
  %3313 = vmatprep.subr.mxu0 0.0
  %3314 = vmatpush1.msra.mxu0 0.0
  %3315 = vmatprep.subr.mxu0 0.0
  %3316 = vmatpush1.msra.mxu0 0.0
  %3317 = vmatprep.subr.mxu0 0.0
  %3318 = vmatpush1.msra.mxu0 0.0
  %3319 = vmatprep.subr.mxu0 0.0
  %3320 = vmatpush1.msra.mxu0 0.0
  %3321 = vmatprep.subr.mxu0 0.0
  %3322 = vmatpush1.msra.mxu0 0.0
  %3323 = vmatprep.subr.mxu0 0.0
  %3324 = vmatpush1.msra.mxu0 0.0
  %3325 = vmatprep.subr.mxu0 0.0
  %3326 = vmatpush1.msra.mxu0 0.0
  %3327 = vmatprep.subr.mxu0 0.0
  %3328 = vmatpush1.msra.mxu0 0.0
  %3329 = vmatprep.subr.mxu0 0.0
  %3330 = vmatpush1.msra.mxu0 0.0
  %3331 = vmatprep.subr.mxu0 0.0
  %3332 = vmatpush1.msra.mxu0 0.0
  %3333 = vmatprep.subr.mxu0 0.0
  %3334 = vmatpush1.msra.mxu0 0.0
  %3335 = vmatprep.subr.mxu0 0.0
  %3336 = vmatpush1.msra.mxu0 0.0
  %3337 = vmatprep.subr.mxu0 0.0
  %3338 = vmatpush1.msra.mxu0 0.0
  %3339 = vmatprep.subr.mxu0 0.0
  %3340 = vmatpush1.msra.mxu0 0.0
  %3341 = vmatprep.subr.mxu0 0.0
  %3342 = vmatpush1.msra.mxu0 0.0
  %3343 = vmatprep.subr.mxu0 0.0
  %3344 = vmatpush1.msra.mxu0 0.0
  %3345 = vmatprep.mubr.f32.mxu0 0.0
  %3346 = vmatmul.mubr.f32.gmra.mrb[0].mxu0 %v924
  %v3347 = vpop.f32.mrb[0].mxu0
  %v3348 = vadd.f32 0.0, %v3347
  %v3349 = vpop.f32.mrb[0].mxu0
  %3350 = vmatprep.mubr.f32.mxu0 0.0
  %3351 = vmatmul.mubr.f32.gmra.mrb[0].mxu0 %v927
  %v3352 = vpop.f32.mrb[0].mxu0
  %v3353 = vadd.f32 0.0, %v3352
  %v3354 = vpop.f32.mrb[0].mxu0
  %3355 = vmatprep.mubr.f32.mxu0 0.0
  %3356 = vmatmul.mubr.f32.gmra.mrb[0].mxu0 %v930
  %v3357 = vpop.f32.mrb[0].mxu0
  %v3358 = vadd.f32 0.0, %v3357
  %v3359 = vpop.f32.mrb[0].mxu0
  %3360 = vmatprep.mubr.f32.mxu0 0.0
  %3361 = vmatmul.mubr.f32.gmra.mrb[0].mxu0 %v933
  %v3362 = vpop.f32.mrb[0].mxu0
  %v3363 = vadd.f32 0.0, %v3362
  %v3364 = vpop.f32.mrb[0].mxu0
  %3365 = vmatprep.mubr.f32.mxu0 0.0
  %3366 = vmatmul.mubr.f32.gmra.mrb[0].mxu0 %v936
  %v3367 = vpop.f32.mrb[0].mxu0
  %v3368 = vadd.f32 0.0, %v3367
  %v3369 = vpop.f32.mrb[0].mxu0
  %3370 = vmatprep.mubr.f32.mxu0 0.0
  %3371 = vmatmul.mubr.f32.gmra.mrb[0].mxu0 %v939
  %v3372 = vpop.f32.mrb[0].mxu0
  %v3373 = vadd.f32 0.0, %v3372
  %v3374 = vpop.f32.mrb[0].mxu0
  %3375 = vmatprep.mubr.f32.mxu0 0.0
  %3376 = vmatmul.mubr.f32.gmra.mrb[0].mxu0 %v942
  %v3377 = vpop.f32.mrb[0].mxu0
  %v3378 = vadd.f32 0.0, %v3377
  %v3379 = vpop.f32.mrb[0].mxu0
  %3380 = vmatprep.mubr.f32.mxu0 0.0
  %3381 = vmatmul.mubr.f32.gmra.mrb[0].mxu0 %v945
  %v3382 = vpop.f32.mrb[0].mxu0
  %v3383 = vadd.f32 0.0, %v3382
  %v3384 = vpop.f32.mrb[0].mxu0
  %3385 = vmatprep.mubr.f32.mxu0 0.0
  %3386 = vmatmul.mubr.f32.gmra.mrb[0].mxu0 %v948
  %v3387 = vpop.f32.mrb[0].mxu0
  %v3388 = vadd.f32 0.0, %v3387
  %v3389 = vpop.f32.mrb[0].mxu0
  %3390 = vmatprep.mubr.f32.mxu0 0.0
  %3391 = vmatmul.mubr.f32.gmra.mrb[0].mxu0 %v951
  %v3392 = vpop.f32.mrb[0].mxu0
  %v3393 = vadd.f32 0.0, %v3392
  %v3394 = vpop.f32.mrb[0].mxu0
  %3395 = vmatprep.mubr.f32.mxu0 0.0
  %3396 = vmatmul.mubr.f32.gmra.mrb[0].mxu0 %v954
  %v3397 = vpop.f32.mrb[0].mxu0
  %v3398 = vadd.f32 0.0, %v3397
  %v3399 = vpop.f32.mrb[0].mxu0
  %3400 = vmatprep.mubr.f32.mxu0 0.0
  %3401 = vmatmul.mubr.f32.gmra.mrb[0].mxu0 %v957
  %v3402 = vpop.f32.mrb[0].mxu0
  %v3403 = vadd.f32 0.0, %v3402
  %v3404 = vpop.f32.mrb[0].mxu0
  %3405 = vmatprep.mubr.f32.mxu0 0.0
  %3406 = vmatmul.mubr.f32.gmra.mrb[0].mxu0 %v960
  %v3407 = vpop.f32.mrb[0].mxu0
  %v3408 = vadd.f32 0.0, %v3407
  %v3409 = vpop.f32.mrb[0].mxu0
  %3410 = vmatprep.mubr.f32.mxu0 0.0
  %3411 = vmatmul.mubr.f32.gmra.mrb[0].mxu0 %v963
  %v3412 = vpop.f32.mrb[0].mxu0
  %v3413 = vadd.f32 0.0, %v3412
  %v3414 = vpop.f32.mrb[0].mxu0
  %3415 = vmatprep.mubr.f32.mxu0 0.0
  %3416 = vmatmul.mubr.f32.gmra.mrb[0].mxu0 %v966
  %v3417 = vpop.f32.mrb[0].mxu0
  %v3418 = vadd.f32 0.0, %v3417
  %v3419 = vpop.f32.mrb[0].mxu0
  %3420 = vmatprep.mubr.f32.mxu0 0.0
  %3421 = vmatmul.mubr.f32.gmra.mrb[0].mxu0 %v969
  %v3422 = vpop.f32.mrb[0].mxu0
  %v3423 = vadd.f32 0.0, %v3422
  %v3424 = vpop.f32.mrb[0].mxu0
  %3425 = vmatprep.mubr.f32.mxu0 0.0
  %3426 = vmatmul.mubr.f32.gmra.mrb[0].mxu0 %v972
  %v3427 = vpop.f32.mrb[0].mxu0
  %v3428 = vadd.f32 0.0, %v3427
  %v3429 = vpop.f32.mrb[0].mxu0
  %3430 = vmatprep.mubr.f32.mxu0 0.0
  %3431 = vmatmul.mubr.f32.gmra.mrb[0].mxu0 %v975
  %v3432 = vpop.f32.mrb[0].mxu0
  %v3433 = vadd.f32 0.0, %v3432
  %v3434 = vpop.f32.mrb[0].mxu0
  %3435 = vmatprep.mubr.f32.mxu0 0.0
  %3436 = vmatmul.mubr.f32.gmra.mrb[0].mxu0 %v978
  %v3437 = vpop.f32.mrb[0].mxu0
  %v3438 = vadd.f32 0.0, %v3437
  %v3439 = vpop.f32.mrb[0].mxu0
  %3440 = vmatprep.mubr.f32.mxu0 0.0
  %3441 = vmatmul.mubr.f32.gmra.mrb[0].mxu0 %v981
  %v3442 = vpop.f32.mrb[0].mxu0
  %v3443 = vadd.f32 0.0, %v3442
  %v3444 = vpop.f32.mrb[0].mxu0
  %3445 = vmatprep.mubr.f32.mxu0 0.0
  %3446 = vmatmul.mubr.f32.gmra.mrb[0].mxu0 %v984
  %v3447 = vpop.f32.mrb[0].mxu0
  %v3448 = vadd.f32 0.0, %v3447
  %v3449 = vpop.f32.mrb[0].mxu0
  %3450 = vmatprep.mubr.f32.mxu0 0.0
  %3451 = vmatmul.mubr.f32.gmra.mrb[0].mxu0 %v987
  %v3452 = vpop.f32.mrb[0].mxu0
  %v3453 = vadd.f32 0.0, %v3452
  %v3454 = vpop.f32.mrb[0].mxu0
  %3455 = vmatprep.mubr.f32.mxu0 0.0
  %3456 = vmatmul.mubr.f32.gmra.mrb[0].mxu0 %v990
  %v3457 = vpop.f32.mrb[0].mxu0
  %v3458 = vadd.f32 0.0, %v3457
  %v3459 = vpop.f32.mrb[0].mxu0
  %3460 = vmatprep.mubr.f32.mxu0 0.0
  %3461 = vmatmul.mubr.f32.gmra.mrb[0].mxu0 %v993
  %v3462 = vpop.f32.mrb[0].mxu0
  %v3463 = vadd.f32 0.0, %v3462
  %v3464 = vpop.f32.mrb[0].mxu0
  %3465 = vdwg.mxu0
  %3466 = vmatprep.subr.mxu0 0.0
  %3467 = vmatpush1.msra.mxu0 %v3348
  %3468 = vmatprep.subr.mxu0 0.0
  %3469 = vmatpush1.msra.mxu0 %v3353
  %3470 = vmatprep.subr.mxu0 0.0
  %3471 = vmatpush1.msra.mxu0 %v3358
  %3472 = vmatprep.subr.mxu0 0.0
  %3473 = vmatpush1.msra.mxu0 %v3363
  %3474 = vmatprep.subr.mxu0 0.0
  %3475 = vmatpush1.msra.mxu0 %v3368
  %3476 = vmatprep.subr.mxu0 0.0
  %3477 = vmatpush1.msra.mxu0 %v3373
  %3478 = vmatprep.subr.mxu0 0.0
  %3479 = vmatpush1.msra.mxu0 %v3378
  %3480 = vmatprep.subr.mxu0 0.0
  %3481 = vmatpush1.msra.mxu0 %v3383
  %3482 = vmatprep.subr.mxu0 0.0
  %3483 = vmatpush1.msra.mxu0 %v3388
  %3484 = vmatprep.subr.mxu0 0.0
  %3485 = vmatpush1.msra.mxu0 %v3393
  %3486 = vmatprep.subr.mxu0 0.0
  %3487 = vmatpush1.msra.mxu0 %v3398
  %3488 = vmatprep.subr.mxu0 0.0
  %3489 = vmatpush1.msra.mxu0 %v3403
  %3490 = vmatprep.subr.mxu0 0.0
  %3491 = vmatpush1.msra.mxu0 %v3408
  %3492 = vmatprep.subr.mxu0 0.0
  %3493 = vmatpush1.msra.mxu0 %v3413
  %3494 = vmatprep.subr.mxu0 0.0
  %3495 = vmatpush1.msra.mxu0 %v3418
  %3496 = vmatprep.subr.mxu0 0.0
  %3497 = vmatpush1.msra.mxu0 %v3423
  %3498 = vmatprep.subr.mxu0 0.0
  %3499 = vmatpush1.msra.mxu0 %v3428
  %3500 = vmatprep.subr.mxu0 0.0
  %3501 = vmatpush1.msra.mxu0 %v3433
  %3502 = vmatprep.subr.mxu0 0.0
  %3503 = vmatpush1.msra.mxu0 %v3438
  %3504 = vmatprep.subr.mxu0 0.0
  %3505 = vmatpush1.msra.mxu0 %v3443
  %3506 = vmatprep.subr.mxu0 0.0
  %3507 = vmatpush1.msra.mxu0 %v3448
  %3508 = vmatprep.subr.mxu0 0.0
  %3509 = vmatpush1.msra.mxu0 %v3453
  %3510 = vmatprep.subr.mxu0 0.0
  %3511 = vmatpush1.msra.mxu0 %v3458
  %3512 = vmatprep.subr.mxu0 0.0
  %3513 = vmatpush1.msra.mxu0 %v3463
  %3514 = vmatprep.subr.mxu0 0.0
  %3515 = vmatpush1.msra.mxu0 0.0
  %3516 = vmatprep.subr.mxu0 0.0
  %3517 = vmatpush1.msra.mxu0 0.0
  %3518 = vmatprep.subr.mxu0 0.0
  %3519 = vmatpush1.msra.mxu0 0.0
  %3520 = vmatprep.subr.mxu0 0.0
  %3521 = vmatpush1.msra.mxu0 0.0
  %3522 = vmatprep.subr.mxu0 0.0
  %3523 = vmatpush1.msra.mxu0 0.0
  %3524 = vmatprep.subr.mxu0 0.0
  %3525 = vmatpush1.msra.mxu0 0.0
  %3526 = vmatprep.subr.mxu0 0.0
  %3527 = vmatpush1.msra.mxu0 0.0
  %3528 = vmatprep.subr.mxu0 0.0
  %3529 = vmatpush1.msra.mxu0 0.0
  %3530 = vmatprep.mubr.f32.mxu0 %v2403
  %3531 = vmatmul.mubr.f32.gmra.mrb[0].mxu0 %v898
  %v3532 = vpop.f32.mrb[0].mxu0
  %v3533 = vadd.f32 0.0, %v3532
  %v3534 = vpop.f32.mrb[0].mxu0
  %3535 = vmatprep.mubr.f32.mxu0 %v2406
  %3536 = vmatmul.mubr.f32.gmra.mrb[0].mxu0 %v900
  %v3537 = vpop.f32.mrb[0].mxu0
  %v3538 = vadd.f32 0.0, %v3537
  %v3539 = vpop.f32.mrb[0].mxu0
  %3540 = vmatprep.mubr.f32.mxu0 %v2409
  %3541 = vmatmul.mubr.f32.gmra.mrb[0].mxu0 %v902
  %v3542 = vpop.f32.mrb[0].mxu0
  %v3543 = vadd.f32 0.0, %v3542
  %v3544 = vpop.f32.mrb[0].mxu0
  %3545 = vmatprep.mubr.f32.mxu0 %v2412
  %3546 = vmatmul.mubr.f32.gmra.mrb[0].mxu0 %v904
  %v3547 = vpop.f32.mrb[0].mxu0
  %v3548 = vadd.f32 0.0, %v3547
  %v3549 = vpop.f32.mrb[0].mxu0
  %3550 = vmatprep.mubr.f32.mxu0 %v2415
  %3551 = vmatmul.mubr.f32.gmra.mrb[0].mxu0 %v906
  %v3552 = vpop.f32.mrb[0].mxu0
  %v3553 = vadd.f32 0.0, %v3552
  %v3554 = vpop.f32.mrb[0].mxu0
  %3555 = vmatprep.mubr.f32.mxu0 %v2418
  %3556 = vmatmul.mubr.f32.gmra.mrb[0].mxu0 %v908
  %v3557 = vpop.f32.mrb[0].mxu0
  %v3558 = vadd.f32 0.0, %v3557
  %v3559 = vpop.f32.mrb[0].mxu0
  %3560 = vmatprep.mubr.f32.mxu0 %v2421
  %3561 = vmatmul.mubr.f32.gmra.mrb[0].mxu0 %v910
  %v3562 = vpop.f32.mrb[0].mxu0
  %v3563 = vadd.f32 0.0, %v3562
  %v3564 = vpop.f32.mrb[0].mxu0
  %3565 = vmatprep.mubr.f32.mxu0 %v2424
  %3566 = vmatmul.mubr.f32.gmra.mrb[0].mxu0 %v912
  %v3567 = vpop.f32.mrb[0].mxu0
  %v3568 = vadd.f32 0.0, %v3567
  %v3569 = vpop.f32.mrb[0].mxu0
  %3570 = vmatprep.mubr.f32.mxu0 %v2427
  %3571 = vmatmul.mubr.f32.gmra.mrb[0].mxu0 %v914
  %v3572 = vpop.f32.mrb[0].mxu0
  %v3573 = vadd.f32 0.0, %v3572
  %v3574 = vpop.f32.mrb[0].mxu0
  %3575 = vmatprep.mubr.f32.mxu0 %v2430
  %3576 = vmatmul.mubr.f32.gmra.mrb[0].mxu0 %v916
  %v3577 = vpop.f32.mrb[0].mxu0
  %v3578 = vadd.f32 0.0, %v3577
  %v3579 = vpop.f32.mrb[0].mxu0
  %3580 = vmatprep.mubr.f32.mxu0 %v2433
  %3581 = vmatmul.mubr.f32.gmra.mrb[0].mxu0 %v918
  %v3582 = vpop.f32.mrb[0].mxu0
  %v3583 = vadd.f32 0.0, %v3582
  %v3584 = vpop.f32.mrb[0].mxu0
  %3585 = vmatprep.mubr.f32.mxu0 %v2436
  %3586 = vmatmul.mubr.f32.gmra.mrb[0].mxu0 %v920
  %v3587 = vpop.f32.mrb[0].mxu0
  %v3588 = vadd.f32 0.0, %v3587
  %v3589 = vpop.f32.mrb[0].mxu0
  %3590 = vdwg.mxu0
  %v3591 = vsub.f32 %v3533, 1.0
  %v3592 = vsub.f32 %v3538, 1.0
  %v3593 = vsub.f32 %v3543, 1.0
  %v3594 = vsub.f32 %v3548, 1.0
  %v3595 = vsub.f32 %v3553, 1.0
  %v3596 = vsub.f32 %v3558, 1.0
  %v3597 = vsub.f32 %v3563, 1.0
  %v3598 = vsub.f32 %v3568, 1.0
  %v3599 = vsub.f32 %v3573, 1.0
  %v3600 = vsub.f32 %v3578, 1.0
  %v3601 = vsub.f32 %v3583, 1.0
  %v3602 = vsub.f32 %v3588, 1.0
  %v3603 = vmul.f32 %v3591, %v3591
  %v3604 = vmul.f32 %v3592, %v3592
  %v3605 = vmul.f32 %v3593, %v3593
  %v3606 = vmul.f32 %v3594, %v3594
  %v3607 = vmul.f32 %v3595, %v3595
  %v3608 = vmul.f32 %v3596, %v3596
  %v3609 = vmul.f32 %v3597, %v3597
  %v3610 = vmul.f32 %v3598, %v3598
  %v3611 = vmul.f32 %v3599, %v3599
  %v3612 = vmul.f32 %v3600, %v3600
  %v3613 = vmul.f32 %v3601, %v3601
  %v3614 = vmul.f32 %v3602, %v3602
  %v3615 = vld [vmem:[%s6] sm:$0xff]
  %v3616 = vld [vmem:[%s6 + $0x8] sm:$0xff]
  %v3617 = vld [vmem:[%s6 + $0x10] sm:$0xff]
  %v3618 = vld [vmem:[%s6 + $0x18] sm:$0xff]
  %v3619 = vld [vmem:[%s6 + $0x20] sm:$0xff]
  %v3620 = vld [vmem:[%s6 + $0x28] sm:$0xff]
  %v3621 = vld [vmem:[%s6 + $0x30] sm:$0xff]
  %v3622 = vld [vmem:[%s6 + $0x38] sm:$0xff]
  %v3623 = vld [vmem:[%s6 + $0x40] sm:$0xff]
  %v3624 = vld [vmem:[%s6 + $0x48] sm:$0xff]
  %v3625 = vld [vmem:[%s6 + $0x50] sm:$0xff]
  %v3626 = vld [vmem:[%s6 + $0x58] sm:$0xff]
  %v3627 = vmul.f32 %v3603, %v3615
  %v3628 = vmul.f32 %v3604, %v3616
  %v3629 = vmul.f32 %v3605, %v3617
  %v3630 = vmul.f32 %v3606, %v3618
  %v3631 = vmul.f32 %v3607, %v3619
  %v3632 = vmul.f32 %v3608, %v3620
  %v3633 = vmul.f32 %v3609, %v3621
  %v3634 = vmul.f32 %v3610, %v3622
  %v3635 = vmul.f32 %v3611, %v3623
  %v3636 = vmul.f32 %v3612, %v3624
  %v3637 = vmul.f32 %v3613, %v3625
  %v3638 = vmul.f32 %v3614, %v3626
  %3639 = vst.msk [vmem:[%s18] sm:$0xff] %vm2891, %v3627
  %3640 = vst.msk [vmem:[%s18 + $0x8] sm:$0xff] %vm2891, %v3628
  %3641 = vst.msk [vmem:[%s18 + $0x10] sm:$0xff] %vm2891, %v3629
  %3642 = vst.msk [vmem:[%s18 + $0x18] sm:$0xff] %vm2891, %v3630
  %3643 = vst.msk [vmem:[%s18 + $0x20] sm:$0xff] %vm2891, %v3631
  %3644 = vst.msk [vmem:[%s18 + $0x28] sm:$0xff] %vm2891, %v3632
  %3645 = vst.msk [vmem:[%s18 + $0x30] sm:$0xff] %vm2891, %v3633
  %3646 = vst.msk [vmem:[%s18 + $0x38] sm:$0xff] %vm2891, %v3634
  %3647 = vst.msk [vmem:[%s18 + $0x40] sm:$0xff] %vm2891, %v3635
  %3648 = vst.msk [vmem:[%s18 + $0x48] sm:$0xff] %vm2891, %v3636
  %3649 = vst.msk [vmem:[%s18 + $0x50] sm:$0xff] %vm2891, %v3637
  %3650 = vst.msk [vmem:[%s18 + $0x58] sm:$0xff] %vm2891, %v3638
  %vm3651 = vcmp.eq.s32.totalorder %v683, 0
  %v3652 = vsel %vm3651, 1, 0
  %v3653 = vcvt.s32.f32 %v3652
  %v3654 = vmul.f32 %v2925, %v3653
  %vm3655 = vcmp.eq.s32.totalorder %v683, 1
  %v3656 = vsel %vm3655, 1, 0
  %v3657 = vcvt.s32.f32 %v3656
  %v3658 = vmul.f32 %v3220, %v3657
  %v3659 = vadd.f32 %v3654, %v3658
  %vm3660 = vcmp.eq.s32.totalorder %v683, 2
  %v3661 = vsel %vm3660, 1, 0
  %v3662 = vcvt.s32.f32 %v3661
  %v3663 = vmul.f32 %v3280, %v3662
  %v3664 = vadd.f32 %v3659, %v3663
  %vm3665 = vcmp.eq.s32.totalorder %v683, 3
  %v3666 = vsel %vm3665, 1, 0
  %v3667 = vcvt.s32.f32 %v3666
  %v3668 = vmul.f32 %v3045, %v3667
  %v3669 = vadd.f32 %v3664, %v3668
  %vm3670 = vcmask 24576
  %3671 = vst.msk [vmem:[%s16] sm:$0x1] %vm3670, %v3669
  // Predicated region
  $region66: #{model_forward.1} parent=0 // pred_check
    _
  $region67: #{model_forward.1} parent=0 // pred_check_branch
    %3673 = sbr.rel (0) target = $region69
  $region68: #{model_forward.1} parent=0 // pred_region
    _
  $region69: #{model_forward.1} parent=0 // pred_fallthru
    _
  // Predicated region
  $region70: #{model_forward.1} parent=0 // pred_check
    _
  $region71: #{model_forward.1} parent=0 // pred_check_branch
    %3675 = sbr.rel (0) target = $region73
  $region72: #{model_forward.1} parent=0 // pred_region
    _
  $region73: #{model_forward.1} parent=0 // pred_fallthru
    _
  // Predicated region
  $region74: #{model_forward.1} parent=0 // pred_check
    _
  $region75: #{model_forward.1} parent=0 // pred_check_branch
    %3677 = sbr.rel (0) target = $region77
  $region76: #{model_forward.1} parent=0 // pred_region
    _
  $region77: #{model_forward.1} parent=0 // pred_fallthru
    _
  // Predicated region
  $region78: #{model_forward.1} parent=0 // pred_check
    _
  $region79: #{model_forward.1} parent=0 // pred_check_branch
    %3679 = sbr.rel (0) target = $region81
  $region80: #{model_forward.1} parent=0 // pred_region
    _
  $region81: #{model_forward.1} parent=0 // pred_fallthru
    _
  // Predicated region
  $region82: #{model_forward.1} parent=0 // pred_check
    _
  $region83: #{model_forward.1} parent=0 // pred_check_branch
    %3681 = sbr.rel (0) target = $region85
  $region84: #{model_forward.1} parent=0 // pred_region
    _
  $region85: #{model_forward.1} parent=0 // pred_fallthru
    _
  // Predicated region
  $region86: #{model_forward.1} parent=0 // pred_check
    _
  $region87: #{model_forward.1} parent=0 // pred_check_branch
    %3683 = sbr.rel (0) target = $region89
  $region88: #{model_forward.1} parent=0 // pred_region
    _
  $region89: #{model_forward.1} parent=0 // pred_fallthru
    _

</llo_original>
